<compile_context>
chip_gen: v5e
topology: v5e:2x2
jax: 0.10.0
libtpu: 0.0.40
codegen_flags: <defaults>
</compile_context>

<pallas_src>
import functools
import math

import jax
import jax.numpy as jnp
from jax import lax
from jax.experimental import pallas as pl
from jax.experimental.pallas import tpu as pltpu

# dot_general dimension numbers: contract over the leading (row) axis of both
# operands, i.e. lhs^T @ rhs without materializing the transpose.
_TN_DIMS = (((0,), (0,)), ((), ()))


# --------------------------------------------------------------------------- #
# Kernel: block-diagonal path (small N — fills the MXU with one matmul/stage). #
# --------------------------------------------------------------------------- #
def _gcn_pool_kernel_blockdiag(x_ref, adj_ref, w1_ref, b1_ref, w2_ref, b2_ref,
                               out_ref, adj_bd_ref, s_bd_ref, a_bd_ref,
                               *, matmul_dtype):
    BB, N, nfeat = x_ref.shape
    nhid = w1_ref.shape[1]
    ncls_pad = w2_ref.shape[1]
    md = matmul_dtype
    f32 = jnp.float32

    w1 = w1_ref[...]                       # (nfeat, nhid)   md
    b1 = b1_ref[...]                       # (1, nhid)       f32
    w2 = w2_ref[...]                       # (nhid, ncls_pad) md
    b2 = b2_ref[...]                       # (1, ncls_pad)   f32

    # ---- layer 1: support = x @ W1, folded over graphs (M = BB*N rows) ----
    x_flat = x_ref[...].reshape(BB * N, nfeat)                         # md
    support1 = jnp.dot(x_flat, w1, preferred_element_type=f32)         # (BB*N, nhid) f32

    # ---- block-diagonal adjacency: one (BB*N, BB*N) MXU operand ----
    adj_bd_ref[...] = jnp.zeros_like(adj_bd_ref)
    for g in range(BB):
        adj_bd_ref[pl.ds(g * N, N), pl.ds(g * N, N)] = adj_ref[g].astype(f32)
    adj_bd = adj_bd_ref[...].astype(md)

    # ---- h1 = adj @ support + b1 ; z = relu (f32 elementwise) ----
    h1 = jnp.dot(adj_bd, support1.astype(md), preferred_element_type=f32) + b1
    z = jnp.maximum(h1, 0.0)                                           # (BB*N, nhid) f32

    # ---- s = log_softmax(z, axis=-1), all f32 ----
    z_max = jnp.max(z, axis=-1, keepdims=True)
    z_shift = z - z_max
    lse = jnp.log(jnp.sum(jnp.exp(z_shift), axis=-1, keepdims=True))
    s = z_shift - lse                                                  # (BB*N, nhid) f32

    # ---- t = adj @ s (reuse the block-diagonal adjacency) ----
    t = jnp.dot(adj_bd, s.astype(md), preferred_element_type=f32)      # (BB*N, nhid) f32

    # ---- fused X / A contraction: blockdiag(S)^T @ [z | t] ----
    # S block-diagonal (BB*N, BB*nhid) with per-graph s blocks on the diagonal:
    # row-block g of the result is [ s_g^T z_g | s_g^T t_g ] = [ X_g | A_g ].
    s_bd_ref[...] = jnp.zeros_like(s_bd_ref)
    for g in range(BB):
        s_bd_ref[pl.ds(g * N, N), pl.ds(g * nhid, nhid)] = s[g * N:(g + 1) * N, :]
    zt = jnp.concatenate([z, t], axis=-1)                              # (BB*N, 2*nhid) f32
    xa = lax.dot_general(s_bd_ref[...].astype(md), zt.astype(md),
                         _TN_DIMS, preferred_element_type=f32)         # (BB*nhid, 2*nhid)

    x_pool = xa[:, :nhid]                                              # (BB*nhid, nhid) f32

    # ---- layer 2: support2 = X @ W2 (folded), then block-diag A matmul ----
    support2 = jnp.dot(x_pool.astype(md), w2,
                       preferred_element_type=f32)                     # (BB*nhid, ncls_pad)

    a_bd_ref[...] = jnp.zeros_like(a_bd_ref)
    for g in range(BB):
        a_bd_ref[pl.ds(g * nhid, nhid), pl.ds(g * nhid, nhid)] = \
            xa[g * nhid:(g + 1) * nhid, nhid:2 * nhid]
    h2 = jnp.dot(a_bd_ref[...].astype(md), support2.astype(md),
                 preferred_element_type=f32) + b2                      # (BB*nhid, ncls_pad)
    z2 = jnp.maximum(h2, 0.0)

    # Dropout: identity in eval mode.
    # Global max-pool over pooled nodes (torch.max(z, dim=1).values); padded class
    # lanes are exactly zero (W2/b2 zero-padded) so they carry 0s.
    out_ref[...] = jnp.max(z2.reshape(BB, nhid, ncls_pad), axis=1)     # (BB, ncls_pad)


# --------------------------------------------------------------------------- #
# Kernel: fallback batched path (large N where the block-diag scratch would    #
# be too big).  Uses only batched einsums / per-graph TN contractions.         #
# --------------------------------------------------------------------------- #
def _gcn_pool_kernel_batched(x_ref, adj_ref, w1_ref, b1_ref, w2_ref, b2_ref,
                             out_ref, *, matmul_dtype):
    BB, N, nfeat = x_ref.shape
    nhid = w1_ref.shape[1]
    ncls_pad = w2_ref.shape[1]
    md = matmul_dtype
    f32 = jnp.float32

    x = x_ref[...]                     # md
    adj = adj_ref[...]                 # md
    w1 = w1_ref[...]
    b1 = b1_ref[...]
    w2 = w2_ref[...]
    b2 = b2_ref[...]

    support1 = jnp.dot(x.reshape(BB * N, nfeat), w1,
                       preferred_element_type=f32).reshape(BB, N, nhid)
    h1 = jnp.einsum("bnm,bmh->bnh", adj, support1.astype(md),
                    preferred_element_type=f32) + b1
    z = jnp.maximum(h1, 0.0)

    z_max = jnp.max(z, axis=-1, keepdims=True)
    z_shift = z - z_max
    lse = jnp.log(jnp.sum(jnp.exp(z_shift), axis=-1, keepdims=True))
    s = z_shift - lse

    t = jnp.einsum("bnm,bmh->bnh", adj, s.astype(md),
                   preferred_element_type=f32)
    zt = jnp.concatenate([z, t], axis=-1)                              # (BB, N, 2*nhid)
    s_mm = s.astype(md)
    zt_mm = zt.astype(md)

    xa_blocks = [lax.dot_general(s_mm[g], zt_mm[g], _TN_DIMS,
                                 preferred_element_type=f32) for g in range(BB)]
    xa = jnp.concatenate(xa_blocks, axis=0)                            # (BB*nhid, 2*nhid)
    x_pool = xa[:, :nhid]
    a_pool = xa[:, nhid:].reshape(BB, nhid, nhid)

    support2 = jnp.dot(x_pool.astype(md), w2,
                       preferred_element_type=f32).reshape(BB, nhid, ncls_pad)
    h2 = jnp.einsum("bhk,bkc->bhc", a_pool.astype(md), support2.astype(md),
                    preferred_element_type=f32) + b2
    z2 = jnp.maximum(h2, 0.0)
    out_ref[...] = jnp.max(z2, axis=1)


# --------------------------------------------------------------------------- #
# Wrapper                                                                      #
# --------------------------------------------------------------------------- #
def _device_kind():
    try:
        return jax.devices()[0].device_kind.lower()
    except Exception:
        return ""


def gcn_pooling_forward(x, adj, w1, b1, w2, b2, *,
                        graphs_per_step=None, matmul_dtype=jnp.float32):
    B, N, nfeat = x.shape
    nhid = w1.shape[1]
    nclass = w2.shape[1]
    ncls_pad = ((nclass + 127) // 128) * 128
    in_itemsize = jnp.dtype(matmul_dtype).itemsize

    kind = _device_kind()
    multi_tc = ("v7" in kind) or ("7x" in kind) or ("v4" in kind)
    vmem_cap = (32 << 20) if (("v7" in kind) or ("7x" in kind)) else (64 << 20)

    # Graphs per grid step: single-TC chips (v5e/v6e) take the whole batch in one
    # step (no per-step overhead, 256-row M); multi-TC chips keep >=2 steps so both
    # TensorCores get work under dimension_semantics=("parallel",).
    if graphs_per_step is None:
        graphs_per_step = 8 if multi_tc else 16
    if multi_tc and B > 1:
        bb = min(graphs_per_step, max(1, B // 2))
    else:
        bb = min(graphs_per_step, B)
    bb = max(1, int(bb))

    def _use_bd(bb_):
        return (bb_ * N <= 1024) and (bb_ * nhid <= 1024)

    def _est(bb_):
        blocks = 2 * bb_ * (N * nfeat + N * N) * in_itemsize + 2 * bb_ * ncls_pad * 4
        params = 2 * (nfeat * nhid + nhid + nhid * ncls_pad + ncls_pad) * 4
        scratch = 0
        if _use_bd(bb_):
            scratch = 4 * ((bb_ * N) ** 2 + (bb_ * N) * (bb_ * nhid) + (bb_ * nhid) ** 2)
        temps = 4 * bb_ * (5 * N * nhid + 2 * nhid * nhid + 2 * nhid * ncls_pad)
        return blocks + params + scratch + temps

    # Shrink bb until the (generation-aware) VMEM budget fits.
    while bb > 1 and 2 * _est(bb) > vmem_cap:
        bb //= 2
    # Output block (bb, ncls_pad) must have bb a multiple of 8 unless grid == 1.
    if bb < B and bb % 8 != 0:
        bb = min(B, ((bb + 7) // 8) * 8)

    use_bd = _use_bd(bb)
    B_pad = ((B + bb - 1) // bb) * bb

    # Cast operands to the matmul dtype in the wrapper so DMA traffic (adj dominates)
    # is already narrow; biases stay f32 (added in f32 inside the kernel).
    x_in = x.astype(matmul_dtype)
    adj_in = adj.astype(matmul_dtype)
    if B_pad != B:
        pad = B_pad - B
        x_in = jnp.concatenate([x_in, jnp.zeros((pad, N, nfeat), x_in.dtype)], axis=0)
        adj_in = jnp.concatenate([adj_in, jnp.zeros((pad, N, N), adj_in.dtype)], axis=0)

    w1_in = w1.astype(matmul_dtype)
    b1_2d = jnp.asarray(b1, jnp.float32).reshape(1, nhid)
    # Lane-dense output: zero-pad the class dim of W2 / b2 to a multiple of 128 and
    # slice the logits back out after the pallas_call.
    w2p = jnp.zeros((nhid, ncls_pad), jnp.float32).at[:, :nclass].set(
        w2.astype(jnp.float32)).astype(matmul_dtype)
    b2p = jnp.zeros((1, ncls_pad), jnp.float32).at[0, :nclass].set(
        b2.astype(jnp.float32))

    grid = (B_pad // bb,)
    if use_bd:
        kernel = functools.partial(_gcn_pool_kernel_blockdiag, matmul_dtype=matmul_dtype)
        scratch_shapes = [
            pltpu.VMEM((bb * N, bb * N), jnp.float32),       # block-diag adjacency
            pltpu.VMEM((bb * N, bb * nhid), jnp.float32),    # block-diag assignment S
            pltpu.VMEM((bb * nhid, bb * nhid), jnp.float32), # block-diag pooled A
        ]
    else:
        kernel = functools.partial(_gcn_pool_kernel_batched, matmul_dtype=matmul_dtype)
        scratch_shapes = []

    vmem_limit = int(min(max(2 * _est(bb), 16 << 20), vmem_cap))

    out_pad = pl.pallas_call(
        kernel,
        out_shape=jax.ShapeDtypeStruct((B_pad, ncls_pad), jnp.float32),
        grid_spec=pltpu.PrefetchScalarGridSpec(
            num_scalar_prefetch=0,
            grid=grid,
            in_specs=[
                pl.BlockSpec((bb, N, nfeat), lambda b: (b, 0, 0)),
                pl.BlockSpec((bb, N, N), lambda b: (b, 0, 0)),
                pl.BlockSpec((nfeat, nhid), lambda b: (0, 0)),
                pl.BlockSpec((1, nhid), lambda b: (0, 0)),
                pl.BlockSpec((nhid, ncls_pad), lambda b: (0, 0)),
                pl.BlockSpec((1, ncls_pad), lambda b: (0, 0)),
            ],
            out_specs=pl.BlockSpec((bb, ncls_pad), lambda b: (b, 0)),
            scratch_shapes=scratch_shapes,
        ),
        compiler_params=pltpu.CompilerParams(
            dimension_semantics=("parallel",),
            vmem_limit_bytes=vmem_limit,
        ),
    )(x_in, adj_in, w1_in, b1_2d, w2p, b2p)

    return out_pad[:B, :nclass]


# --------------------------------------------------------------------------- #
# Pure-JAX reference mirroring the kernel's cast points / associativity.       #
# --------------------------------------------------------------------------- #
def ref_forward(x, adj, w1, b1, w2, b2, matmul_dtype=jnp.float32):
    c = lambda a: a.astype(matmul_dtype)
    support1 = jnp.einsum("bnf,fh->bnh", c(x), c(w1),
                          preferred_element_type=jnp.float32)
    h1 = jnp.einsum("bnm,bmh->bnh", c(adj), c(support1),
                    preferred_element_type=jnp.float32) + b1
    z = jax.nn.relu(h1)
    s = jax.nn.log_softmax(z, axis=-1)
    xp = jnp.einsum("bnh,bnk->bhk", c(s), c(z),
                    preferred_element_type=jnp.float32)
    t = jnp.einsum("bnm,bmh->bnh", c(adj), c(s),
                   preferred_element_type=jnp.float32)
    ap = jnp.einsum("bnh,bnk->bhk", c(s), c(t),
                    preferred_element_type=jnp.float32)
    support2 = jnp.einsum("bhk,kc->bhc", c(xp), c(w2),
                          preferred_element_type=jnp.float32)
    h2 = jnp.einsum("bhk,bkc->bhc", c(ap), c(support2),
                    preferred_element_type=jnp.float32) + b2
    z2 = jax.nn.relu(h2)
    return jnp.max(z2, axis=1)


if __name__ == "__main__":
    # Small shapes consistent with the module: a batch of graphs with N nodes.
    B, N = 16, 16
    nfeat, nhid, nclass = 16, 32, 8

    key = jax.random.PRNGKey(0)
    kx, ka, kw1, kb1, kw2, kb2 = jax.random.split(key, 6)

    x = jax.random.normal(kx, (B, N, nfeat), dtype=jnp.float32)
    adj_raw = jax.random.uniform(ka, (B, N, N), dtype=jnp.float32)
    adj = 0.5 * (adj_raw + jnp.transpose(adj_raw, (0, 2, 1)))  # symmetric dense adjacency

    # Parameters: uniform(-stdv, stdv), matching GraphConvolution.reset_parameters
    stdv1 = 1.0 / math.sqrt(nhid)
    w1 = jax.random.uniform(kw1, (nfeat, nhid), minval=-stdv1, maxval=stdv1, dtype=jnp.float32)
    b1 = jax.random.uniform(kb1, (nhid,), minval=-stdv1, maxval=stdv1, dtype=jnp.float32)
    stdv2 = 1.0 / math.sqrt(nclass)
    w2 = jax.random.uniform(kw2, (nhid, nclass), minval=-stdv2, maxval=stdv2, dtype=jnp.float32)
    b2 = jax.random.uniform(kb2, (nclass,), minval=-stdv2, maxval=stdv2, dtype=jnp.float32)

    # --- f32 matmul path (exact eval-mode semantics) ---
    out_f32 = jax.block_until_ready(gcn_pooling_forward(x, adj, w1, b1, w2, b2))
    ref_f32 = jax.block_until_ready(ref_forward(x, adj, w1, b1, w2, b2))
    assert out_f32.shape == (B, nclass)
    assert bool(jnp.all(jnp.isfinite(out_f32)))
    assert jnp.allclose(out_f32, ref_f32, rtol=1e-3, atol=1e-2), (out_f32, ref_f32)

    # --- bf16 matmul-operand path (bf16 DMA + bf16 MXU operands, f32 accumulate) ---
    out_bf16 = jax.block_until_ready(
        gcn_pooling_forward(x, adj, w1, b1, w2, b2, matmul_dtype=jnp.bfloat16))
    ref_bf16 = jax.block_until_ready(
        ref_forward(x, adj, w1, b1, w2, b2, matmul_dtype=jnp.bfloat16))
    scale = float(jnp.max(jnp.abs(ref_bf16))) + 1e-6
    rel_err = float(jnp.max(jnp.abs(out_bf16 - ref_bf16))) / scale
    assert rel_err < 2e-2, rel_err

    print("KERNEL_OK")
</pallas_src>

<mosaic_0001>
module attributes {stable_mosaic.version = 11 : i64} {
  func.func @_gcn_pool_kernel_blockdiag(%arg0: i32, %arg1: memref<16x16x16xf32, #tpu.memory_space<vmem>>, %arg2: memref<16x16x16xf32, #tpu.memory_space<vmem>>, %arg3: memref<16x32xf32, #tpu.memory_space<vmem>>, %arg4: memref<1x32xf32, #tpu.memory_space<vmem>>, %arg5: memref<32x128xf32, #tpu.memory_space<vmem>>, %arg6: memref<1x128xf32, #tpu.memory_space<vmem>>, %arg7: memref<16x128xf32, #tpu.memory_space<vmem>>, %arg8: memref<256x256xf32, #tpu.memory_space<vmem>>, %arg9: memref<256x512xf32, #tpu.memory_space<vmem>>, %arg10: memref<512x512xf32, #tpu.memory_space<vmem>>) attributes {dimension_semantics = [#tpu.dimension_semantics<parallel>], iteration_bounds = array<i64: 1>, scalar_prefetch = 0 : i64, scratch_operands = 3 : i64, tpu.core_type = #tpu.core_type<tc>, window_params = [{transform_indices = @transform_0, window_bounds = array<i64: 16, 16, 16>}, {transform_indices = @transform_1, window_bounds = array<i64: 16, 16, 16>}, {pipeline_mode = #tpu.pipeline_mode<synchronous>, transform_indices = @transform_2, window_bounds = array<i64: 16, 32>}, {pipeline_mode = #tpu.pipeline_mode<synchronous>, transform_indices = @transform_3, window_bounds = array<i64: 1, 32>}, {pipeline_mode = #tpu.pipeline_mode<synchronous>, transform_indices = @transform_4, window_bounds = array<i64: 32, 128>}, {pipeline_mode = #tpu.pipeline_mode<synchronous>, transform_indices = @transform_5, window_bounds = array<i64: 1, 128>}, {transform_indices = @transform_6, window_bounds = array<i64: 16, 128>}]} {
    %c0 = arith.constant 0 : index
    %c0_0 = arith.constant 0 : index
    %0 = vector.load %arg3[%c0, %c0_0] : memref<16x32xf32, #tpu.memory_space<vmem>>, vector<16x32xf32>
    %c0_1 = arith.constant 0 : index
    %c0_2 = arith.constant 0 : index
    %1 = vector.load %arg4[%c0_1, %c0_2] : memref<1x32xf32, #tpu.memory_space<vmem>>, vector<1x32xf32>
    %c0_3 = arith.constant 0 : index
    %c0_4 = arith.constant 0 : index
    %2 = vector.load %arg5[%c0_3, %c0_4] : memref<32x128xf32, #tpu.memory_space<vmem>>, vector<32x128xf32>
    %c0_5 = arith.constant 0 : index
    %c0_6 = arith.constant 0 : index
    %3 = vector.load %arg6[%c0_5, %c0_6] : memref<1x128xf32, #tpu.memory_space<vmem>>, vector<1x128xf32>
    %c0_7 = arith.constant 0 : index
    %c0_8 = arith.constant 0 : index
    %c0_9 = arith.constant 0 : index
    %4 = vector.load %arg1[%c0_7, %c0_8, %c0_9] : memref<16x16x16xf32, #tpu.memory_space<vmem>>, vector<16x16x16xf32>
    %5 = vector.shape_cast %4 : vector<16x16x16xf32> to vector<256x16xf32>
    %cst = arith.constant dense<0.000000e+00> : vector<256x32xf32>
    %6 = tpu.matmul %5, %0, %cst {dimension_numbers = #tpu.dot_dimension_numbers<[1], [0], [0], [1], [0, 0, 1, 1], [], []>} : vector<256x16xf32>, vector<16x32xf32>, vector<256x32xf32> -> vector<256x32xf32>
    %cst_10 = arith.constant 0.000000e+00 : f32
    %7 = vector.broadcast %cst_10 : f32 to vector<256x256xf32>
    %c0_11 = arith.constant 0 : index
    %c0_12 = arith.constant 0 : index
    %8 = vector.load %arg8[%c0_11, %c0_12] : memref<256x256xf32, #tpu.memory_space<vmem>>, vector<256x256xf32>
    tpu.vector_store %arg8[%c0_11, %c0_12], %7 {strides = array<i32>} : memref<256x256xf32, #tpu.memory_space<vmem>>, vector<256x256xf32>,
    %c0_13 = arith.constant 0 : index
    %c0_14 = arith.constant 0 : index
    %c0_15 = arith.constant 0 : index
    %9 = vector.load %arg2[%c0_13, %c0_14, %c0_15] : memref<16x16x16xf32, #tpu.memory_space<vmem>>, vector<1x16x16xf32>
    %10 = vector.shape_cast %9 : vector<1x16x16xf32> to vector<16x16xf32>
    %c0_16 = arith.constant 0 : index
    %c0_17 = arith.constant 0 : index
    %11 = vector.load %arg8[%c0_16, %c0_17] : memref<256x256xf32, #tpu.memory_space<vmem>>, vector<16x16xf32>
    tpu.vector_store %arg8[%c0_16, %c0_17], %10 {strides = array<i32>} : memref<256x256xf32, #tpu.memory_space<vmem>>, vector<16x16xf32>,
    %c1 = arith.constant 1 : index
    %c0_18 = arith.constant 0 : index
    %c0_19 = arith.constant 0 : index
    %12 = vector.load %arg2[%c1, %c0_18, %c0_19] : memref<16x16x16xf32, #tpu.memory_space<vmem>>, vector<1x16x16xf32>
    %13 = vector.shape_cast %12 : vector<1x16x16xf32> to vector<16x16xf32>
    %c16 = arith.constant 16 : index
    %c16_20 = arith.constant 16 : index
    %14 = vector.load %arg8[%c16, %c16_20] : memref<256x256xf32, #tpu.memory_space<vmem>>, vector<16x16xf32>
    tpu.vector_store %arg8[%c16, %c16_20], %13 {strides = array<i32>} : memref<256x256xf32, #tpu.memory_space<vmem>>, vector<16x16xf32>,
    %c2 = arith.constant 2 : index
    %c0_21 = arith.constant 0 : index
    %c0_22 = arith.constant 0 : index
    %15 = vector.load %arg2[%c2, %c0_21, %c0_22] : memref<16x16x16xf32, #tpu.memory_space<vmem>>, vector<1x16x16xf32>
    %16 = vector.shape_cast %15 : vector<1x16x16xf32> to vector<16x16xf32>
    %c32 = arith.constant 32 : index
    %c32_23 = arith.constant 32 : index
    %17 = vector.load %arg8[%c32, %c32_23] : memref<256x256xf32, #tpu.memory_space<vmem>>, vector<16x16xf32>
    tpu.vector_store %arg8[%c32, %c32_23], %16 {strides = array<i32>} : memref<256x256xf32, #tpu.memory_space<vmem>>, vector<16x16xf32>,
    %c3 = arith.constant 3 : index
    %c0_24 = arith.constant 0 : index
    %c0_25 = arith.constant 0 : index
    %18 = vector.load %arg2[%c3, %c0_24, %c0_25] : memref<16x16x16xf32, #tpu.memory_space<vmem>>, vector<1x16x16xf32>
    %19 = vector.shape_cast %18 : vector<1x16x16xf32> to vector<16x16xf32>
    %c48 = arith.constant 48 : index
    %c48_26 = arith.constant 48 : index
    %20 = vector.load %arg8[%c48, %c48_26] : memref<256x256xf32, #tpu.memory_space<vmem>>, vector<16x16xf32>
    tpu.vector_store %arg8[%c48, %c48_26], %19 {strides = array<i32>} : memref<256x256xf32, #tpu.memory_space<vmem>>, vector<16x16xf32>,
    %c4 = arith.constant 4 : index
    %c0_27 = arith.constant 0 : index
    %c0_28 = arith.constant 0 : index
    %21 = vector.load %arg2[%c4, %c0_27, %c0_28] : memref<16x16x16xf32, #tpu.memory_space<vmem>>, vector<1x16x16xf32>
    %22 = vector.shape_cast %21 : vector<1x16x16xf32> to vector<16x16xf32>
    %c64 = arith.constant 64 : index
    %c64_29 = arith.constant 64 : index
    %23 = vector.load %arg8[%c64, %c64_29] : memref<256x256xf32, #tpu.memory_space<vmem>>, vector<16x16xf32>
    tpu.vector_store %arg8[%c64, %c64_29], %22 {strides = array<i32>} : memref<256x256xf32, #tpu.memory_space<vmem>>, vector<16x16xf32>,
    %c5 = arith.constant 5 : index
    %c0_30 = arith.constant 0 : index
    %c0_31 = arith.constant 0 : index
    %24 = vector.load %arg2[%c5, %c0_30, %c0_31] : memref<16x16x16xf32, #tpu.memory_space<vmem>>, vector<1x16x16xf32>
    %25 = vector.shape_cast %24 : vector<1x16x16xf32> to vector<16x16xf32>
    %c80 = arith.constant 80 : index
    %c80_32 = arith.constant 80 : index
    %26 = vector.load %arg8[%c80, %c80_32] : memref<256x256xf32, #tpu.memory_space<vmem>>, vector<16x16xf32>
    tpu.vector_store %arg8[%c80, %c80_32], %25 {strides = array<i32>} : memref<256x256xf32, #tpu.memory_space<vmem>>, vector<16x16xf32>,
    %c6 = arith.constant 6 : index
    %c0_33 = arith.constant 0 : index
    %c0_34 = arith.constant 0 : index
    %27 = vector.load %arg2[%c6, %c0_33, %c0_34] : memref<16x16x16xf32, #tpu.memory_space<vmem>>, vector<1x16x16xf32>
    %28 = vector.shape_cast %27 : vector<1x16x16xf32> to vector<16x16xf32>
    %c96 = arith.constant 96 : index
    %c96_35 = arith.constant 96 : index
    %29 = vector.load %arg8[%c96, %c96_35] : memref<256x256xf32, #tpu.memory_space<vmem>>, vector<16x16xf32>
    tpu.vector_store %arg8[%c96, %c96_35], %28 {strides = array<i32>} : memref<256x256xf32, #tpu.memory_space<vmem>>, vector<16x16xf32>,
    %c7 = arith.constant 7 : index
    %c0_36 = arith.constant 0 : index
    %c0_37 = arith.constant 0 : index
    %30 = vector.load %arg2[%c7, %c0_36, %c0_37] : memref<16x16x16xf32, #tpu.memory_space<vmem>>, vector<1x16x16xf32>
    %31 = vector.shape_cast %30 : vector<1x16x16xf32> to vector<16x16xf32>
    %c112 = arith.constant 112 : index
    %c112_38 = arith.constant 112 : index
    %32 = vector.load %arg8[%c112, %c112_38] : memref<256x256xf32, #tpu.memory_space<vmem>>, vector<16x16xf32>
    tpu.vector_store %arg8[%c112, %c112_38], %31 {strides = array<i32>} : memref<256x256xf32, #tpu.memory_space<vmem>>, vector<16x16xf32>,
    %c8 = arith.constant 8 : index
    %c0_39 = arith.constant 0 : index
    %c0_40 = arith.constant 0 : index
    %33 = vector.load %arg2[%c8, %c0_39, %c0_40] : memref<16x16x16xf32, #tpu.memory_space<vmem>>, vector<1x16x16xf32>
    %34 = vector.shape_cast %33 : vector<1x16x16xf32> to vector<16x16xf32>
    %c128 = arith.constant 128 : index
    %c128_41 = arith.constant 128 : index
    %35 = vector.load %arg8[%c128, %c128_41] : memref<256x256xf32, #tpu.memory_space<vmem>>, vector<16x16xf32>
    tpu.vector_store %arg8[%c128, %c128_41], %34 {strides = array<i32>} : memref<256x256xf32, #tpu.memory_space<vmem>>, vector<16x16xf32>,
    %c9 = arith.constant 9 : index
    %c0_42 = arith.constant 0 : index
    %c0_43 = arith.constant 0 : index
    %36 = vector.load %arg2[%c9, %c0_42, %c0_43] : memref<16x16x16xf32, #tpu.memory_space<vmem>>, vector<1x16x16xf32>
    %37 = vector.shape_cast %36 : vector<1x16x16xf32> to vector<16x16xf32>
    %c144 = arith.constant 144 : index
    %c144_44 = arith.constant 144 : index
    %38 = vector.load %arg8[%c144, %c144_44] : memref<256x256xf32, #tpu.memory_space<vmem>>, vector<16x16xf32>
    tpu.vector_store %arg8[%c144, %c144_44], %37 {strides = array<i32>} : memref<256x256xf32, #tpu.memory_space<vmem>>, vector<16x16xf32>,
    %c10 = arith.constant 10 : index
    %c0_45 = arith.constant 0 : index
    %c0_46 = arith.constant 0 : index
    %39 = vector.load %arg2[%c10, %c0_45, %c0_46] : memref<16x16x16xf32, #tpu.memory_space<vmem>>, vector<1x16x16xf32>
    %40 = vector.shape_cast %39 : vector<1x16x16xf32> to vector<16x16xf32>
    %c160 = arith.constant 160 : index
    %c160_47 = arith.constant 160 : index
    %41 = vector.load %arg8[%c160, %c160_47] : memref<256x256xf32, #tpu.memory_space<vmem>>, vector<16x16xf32>
    tpu.vector_store %arg8[%c160, %c160_47], %40 {strides = array<i32>} : memref<256x256xf32, #tpu.memory_space<vmem>>, vector<16x16xf32>,
    %c11 = arith.constant 11 : index
    %c0_48 = arith.constant 0 : index
    %c0_49 = arith.constant 0 : index
    %42 = vector.load %arg2[%c11, %c0_48, %c0_49] : memref<16x16x16xf32, #tpu.memory_space<vmem>>, vector<1x16x16xf32>
    %43 = vector.shape_cast %42 : vector<1x16x16xf32> to vector<16x16xf32>
    %c176 = arith.constant 176 : index
    %c176_50 = arith.constant 176 : index
    %44 = vector.load %arg8[%c176, %c176_50] : memref<256x256xf32, #tpu.memory_space<vmem>>, vector<16x16xf32>
    tpu.vector_store %arg8[%c176, %c176_50], %43 {strides = array<i32>} : memref<256x256xf32, #tpu.memory_space<vmem>>, vector<16x16xf32>,
    %c12 = arith.constant 12 : index
    %c0_51 = arith.constant 0 : index
    %c0_52 = arith.constant 0 : index
    %45 = vector.load %arg2[%c12, %c0_51, %c0_52] : memref<16x16x16xf32, #tpu.memory_space<vmem>>, vector<1x16x16xf32>
    %46 = vector.shape_cast %45 : vector<1x16x16xf32> to vector<16x16xf32>
    %c192 = arith.constant 192 : index
    %c192_53 = arith.constant 192 : index
    %47 = vector.load %arg8[%c192, %c192_53] : memref<256x256xf32, #tpu.memory_space<vmem>>, vector<16x16xf32>
    tpu.vector_store %arg8[%c192, %c192_53], %46 {strides = array<i32>} : memref<256x256xf32, #tpu.memory_space<vmem>>, vector<16x16xf32>,
    %c13 = arith.constant 13 : index
    %c0_54 = arith.constant 0 : index
    %c0_55 = arith.constant 0 : index
    %48 = vector.load %arg2[%c13, %c0_54, %c0_55] : memref<16x16x16xf32, #tpu.memory_space<vmem>>, vector<1x16x16xf32>
    %49 = vector.shape_cast %48 : vector<1x16x16xf32> to vector<16x16xf32>
    %c208 = arith.constant 208 : index
    %c208_56 = arith.constant 208 : index
    %50 = vector.load %arg8[%c208, %c208_56] : memref<256x256xf32, #tpu.memory_space<vmem>>, vector<16x16xf32>
    tpu.vector_store %arg8[%c208, %c208_56], %49 {strides = array<i32>} : memref<256x256xf32, #tpu.memory_space<vmem>>, vector<16x16xf32>,
    %c14 = arith.constant 14 : index
    %c0_57 = arith.constant 0 : index
    %c0_58 = arith.constant 0 : index
    %51 = vector.load %arg2[%c14, %c0_57, %c0_58] : memref<16x16x16xf32, #tpu.memory_space<vmem>>, vector<1x16x16xf32>
    %52 = vector.shape_cast %51 : vector<1x16x16xf32> to vector<16x16xf32>
    %c224 = arith.constant 224 : index
    %c224_59 = arith.constant 224 : index
    %53 = vector.load %arg8[%c224, %c224_59] : memref<256x256xf32, #tpu.memory_space<vmem>>, vector<16x16xf32>
    tpu.vector_store %arg8[%c224, %c224_59], %52 {strides = array<i32>} : memref<256x256xf32, #tpu.memory_space<vmem>>, vector<16x16xf32>,
    %c15 = arith.constant 15 : index
    %c0_60 = arith.constant 0 : index
    %c0_61 = arith.constant 0 : index
    %54 = vector.load %arg2[%c15, %c0_60, %c0_61] : memref<16x16x16xf32, #tpu.memory_space<vmem>>, vector<1x16x16xf32>
    %55 = vector.shape_cast %54 : vector<1x16x16xf32> to vector<16x16xf32>
    %c240 = arith.constant 240 : index
    %c240_62 = arith.constant 240 : index
    %56 = vector.load %arg8[%c240, %c240_62] : memref<256x256xf32, #tpu.memory_space<vmem>>, vector<16x16xf32>
    tpu.vector_store %arg8[%c240, %c240_62], %55 {strides = array<i32>} : memref<256x256xf32, #tpu.memory_space<vmem>>, vector<16x16xf32>,
    %c0_63 = arith.constant 0 : index
    %c0_64 = arith.constant 0 : index
    %57 = vector.load %arg8[%c0_63, %c0_64] : memref<256x256xf32, #tpu.memory_space<vmem>>, vector<256x256xf32>
    %cst_65 = arith.constant dense<0.000000e+00> : vector<256x32xf32>
    %58 = tpu.matmul %57, %6, %cst_65 {dimension_numbers = #tpu.dot_dimension_numbers<[1], [0], [0], [1], [0, 0, 1, 1], [], []>} : vector<256x256xf32>, vector<256x32xf32>, vector<256x32xf32> -> vector<256x32xf32>
    %59 = vector.broadcast %1 : vector<1x32xf32> to vector<256x32xf32>
    %60 = arith.addf %58, %59 : vector<256x32xf32>
    %cst_66 = arith.constant 0.000000e+00 : f32
    %61 = vector.broadcast %cst_66 : f32 to vector<256x32xf32>
    %62 = arith.maximumf %60, %61 : vector<256x32xf32>
    %cst_67 = arith.constant dense<0xFF800000> : vector<256xf32>
    %63 = vector.multi_reduction <maximumf>, %62, %cst_67 [1] : vector<256x32xf32> to vector<256xf32>
    %64 = vector.shape_cast %63 : vector<256xf32> to vector<256x1xf32>
    %65 = vector.broadcast %64 : vector<256x1xf32> to vector<256x32xf32>
    %66 = arith.subf %62, %65 : vector<256x32xf32>
    %67 = math.exp %66 : vector<256x32xf32>
    %cst_68 = arith.constant dense<0.000000e+00> : vector<256xf32>
    %68 = vector.multi_reduction <add>, %67, %cst_68 [1] : vector<256x32xf32> to vector<256xf32>
    %69 = vector.shape_cast %68 : vector<256xf32> to vector<256x1xf32>
    %70 = math.log %69 : vector<256x1xf32>
    %71 = vector.broadcast %70 : vector<256x1xf32> to vector<256x32xf32>
    %72 = arith.subf %66, %71 : vector<256x32xf32>
    %cst_69 = arith.constant dense<0.000000e+00> : vector<256x32xf32>
    %73 = tpu.matmul %57, %72, %cst_69 {dimension_numbers = #tpu.dot_dimension_numbers<[1], [0], [0], [1], [0, 0, 1, 1], [], []>} : vector<256x256xf32>, vector<256x32xf32>, vector<256x32xf32> -> vector<256x32xf32>
    %cst_70 = arith.constant 0.000000e+00 : f32
    %74 = vector.broadcast %cst_70 : f32 to vector<256x512xf32>
    %c0_71 = arith.constant 0 : index
    %c0_72 = arith.constant 0 : index
    %75 = vector.load %arg9[%c0_71, %c0_72] : memref<256x512xf32, #tpu.memory_space<vmem>>, vector<256x512xf32>
    tpu.vector_store %arg9[%c0_71, %c0_72], %74 {strides = array<i32>} : memref<256x512xf32, #tpu.memory_space<vmem>>, vector<256x512xf32>,
    %76 = vector.extract_strided_slice %72 {offsets = [0, 0], sizes = [16, 32], strides = [1, 1]} : vector<256x32xf32> to vector<16x32xf32>
    %c0_73 = arith.constant 0 : index
    %c0_74 = arith.constant 0 : index
    %77 = vector.load %arg9[%c0_73, %c0_74] : memref<256x512xf32, #tpu.memory_space<vmem>>, vector<16x32xf32>
    tpu.vector_store %arg9[%c0_73, %c0_74], %76 {strides = array<i32>} : memref<256x512xf32, #tpu.memory_space<vmem>>, vector<16x32xf32>,
    %78 = vector.extract_strided_slice %72 {offsets = [16, 0], sizes = [16, 32], strides = [1, 1]} : vector<256x32xf32> to vector<16x32xf32>
    %c16_75 = arith.constant 16 : index
    %c32_76 = arith.constant 32 : index
    %79 = vector.load %arg9[%c16_75, %c32_76] : memref<256x512xf32, #tpu.memory_space<vmem>>, vector<16x32xf32>
    tpu.vector_store %arg9[%c16_75, %c32_76], %78 {strides = array<i32>} : memref<256x512xf32, #tpu.memory_space<vmem>>, vector<16x32xf32>,
    %80 = vector.extract_strided_slice %72 {offsets = [32, 0], sizes = [16, 32], strides = [1, 1]} : vector<256x32xf32> to vector<16x32xf32>
    %c32_77 = arith.constant 32 : index
    %c64_78 = arith.constant 64 : index
    %81 = vector.load %arg9[%c32_77, %c64_78] : memref<256x512xf32, #tpu.memory_space<vmem>>, vector<16x32xf32>
    tpu.vector_store %arg9[%c32_77, %c64_78], %80 {strides = array<i32>} : memref<256x512xf32, #tpu.memory_space<vmem>>, vector<16x32xf32>,
    %82 = vector.extract_strided_slice %72 {offsets = [48, 0], sizes = [16, 32], strides = [1, 1]} : vector<256x32xf32> to vector<16x32xf32>
    %c48_79 = arith.constant 48 : index
    %c96_80 = arith.constant 96 : index
    %83 = vector.load %arg9[%c48_79, %c96_80] : memref<256x512xf32, #tpu.memory_space<vmem>>, vector<16x32xf32>
    tpu.vector_store %arg9[%c48_79, %c96_80], %82 {strides = array<i32>} : memref<256x512xf32, #tpu.memory_space<vmem>>, vector<16x32xf32>,
    %84 = vector.extract_strided_slice %72 {offsets = [64, 0], sizes = [16, 32], strides = [1, 1]} : vector<256x32xf32> to vector<16x32xf32>
    %c64_81 = arith.constant 64 : index
    %c128_82 = arith.constant 128 : index
    %85 = vector.load %arg9[%c64_81, %c128_82] : memref<256x512xf32, #tpu.memory_space<vmem>>, vector<16x32xf32>
    tpu.vector_store %arg9[%c64_81, %c128_82], %84 {strides = array<i32>} : memref<256x512xf32, #tpu.memory_space<vmem>>, vector<16x32xf32>,
    %86 = vector.extract_strided_slice %72 {offsets = [80, 0], sizes = [16, 32], strides = [1, 1]} : vector<256x32xf32> to vector<16x32xf32>
    %c80_83 = arith.constant 80 : index
    %c160_84 = arith.constant 160 : index
    %87 = vector.load %arg9[%c80_83, %c160_84] : memref<256x512xf32, #tpu.memory_space<vmem>>, vector<16x32xf32>
    tpu.vector_store %arg9[%c80_83, %c160_84], %86 {strides = array<i32>} : memref<256x512xf32, #tpu.memory_space<vmem>>, vector<16x32xf32>,
    %88 = vector.extract_strided_slice %72 {offsets = [96, 0], sizes = [16, 32], strides = [1, 1]} : vector<256x32xf32> to vector<16x32xf32>
    %c96_85 = arith.constant 96 : index
    %c192_86 = arith.constant 192 : index
    %89 = vector.load %arg9[%c96_85, %c192_86] : memref<256x512xf32, #tpu.memory_space<vmem>>, vector<16x32xf32>
    tpu.vector_store %arg9[%c96_85, %c192_86], %88 {strides = array<i32>} : memref<256x512xf32, #tpu.memory_space<vmem>>, vector<16x32xf32>,
    %90 = vector.extract_strided_slice %72 {offsets = [112, 0], sizes = [16, 32], strides = [1, 1]} : vector<256x32xf32> to vector<16x32xf32>
    %c112_87 = arith.constant 112 : index
    %c224_88 = arith.constant 224 : index
    %91 = vector.load %arg9[%c112_87, %c224_88] : memref<256x512xf32, #tpu.memory_space<vmem>>, vector<16x32xf32>
    tpu.vector_store %arg9[%c112_87, %c224_88], %90 {strides = array<i32>} : memref<256x512xf32, #tpu.memory_space<vmem>>, vector<16x32xf32>,
    %92 = vector.extract_strided_slice %72 {offsets = [128, 0], sizes = [16, 32], strides = [1, 1]} : vector<256x32xf32> to vector<16x32xf32>
    %c128_89 = arith.constant 128 : index
    %c256 = arith.constant 256 : index
    %93 = vector.load %arg9[%c128_89, %c256] : memref<256x512xf32, #tpu.memory_space<vmem>>, vector<16x32xf32>
    tpu.vector_store %arg9[%c128_89, %c256], %92 {strides = array<i32>} : memref<256x512xf32, #tpu.memory_space<vmem>>, vector<16x32xf32>,
    %94 = vector.extract_strided_slice %72 {offsets = [144, 0], sizes = [16, 32], strides = [1, 1]} : vector<256x32xf32> to vector<16x32xf32>
    %c144_90 = arith.constant 144 : index
    %c288 = arith.constant 288 : index
    %95 = vector.load %arg9[%c144_90, %c288] : memref<256x512xf32, #tpu.memory_space<vmem>>, vector<16x32xf32>
    tpu.vector_store %arg9[%c144_90, %c288], %94 {strides = array<i32>} : memref<256x512xf32, #tpu.memory_space<vmem>>, vector<16x32xf32>,
    %96 = vector.extract_strided_slice %72 {offsets = [160, 0], sizes = [16, 32], strides = [1, 1]} : vector<256x32xf32> to vector<16x32xf32>
    %c160_91 = arith.constant 160 : index
    %c320 = arith.constant 320 : index
    %97 = vector.load %arg9[%c160_91, %c320] : memref<256x512xf32, #tpu.memory_space<vmem>>, vector<16x32xf32>
    tpu.vector_store %arg9[%c160_91, %c320], %96 {strides = array<i32>} : memref<256x512xf32, #tpu.memory_space<vmem>>, vector<16x32xf32>,
    %98 = vector.extract_strided_slice %72 {offsets = [176, 0], sizes = [16, 32], strides = [1, 1]} : vector<256x32xf32> to vector<16x32xf32>
    %c176_92 = arith.constant 176 : index
    %c352 = arith.constant 352 : index
    %99 = vector.load %arg9[%c176_92, %c352] : memref<256x512xf32, #tpu.memory_space<vmem>>, vector<16x32xf32>
    tpu.vector_store %arg9[%c176_92, %c352], %98 {strides = array<i32>} : memref<256x512xf32, #tpu.memory_space<vmem>>, vector<16x32xf32>,
    %100 = vector.extract_strided_slice %72 {offsets = [192, 0], sizes = [16, 32], strides = [1, 1]} : vector<256x32xf32> to vector<16x32xf32>
    %c192_93 = arith.constant 192 : index
    %c384 = arith.constant 384 : index
    %101 = vector.load %arg9[%c192_93, %c384] : memref<256x512xf32, #tpu.memory_space<vmem>>, vector<16x32xf32>
    tpu.vector_store %arg9[%c192_93, %c384], %100 {strides = array<i32>} : memref<256x512xf32, #tpu.memory_space<vmem>>, vector<16x32xf32>,
    %102 = vector.extract_strided_slice %72 {offsets = [208, 0], sizes = [16, 32], strides = [1, 1]} : vector<256x32xf32> to vector<16x32xf32>
    %c208_94 = arith.constant 208 : index
    %c416 = arith.constant 416 : index
    %103 = vector.load %arg9[%c208_94, %c416] : memref<256x512xf32, #tpu.memory_space<vmem>>, vector<16x32xf32>
    tpu.vector_store %arg9[%c208_94, %c416], %102 {strides = array<i32>} : memref<256x512xf32, #tpu.memory_space<vmem>>, vector<16x32xf32>,
    %104 = vector.extract_strided_slice %72 {offsets = [224, 0], sizes = [16, 32], strides = [1, 1]} : vector<256x32xf32> to vector<16x32xf32>
    %c224_95 = arith.constant 224 : index
    %c448 = arith.constant 448 : index
    %105 = vector.load %arg9[%c224_95, %c448] : memref<256x512xf32, #tpu.memory_space<vmem>>, vector<16x32xf32>
    tpu.vector_store %arg9[%c224_95, %c448], %104 {strides = array<i32>} : memref<256x512xf32, #tpu.memory_space<vmem>>, vector<16x32xf32>,
    %106 = vector.extract_strided_slice %72 {offsets = [240, 0], sizes = [16, 32], strides = [1, 1]} : vector<256x32xf32> to vector<16x32xf32>
    %c240_96 = arith.constant 240 : index
    %c480 = arith.constant 480 : index
    %107 = vector.load %arg9[%c240_96, %c480] : memref<256x512xf32, #tpu.memory_space<vmem>>, vector<16x32xf32>
    tpu.vector_store %arg9[%c240_96, %c480], %106 {strides = array<i32>} : memref<256x512xf32, #tpu.memory_space<vmem>>, vector<16x32xf32>,
    %108 = tpu.concatenate %62, %73 in 1 : vector<256x32xf32>, vector<256x32xf32> -> vector<256x64xf32>
    %c0_97 = arith.constant 0 : index
    %c0_98 = arith.constant 0 : index
    %109 = vector.load %arg9[%c0_97, %c0_98] : memref<256x512xf32, #tpu.memory_space<vmem>>, vector<256x512xf32>
    %cst_99 = arith.constant dense<0.000000e+00> : vector<512x64xf32>
    %110 = tpu.matmul %109, %108, %cst_99 {dimension_numbers = #tpu.dot_dimension_numbers<[0], [0], [1], [1], [0, 1, 1, 1], [], []>} : vector<256x512xf32>, vector<256x64xf32>, vector<512x64xf32> -> vector<512x64xf32>
    %111 = vector.extract_strided_slice %110 {offsets = [0, 0], sizes = [512, 32], strides = [1, 1]} : vector<512x64xf32> to vector<512x32xf32>
    %cst_100 = arith.constant dense<0.000000e+00> : vector<512x128xf32>
    %112 = tpu.matmul %111, %2, %cst_100 {dimension_numbers = #tpu.dot_dimension_numbers<[1], [0], [0], [1], [0, 0, 1, 1], [], []>} : vector<512x32xf32>, vector<32x128xf32>, vector<512x128xf32> -> vector<512x128xf32>
    %cst_101 = arith.constant 0.000000e+00 : f32
    %113 = vector.broadcast %cst_101 : f32 to vector<512x512xf32>
    %c0_102 = arith.constant 0 : index
    %c0_103 = arith.constant 0 : index
    %114 = vector.load %arg10[%c0_102, %c0_103] : memref<512x512xf32, #tpu.memory_space<vmem>>, vector<512x512xf32>
    tpu.vector_store %arg10[%c0_102, %c0_103], %113 {strides = array<i32>} : memref<512x512xf32, #tpu.memory_space<vmem>>, vector<512x512xf32>,
    %115 = vector.extract_strided_slice %110 {offsets = [0, 32], sizes = [32, 32], strides = [1, 1]} : vector<512x64xf32> to vector<32x32xf32>
    %c0_104 = arith.constant 0 : index
    %c0_105 = arith.constant 0 : index
    %116 = vector.load %arg10[%c0_104, %c0_105] : memref<512x512xf32, #tpu.memory_space<vmem>>, vector<32x32xf32>
    tpu.vector_store %arg10[%c0_104, %c0_105], %115 {strides = array<i32>} : memref<512x512xf32, #tpu.memory_space<vmem>>, vector<32x32xf32>,
    %117 = vector.extract_strided_slice %110 {offsets = [32, 32], sizes = [32, 32], strides = [1, 1]} : vector<512x64xf32> to vector<32x32xf32>
    %c32_106 = arith.constant 32 : index
    %c32_107 = arith.constant 32 : index
    %118 = vector.load %arg10[%c32_106, %c32_107] : memref<512x512xf32, #tpu.memory_space<vmem>>, vector<32x32xf32>
    tpu.vector_store %arg10[%c32_106, %c32_107], %117 {strides = array<i32>} : memref<512x512xf32, #tpu.memory_space<vmem>>, vector<32x32xf32>,
    %119 = vector.extract_strided_slice %110 {offsets = [64, 32], sizes = [32, 32], strides = [1, 1]} : vector<512x64xf32> to vector<32x32xf32>
    %c64_108 = arith.constant 64 : index
    %c64_109 = arith.constant 64 : index
    %120 = vector.load %arg10[%c64_108, %c64_109] : memref<512x512xf32, #tpu.memory_space<vmem>>, vector<32x32xf32>
    tpu.vector_store %arg10[%c64_108, %c64_109], %119 {strides = array<i32>} : memref<512x512xf32, #tpu.memory_space<vmem>>, vector<32x32xf32>,
    %121 = vector.extract_strided_slice %110 {offsets = [96, 32], sizes = [32, 32], strides = [1, 1]} : vector<512x64xf32> to vector<32x32xf32>
    %c96_110 = arith.constant 96 : index
    %c96_111 = arith.constant 96 : index
    %122 = vector.load %arg10[%c96_110, %c96_111] : memref<512x512xf32, #tpu.memory_space<vmem>>, vector<32x32xf32>
    tpu.vector_store %arg10[%c96_110, %c96_111], %121 {strides = array<i32>} : memref<512x512xf32, #tpu.memory_space<vmem>>, vector<32x32xf32>,
    %123 = vector.extract_strided_slice %110 {offsets = [128, 32], sizes = [32, 32], strides = [1, 1]} : vector<512x64xf32> to vector<32x32xf32>
    %c128_112 = arith.constant 128 : index
    %c128_113 = arith.constant 128 : index
    %124 = vector.load %arg10[%c128_112, %c128_113] : memref<512x512xf32, #tpu.memory_space<vmem>>, vector<32x32xf32>
    tpu.vector_store %arg10[%c128_112, %c128_113], %123 {strides = array<i32>} : memref<512x512xf32, #tpu.memory_space<vmem>>, vector<32x32xf32>,
    %125 = vector.extract_strided_slice %110 {offsets = [160, 32], sizes = [32, 32], strides = [1, 1]} : vector<512x64xf32> to vector<32x32xf32>
    %c160_114 = arith.constant 160 : index
    %c160_115 = arith.constant 160 : index
    %126 = vector.load %arg10[%c160_114, %c160_115] : memref<512x512xf32, #tpu.memory_space<vmem>>, vector<32x32xf32>
    tpu.vector_store %arg10[%c160_114, %c160_115], %125 {strides = array<i32>} : memref<512x512xf32, #tpu.memory_space<vmem>>, vector<32x32xf32>,
    %127 = vector.extract_strided_slice %110 {offsets = [192, 32], sizes = [32, 32], strides = [1, 1]} : vector<512x64xf32> to vector<32x32xf32>
    %c192_116 = arith.constant 192 : index
    %c192_117 = arith.constant 192 : index
    %128 = vector.load %arg10[%c192_116, %c192_117] : memref<512x512xf32, #tpu.memory_space<vmem>>, vector<32x32xf32>
    tpu.vector_store %arg10[%c192_116, %c192_117], %127 {strides = array<i32>} : memref<512x512xf32, #tpu.memory_space<vmem>>, vector<32x32xf32>,
    %129 = vector.extract_strided_slice %110 {offsets = [224, 32], sizes = [32, 32], strides = [1, 1]} : vector<512x64xf32> to vector<32x32xf32>
    %c224_118 = arith.constant 224 : index
    %c224_119 = arith.constant 224 : index
    %130 = vector.load %arg10[%c224_118, %c224_119] : memref<512x512xf32, #tpu.memory_space<vmem>>, vector<32x32xf32>
    tpu.vector_store %arg10[%c224_118, %c224_119], %129 {strides = array<i32>} : memref<512x512xf32, #tpu.memory_space<vmem>>, vector<32x32xf32>,
    %131 = vector.extract_strided_slice %110 {offsets = [256, 32], sizes = [32, 32], strides = [1, 1]} : vector<512x64xf32> to vector<32x32xf32>
    %c256_120 = arith.constant 256 : index
    %c256_121 = arith.constant 256 : index
    %132 = vector.load %arg10[%c256_120, %c256_121] : memref<512x512xf32, #tpu.memory_space<vmem>>, vector<32x32xf32>
    tpu.vector_store %arg10[%c256_120, %c256_121], %131 {strides = array<i32>} : memref<512x512xf32, #tpu.memory_space<vmem>>, vector<32x32xf32>,
    %133 = vector.extract_strided_slice %110 {offsets = [288, 32], sizes = [32, 32], strides = [1, 1]} : vector<512x64xf32> to vector<32x32xf32>
    %c288_122 = arith.constant 288 : index
    %c288_123 = arith.constant 288 : index
    %134 = vector.load %arg10[%c288_122, %c288_123] : memref<512x512xf32, #tpu.memory_space<vmem>>, vector<32x32xf32>
    tpu.vector_store %arg10[%c288_122, %c288_123], %133 {strides = array<i32>} : memref<512x512xf32, #tpu.memory_space<vmem>>, vector<32x32xf32>,
    %135 = vector.extract_strided_slice %110 {offsets = [320, 32], sizes = [32, 32], strides = [1, 1]} : vector<512x64xf32> to vector<32x32xf32>
    %c320_124 = arith.constant 320 : index
    %c320_125 = arith.constant 320 : index
    %136 = vector.load %arg10[%c320_124, %c320_125] : memref<512x512xf32, #tpu.memory_space<vmem>>, vector<32x32xf32>
    tpu.vector_store %arg10[%c320_124, %c320_125], %135 {strides = array<i32>} : memref<512x512xf32, #tpu.memory_space<vmem>>, vector<32x32xf32>,
    %137 = vector.extract_strided_slice %110 {offsets = [352, 32], sizes = [32, 32], strides = [1, 1]} : vector<512x64xf32> to vector<32x32xf32>
    %c352_126 = arith.constant 352 : index
    %c352_127 = arith.constant 352 : index
    %138 = vector.load %arg10[%c352_126, %c352_127] : memref<512x512xf32, #tpu.memory_space<vmem>>, vector<32x32xf32>
    tpu.vector_store %arg10[%c352_126, %c352_127], %137 {strides = array<i32>} : memref<512x512xf32, #tpu.memory_space<vmem>>, vector<32x32xf32>,
    %139 = vector.extract_strided_slice %110 {offsets = [384, 32], sizes = [32, 32], strides = [1, 1]} : vector<512x64xf32> to vector<32x32xf32>
    %c384_128 = arith.constant 384 : index
    %c384_129 = arith.constant 384 : index
    %140 = vector.load %arg10[%c384_128, %c384_129] : memref<512x512xf32, #tpu.memory_space<vmem>>, vector<32x32xf32>
    tpu.vector_store %arg10[%c384_128, %c384_129], %139 {strides = array<i32>} : memref<512x512xf32, #tpu.memory_space<vmem>>, vector<32x32xf32>,
    %141 = vector.extract_strided_slice %110 {offsets = [416, 32], sizes = [32, 32], strides = [1, 1]} : vector<512x64xf32> to vector<32x32xf32>
    %c416_130 = arith.constant 416 : index
    %c416_131 = arith.constant 416 : index
    %142 = vector.load %arg10[%c416_130, %c416_131] : memref<512x512xf32, #tpu.memory_space<vmem>>, vector<32x32xf32>
    tpu.vector_store %arg10[%c416_130, %c416_131], %141 {strides = array<i32>} : memref<512x512xf32, #tpu.memory_space<vmem>>, vector<32x32xf32>,
    %143 = vector.extract_strided_slice %110 {offsets = [448, 32], sizes = [32, 32], strides = [1, 1]} : vector<512x64xf32> to vector<32x32xf32>
    %c448_132 = arith.constant 448 : index
    %c448_133 = arith.constant 448 : index
    %144 = vector.load %arg10[%c448_132, %c448_133] : memref<512x512xf32, #tpu.memory_space<vmem>>, vector<32x32xf32>
    tpu.vector_store %arg10[%c448_132, %c448_133], %143 {strides = array<i32>} : memref<512x512xf32, #tpu.memory_space<vmem>>, vector<32x32xf32>,
    %145 = vector.extract_strided_slice %110 {offsets = [480, 32], sizes = [32, 32], strides = [1, 1]} : vector<512x64xf32> to vector<32x32xf32>
    %c480_134 = arith.constant 480 : index
    %c480_135 = arith.constant 480 : index
    %146 = vector.load %arg10[%c480_134, %c480_135] : memref<512x512xf32, #tpu.memory_space<vmem>>, vector<32x32xf32>
    tpu.vector_store %arg10[%c480_134, %c480_135], %145 {strides = array<i32>} : memref<512x512xf32, #tpu.memory_space<vmem>>, vector<32x32xf32>,
    %c0_136 = arith.constant 0 : index
    %c0_137 = arith.constant 0 : index
    %147 = vector.load %arg10[%c0_136, %c0_137] : memref<512x512xf32, #tpu.memory_space<vmem>>, vector<512x512xf32>
    %cst_138 = arith.constant dense<0.000000e+00> : vector<512x128xf32>
    %148 = tpu.matmul %147, %112, %cst_138 {dimension_numbers = #tpu.dot_dimension_numbers<[1], [0], [0], [1], [0, 0, 1, 1], [], []>} : vector<512x512xf32>, vector<512x128xf32>, vector<512x128xf32> -> vector<512x128xf32>
    %149 = vector.broadcast %3 : vector<1x128xf32> to vector<512x128xf32>
    %150 = arith.addf %148, %149 : vector<512x128xf32>
    %cst_139 = arith.constant 0.000000e+00 : f32
    %151 = vector.broadcast %cst_139 : f32 to vector<512x128xf32>
    %152 = arith.maximumf %150, %151 : vector<512x128xf32>
    %153 = vector.shape_cast %152 : vector<512x128xf32> to vector<16x32x128xf32>
    %cst_140 = arith.constant dense<0xFF800000> : vector<16x128xf32>
    %154 = vector.multi_reduction <maximumf>, %153, %cst_140 [1] : vector<16x32x128xf32> to vector<16x128xf32>
    %c0_141 = arith.constant 0 : index
    %c0_142 = arith.constant 0 : index
    %155 = vector.load %arg7[%c0_141, %c0_142] : memref<16x128xf32, #tpu.memory_space<vmem>>, vector<16x128xf32>
    tpu.vector_store %arg7[%c0_141, %c0_142], %154 {strides = array<i32>} : memref<16x128xf32, #tpu.memory_space<vmem>>, vector<16x128xf32>,
    return
  }
  func.func @transform_0(%arg0: i32) -> (i32, i32, i32) {
    %c0_i32 = arith.constant 0 : i32
    %c0_i32_0 = arith.constant 0 : i32
    %c0_i32_1 = arith.constant 0 : i32
    return %arg0, %c0_i32, %c0_i32_0 : i32, i32, i32
  }
  func.func @transform_1(%arg0: i32) -> (i32, i32, i32) {
    %c0_i32 = arith.constant 0 : i32
    %c0_i32_0 = arith.constant 0 : i32
    %c0_i32_1 = arith.constant 0 : i32
    return %arg0, %c0_i32, %c0_i32_0 : i32, i32, i32
  }
  func.func @transform_2(%arg0: i32) -> (i32, i32) {
    %c0_i32 = arith.constant 0 : i32
    %c0_i32_0 = arith.constant 0 : i32
    %c0_i32_1 = arith.constant 0 : i32
    return %c0_i32, %c0_i32_0 : i32, i32
  }
  func.func @transform_3(%arg0: i32) -> (i32, i32) {
    %c0_i32 = arith.constant 0 : i32
    %c0_i32_0 = arith.constant 0 : i32
    %c0_i32_1 = arith.constant 0 : i32
    return %c0_i32, %c0_i32_0 : i32, i32
  }
  func.func @transform_4(%arg0: i32) -> (i32, i32) {
    %c0_i32 = arith.constant 0 : i32
    %c0_i32_0 = arith.constant 0 : i32
    %c0_i32_1 = arith.constant 0 : i32
    return %c0_i32, %c0_i32_0 : i32, i32
  }
  func.func @transform_5(%arg0: i32) -> (i32, i32) {
    %c0_i32 = arith.constant 0 : i32
    %c0_i32_0 = arith.constant 0 : i32
    %c0_i32_1 = arith.constant 0 : i32
    return %c0_i32, %c0_i32_0 : i32, i32
  }
  func.func @transform_6(%arg0: i32) -> (i32, i32) {
    %c0_i32 = arith.constant 0 : i32
    %c0_i32_0 = arith.constant 0 : i32
    return %arg0, %c0_i32 : i32, i32
  }
}

</mosaic_0001>

<llo_original>
// kernel: tpu_custom_call.1
$region0: #{tpu_custom_call.1}
  #allocation0 [shape = 'u32[]', space=smem, size = 0x4, offset = 0x4, fixed_abs, tag = 'smem constant byte address 0x4 - core index']
  #allocation1 [shape = 'u32[72,128]{1,0:T(1,128)}', space=vmem, size = 0x9000, scoped, tag = 'internal scratch']
  #allocation2 [shape = 'f32[256,256]{1,0:T(8,128)}', space=vmem, size = 0x40000, scoped, tag = 'scratch operand']
  #allocation3 [shape = 'f32[256,512]{1,0:T(8,128)}', space=vmem, size = 0x80000, scoped, tag = 'scratch operand']
  #allocation4 [shape = 'f32[512,512]{1,0:T(8,128)}', space=vmem, size = 0x100000, scoped, tag = 'scratch operand']
  %s0 = inlined_call_operand.hbm [shape: f32[16,16,16], index: 0, kind: input, shape index: {}]
  %s1 = inlined_call_operand.hbm [shape: f32[16,16,16], index: 1, kind: input, shape index: {}]
  %s2 = inlined_call_operand.hbm [shape: f32[16,32], index: 2, kind: input, shape index: {}]
  %s3 = inlined_call_operand.vmem [shape: f32[1,32], index: 3, kind: input, shape index: {}]
  %s4 = inlined_call_operand.hbm [shape: f32[32,128], index: 4, kind: input, shape index: {}]
  %s5 = inlined_call_operand.vmem [shape: f32[1,128], index: 5, kind: input, shape index: {}]
  %s6 = inlined_call_operand.hbm [shape: f32[16,128], index: 6, kind: output, shape index: {}]
  %s7 = sld [smem:[#allocation0]]
  $region50: #{tpu_custom_call.1} parent=0
    _
  %s9 = ssub.s32 1, %s7
  %s10 = scalar_select 0, %s9, %s7
  $region1: #{tpu_custom_call.1} parent=0
    #allocation5 [shape = 'u8[131072]{0}', space=vmem, size = 0x20000, scoped, tag = 'input window, operand 0, single buffered']
    #allocation6 [shape = 's32[1]{0}', space=sflag, size = 0x4, scoped, tag = 'scoped memory for tpu_custom_call.1']
    #allocation7 [shape = 's32[1]{0}', space=sflag, size = 0x4, scoped, tag = 'scoped memory for tpu_custom_call.1']
    #allocation8 [shape = 'u8[131072]{0}', space=vmem, size = 0x20000, scoped, tag = 'input window, operand 1, single buffered']
    #allocation9 [shape = 's32[1]{0}', space=sflag, size = 0x4, scoped, tag = 'scoped memory for tpu_custom_call.1']
    #allocation10 [shape = 'u8[8192]{0}', space=vmem, size = 0x2000, scoped, tag = 'input window, operand 2, single buffered']
    #allocation11 [shape = 'u8[16384]{0}', space=vmem, size = 0x4000, scoped, tag = 'input window, operand 4, single buffered']
    #allocation12 [shape = 's32[1]{0}', space=sflag, size = 0x4, scoped, tag = 'scoped memory for tpu_custom_call.1']
    #allocation13 [shape = 'u8[8192]{0}', space=vmem, size = 0x2000, scoped, tag = 'output window, operand 0, single buffered']
    %11 = vsyncpa [#allocation6], 0
    %12 = vsyncpa [#allocation9], 0
    %13 = vsyncpa [#allocation12], 0
    %14 = vsyncpa [#allocation7], 0
    // Predicated region
    $region2: #{tpu_custom_call.1} parent=1 // pred_check
      _
    $region3: #{tpu_custom_call.1} parent=1 // pred_check_branch
      %16 = sbr.rel (0) target = $region5
    $region4: #{tpu_custom_call.1} parent=1 // pred_region
      %18 = vsyncadd [#allocation6], 0
      %s19 = sshll.u32 %s0, 4
      %s20 = int_to_ptr.hbm [resolvable:$true] %s19
      %s21 = sshll.u32 [#allocation5], 4
      %s22 = int_to_ptr.vmem [resolvable:$true] %s21
      %27 = dma.hbm_to_vmem [thread:$0]  %s20, 4096, %s22, [#allocation6], 128, 128, 8
    $region5: #{tpu_custom_call.1} parent=1 // pred_fallthru
      _
    // Predicated region
    $region6: #{tpu_custom_call.1} parent=1 // pred_check
      _
    $region7: #{tpu_custom_call.1} parent=1 // pred_check_branch
      %29 = sbr.rel (0) target = $region9
    $region8: #{tpu_custom_call.1} parent=1 // pred_region
      %31 = vsyncadd [#allocation9], 0
      %s32 = sshll.u32 %s1, 4
      %s33 = int_to_ptr.hbm [resolvable:$true] %s32
      %s34 = sshll.u32 [#allocation8], 4
      %s35 = int_to_ptr.vmem [resolvable:$true] %s34
      %40 = dma.hbm_to_vmem [thread:$0]  %s33, 4096, %s35, [#allocation9], 128, 128, 8
    $region9: #{tpu_custom_call.1} parent=1 // pred_fallthru
      _
    // Predicated region
    $region10: #{tpu_custom_call.1} parent=1 // pred_check
      _
    $region11: #{tpu_custom_call.1} parent=1 // pred_check_branch
      %42 = sbr.rel (0) target = $region13
    $region12: #{tpu_custom_call.1} parent=1 // pred_region
      %44 = vsyncadd [#allocation9], 0
      %s45 = sshll.u32 %s2, 4
      %s46 = int_to_ptr.hbm [resolvable:$true] %s45
      %s47 = sshll.u32 [#allocation10], 4
      %s48 = int_to_ptr.vmem [resolvable:$true] %s47
      %53 = dma.hbm_to_vmem [thread:$0]  %s46, 256, %s48, [#allocation9], 128, 128, 8
    $region13: #{tpu_custom_call.1} parent=1 // pred_fallthru
      _
    // Predicated region
    $region14: #{tpu_custom_call.1} parent=1 // pred_check
      _
    $region15: #{tpu_custom_call.1} parent=1 // pred_check_branch
      %55 = sbr.rel (0) target = $region17
    $region16: #{tpu_custom_call.1} parent=1 // pred_region
      _
    $region17: #{tpu_custom_call.1} parent=1 // pred_fallthru
      _
    // Predicated region
    $region18: #{tpu_custom_call.1} parent=1 // pred_check
      _
    $region19: #{tpu_custom_call.1} parent=1 // pred_check_branch
      %57 = sbr.rel (0) target = $region21
    $region20: #{tpu_custom_call.1} parent=1 // pred_region
      %59 = vsyncadd [#allocation12], 0
      %s60 = sshll.u32 %s4, 4
      %s61 = int_to_ptr.hbm [resolvable:$true] %s60
      %s62 = sshll.u32 [#allocation11], 4
      %s63 = int_to_ptr.vmem [resolvable:$true] %s62
      %68 = dma.hbm_to_vmem [thread:$0]  %s61, 512, %s63, [#allocation12], 128, 128, 8
    $region21: #{tpu_custom_call.1} parent=1 // pred_fallthru
      _
    // Predicated region
    $region22: #{tpu_custom_call.1} parent=1 // pred_check
      _
    $region23: #{tpu_custom_call.1} parent=1 // pred_check_branch
      %70 = sbr.rel (0) target = $region25
    $region24: #{tpu_custom_call.1} parent=1 // pred_region
      _
    $region25: #{tpu_custom_call.1} parent=1 // pred_fallthru
      _
    // Predicated region
    $region26: #{tpu_custom_call.1} parent=1 // pred_check
      _
    $region27: #{tpu_custom_call.1} parent=1 // pred_check_branch
      %72 = sbr.rel (0) target = $region29
    $region28: #{tpu_custom_call.1} parent=1 // pred_region
      %74 = dma.done [#allocation6], 4096
    $region29: #{tpu_custom_call.1} parent=1 // pred_fallthru
      _
    // Predicated region
    $region30: #{tpu_custom_call.1} parent=1 // pred_check
      _
    $region31: #{tpu_custom_call.1} parent=1 // pred_check_branch
      %76 = sbr.rel (0) target = $region33
    $region32: #{tpu_custom_call.1} parent=1 // pred_region
      %78 = dma.done [#allocation9], 4096
    $region33: #{tpu_custom_call.1} parent=1 // pred_fallthru
      _
    // Predicated region
    $region34: #{tpu_custom_call.1} parent=1 // pred_check
      _
    $region35: #{tpu_custom_call.1} parent=1 // pred_check_branch
      %80 = sbr.rel (0) target = $region37
    $region36: #{tpu_custom_call.1} parent=1 // pred_region
      %82 = dma.done [#allocation9], 256
    $region37: #{tpu_custom_call.1} parent=1 // pred_fallthru
      _
    // Predicated region
    $region38: #{tpu_custom_call.1} parent=1 // pred_check
      _
    $region39: #{tpu_custom_call.1} parent=1 // pred_check_branch
      %84 = sbr.rel (0) target = $region41
    $region40: #{tpu_custom_call.1} parent=1 // pred_region
      %86 = dma.done [#allocation12], 512
    $region41: #{tpu_custom_call.1} parent=1 // pred_fallthru
      _
    %v87 = vld [vmem:[#allocation10] sm:$0xff]
    %v88 = vld [vmem:[#allocation10 + $0x8] sm:$0xff]
    %v89 = vld [vmem:[%s3] sm:$0x1]
    %v90 = vld [vmem:[#allocation11] sm:$0xff]
    %v91 = vld [vmem:[#allocation11 + $0x8] sm:$0xff]
    %v92 = vld [vmem:[#allocation11 + $0x10] sm:$0xff]
    %v93 = vld [vmem:[#allocation11 + $0x18] sm:$0xff]
    %v94 = vld [vmem:[%s5] sm:$0x1]
    %v95 = vld [vmem:[#allocation5] sm:$0xff]
    %v96 = vld [vmem:[#allocation5 + $0x8] sm:$0xff]
    %v97 = vld [vmem:[#allocation5 + $0x10] sm:$0xff]
    %v98 = vld [vmem:[#allocation5 + $0x18] sm:$0xff]
    %v99 = vld [vmem:[#allocation5 + $0x20] sm:$0xff]
    %v100 = vld [vmem:[#allocation5 + $0x28] sm:$0xff]
    %v101 = vld [vmem:[#allocation5 + $0x30] sm:$0xff]
    %v102 = vld [vmem:[#allocation5 + $0x38] sm:$0xff]
    %v103 = vld [vmem:[#allocation5 + $0x40] sm:$0xff]
    %v104 = vld [vmem:[#allocation5 + $0x48] sm:$0xff]
    %v105 = vld [vmem:[#allocation5 + $0x50] sm:$0xff]
    %v106 = vld [vmem:[#allocation5 + $0x58] sm:$0xff]
    %v107 = vld [vmem:[#allocation5 + $0x60] sm:$0xff]
    %v108 = vld [vmem:[#allocation5 + $0x68] sm:$0xff]
    %v109 = vld [vmem:[#allocation5 + $0x70] sm:$0xff]
    %v110 = vld [vmem:[#allocation5 + $0x78] sm:$0xff]
    %v111 = vld [vmem:[#allocation5 + $0x80] sm:$0xff]
    %v112 = vld [vmem:[#allocation5 + $0x88] sm:$0xff]
    %v113 = vld [vmem:[#allocation5 + $0x90] sm:$0xff]
    %v114 = vld [vmem:[#allocation5 + $0x98] sm:$0xff]
    %v115 = vld [vmem:[#allocation5 + $0xa0] sm:$0xff]
    %v116 = vld [vmem:[#allocation5 + $0xa8] sm:$0xff]
    %v117 = vld [vmem:[#allocation5 + $0xb0] sm:$0xff]
    %v118 = vld [vmem:[#allocation5 + $0xb8] sm:$0xff]
    %v119 = vld [vmem:[#allocation5 + $0xc0] sm:$0xff]
    %v120 = vld [vmem:[#allocation5 + $0xc8] sm:$0xff]
    %v121 = vld [vmem:[#allocation5 + $0xd0] sm:$0xff]
    %v122 = vld [vmem:[#allocation5 + $0xd8] sm:$0xff]
    %v123 = vld [vmem:[#allocation5 + $0xe0] sm:$0xff]
    %v124 = vld [vmem:[#allocation5 + $0xe8] sm:$0xff]
    %v125 = vld [vmem:[#allocation5 + $0xf0] sm:$0xff]
    %v126 = vld [vmem:[#allocation5 + $0xf8] sm:$0xff]
    %vm127 = vcmask 130048
    %v129 = vsel %vm127, %v95, 0
    %v132 = vsel %vm127, %v96, 0
    %v135 = vsel %vm127, %v97, 0
    %v138 = vsel %vm127, %v98, 0
    %v141 = vsel %vm127, %v99, 0
    %v144 = vsel %vm127, %v100, 0
    %v147 = vsel %vm127, %v101, 0
    %v150 = vsel %vm127, %v102, 0
    %v153 = vsel %vm127, %v103, 0
    %v156 = vsel %vm127, %v104, 0
    %v159 = vsel %vm127, %v105, 0
    %v162 = vsel %vm127, %v106, 0
    %v165 = vsel %vm127, %v107, 0
    %v168 = vsel %vm127, %v108, 0
    %v171 = vsel %vm127, %v109, 0
    %v174 = vsel %vm127, %v110, 0
    %v177 = vsel %vm127, %v111, 0
    %v180 = vsel %vm127, %v112, 0
    %v183 = vsel %vm127, %v113, 0
    %v186 = vsel %vm127, %v114, 0
    %v189 = vsel %vm127, %v115, 0
    %v192 = vsel %vm127, %v116, 0
    %v195 = vsel %vm127, %v117, 0
    %v198 = vsel %vm127, %v118, 0
    %v201 = vsel %vm127, %v119, 0
    %v204 = vsel %vm127, %v120, 0
    %v207 = vsel %vm127, %v121, 0
    %v210 = vsel %vm127, %v122, 0
    %v213 = vsel %vm127, %v123, 0
    %v216 = vsel %vm127, %v124, 0
    %v219 = vsel %vm127, %v125, 0
    %v222 = vsel %vm127, %v126, 0
    %224 = vmatpush.msra.mxu0 0.0
    %225 = vmatpush.msra.mxu0 0.0
    %226 = vmatpush.msra.mxu0 0.0
    %227 = vmatpush.msra.mxu0 0.0
    %228 = vmatpush.msra.mxu0 0.0
    %229 = vmatpush.msra.mxu0 0.0
    %230 = vmatpush.msra.mxu0 0.0
    %231 = vmatpush.msra.mxu0 0.0
    %232 = vmatpush.msra.mxu0 0.0
    %233 = vmatpush.msra.mxu0 0.0
    %234 = vmatpush.msra.mxu0 0.0
    %235 = vmatpush.msra.mxu0 0.0
    %236 = vmatpush.msra.mxu0 0.0
    %237 = vmatpush.msra.mxu0 0.0
    %238 = vmatpush.msra.mxu0 %v88
    %239 = vmatpush.msra.mxu0 %v87
    %240 = vmatmul.f32.gmra.mxu0 %v129
    %v241 = vpop.f32.mrf.mxu0
    %v242 = vadd.f32 0.0, %v241
    %243 = vmatmul.f32.gmra.mxu0 %v132
    %v244 = vpop.f32.mrf.mxu0
    %v245 = vadd.f32 0.0, %v244
    %246 = vmatmul.f32.gmra.mxu0 %v135
    %v247 = vpop.f32.mrf.mxu0
    %v248 = vadd.f32 0.0, %v247
    %249 = vmatmul.f32.gmra.mxu0 %v138
    %v250 = vpop.f32.mrf.mxu0
    %v251 = vadd.f32 0.0, %v250
    %252 = vmatmul.f32.gmra.mxu0 %v141
    %v253 = vpop.f32.mrf.mxu0
    %v254 = vadd.f32 0.0, %v253
    %255 = vmatmul.f32.gmra.mxu0 %v144
    %v256 = vpop.f32.mrf.mxu0
    %v257 = vadd.f32 0.0, %v256
    %258 = vmatmul.f32.gmra.mxu0 %v147
    %v259 = vpop.f32.mrf.mxu0
    %v260 = vadd.f32 0.0, %v259
    %261 = vmatmul.f32.gmra.mxu0 %v150
    %v262 = vpop.f32.mrf.mxu0
    %v263 = vadd.f32 0.0, %v262
    %264 = vmatmul.f32.gmra.mxu0 %v153
    %v265 = vpop.f32.mrf.mxu0
    %v266 = vadd.f32 0.0, %v265
    %267 = vmatmul.f32.gmra.mxu0 %v156
    %v268 = vpop.f32.mrf.mxu0
    %v269 = vadd.f32 0.0, %v268
    %270 = vmatmul.f32.gmra.mxu0 %v159
    %v271 = vpop.f32.mrf.mxu0
    %v272 = vadd.f32 0.0, %v271
    %273 = vmatmul.f32.gmra.mxu0 %v162
    %v274 = vpop.f32.mrf.mxu0
    %v275 = vadd.f32 0.0, %v274
    %276 = vmatmul.f32.gmra.mxu0 %v165
    %v277 = vpop.f32.mrf.mxu0
    %v278 = vadd.f32 0.0, %v277
    %279 = vmatmul.f32.gmra.mxu0 %v168
    %v280 = vpop.f32.mrf.mxu0
    %v281 = vadd.f32 0.0, %v280
    %282 = vmatmul.f32.gmra.mxu0 %v171
    %v283 = vpop.f32.mrf.mxu0
    %v284 = vadd.f32 0.0, %v283
    %285 = vmatmul.f32.gmra.mxu0 %v174
    %v286 = vpop.f32.mrf.mxu0
    %v287 = vadd.f32 0.0, %v286
    %288 = vmatmul.f32.gmra.mxu0 %v177
    %v289 = vpop.f32.mrf.mxu0
    %v290 = vadd.f32 0.0, %v289
    %291 = vmatmul.f32.gmra.mxu0 %v180
    %v292 = vpop.f32.mrf.mxu0
    %v293 = vadd.f32 0.0, %v292
    %294 = vmatmul.f32.gmra.mxu0 %v183
    %v295 = vpop.f32.mrf.mxu0
    %v296 = vadd.f32 0.0, %v295
    %297 = vmatmul.f32.gmra.mxu0 %v186
    %v298 = vpop.f32.mrf.mxu0
    %v299 = vadd.f32 0.0, %v298
    %300 = vmatmul.f32.gmra.mxu0 %v189
    %v301 = vpop.f32.mrf.mxu0
    %v302 = vadd.f32 0.0, %v301
    %303 = vmatmul.f32.gmra.mxu0 %v192
    %v304 = vpop.f32.mrf.mxu0
    %v305 = vadd.f32 0.0, %v304
    %306 = vmatmul.f32.gmra.mxu0 %v195
    %v307 = vpop.f32.mrf.mxu0
    %v308 = vadd.f32 0.0, %v307
    %309 = vmatmul.f32.gmra.mxu0 %v198
    %v310 = vpop.f32.mrf.mxu0
    %v311 = vadd.f32 0.0, %v310
    %312 = vmatmul.f32.gmra.mxu0 %v201
    %v313 = vpop.f32.mrf.mxu0
    %v314 = vadd.f32 0.0, %v313
    %315 = vmatmul.f32.gmra.mxu0 %v204
    %v316 = vpop.f32.mrf.mxu0
    %v317 = vadd.f32 0.0, %v316
    %318 = vmatmul.f32.gmra.mxu0 %v207
    %v319 = vpop.f32.mrf.mxu0
    %v320 = vadd.f32 0.0, %v319
    %321 = vmatmul.f32.gmra.mxu0 %v210
    %v322 = vpop.f32.mrf.mxu0
    %v323 = vadd.f32 0.0, %v322
    %324 = vmatmul.f32.gmra.mxu0 %v213
    %v325 = vpop.f32.mrf.mxu0
    %v326 = vadd.f32 0.0, %v325
    %327 = vmatmul.f32.gmra.mxu0 %v216
    %v328 = vpop.f32.mrf.mxu0
    %v329 = vadd.f32 0.0, %v328
    %330 = vmatmul.f32.gmra.mxu0 %v219
    %v331 = vpop.f32.mrf.mxu0
    %v332 = vadd.f32 0.0, %v331
    %333 = vmatmul.f32.gmra.mxu0 %v222
    %v334 = vpop.f32.mrf.mxu0
    %v335 = vadd.f32 0.0, %v334
    %336 = vdwg.mxu0
    %337 = vst [vmem:[#allocation2] sm:$0xff] 0.0
    %338 = vst [vmem:[#allocation2 + $0x8] sm:$0xff] 0.0
    %339 = vst [vmem:[#allocation2 + $0x10] sm:$0xff] 0.0
    %340 = vst [vmem:[#allocation2 + $0x18] sm:$0xff] 0.0
    %341 = vst [vmem:[#allocation2 + $0x20] sm:$0xff] 0.0
    %342 = vst [vmem:[#allocation2 + $0x28] sm:$0xff] 0.0
    %343 = vst [vmem:[#allocation2 + $0x30] sm:$0xff] 0.0
    %344 = vst [vmem:[#allocation2 + $0x38] sm:$0xff] 0.0
    %345 = vst [vmem:[#allocation2 + $0x40] sm:$0xff] 0.0
    %346 = vst [vmem:[#allocation2 + $0x48] sm:$0xff] 0.0
    %347 = vst [vmem:[#allocation2 + $0x50] sm:$0xff] 0.0
    %348 = vst [vmem:[#allocation2 + $0x58] sm:$0xff] 0.0
    %349 = vst [vmem:[#allocation2 + $0x60] sm:$0xff] 0.0
    %350 = vst [vmem:[#allocation2 + $0x68] sm:$0xff] 0.0
    %351 = vst [vmem:[#allocation2 + $0x70] sm:$0xff] 0.0
    %352 = vst [vmem:[#allocation2 + $0x78] sm:$0xff] 0.0
    %353 = vst [vmem:[#allocation2 + $0x80] sm:$0xff] 0.0
    %354 = vst [vmem:[#allocation2 + $0x88] sm:$0xff] 0.0
    %355 = vst [vmem:[#allocation2 + $0x90] sm:$0xff] 0.0
    %356 = vst [vmem:[#allocation2 + $0x98] sm:$0xff] 0.0
    %357 = vst [vmem:[#allocation2 + $0xa0] sm:$0xff] 0.0
    %358 = vst [vmem:[#allocation2 + $0xa8] sm:$0xff] 0.0
    %359 = vst [vmem:[#allocation2 + $0xb0] sm:$0xff] 0.0
    %360 = vst [vmem:[#allocation2 + $0xb8] sm:$0xff] 0.0
    %361 = vst [vmem:[#allocation2 + $0xc0] sm:$0xff] 0.0
    %362 = vst [vmem:[#allocation2 + $0xc8] sm:$0xff] 0.0
    %363 = vst [vmem:[#allocation2 + $0xd0] sm:$0xff] 0.0
    %364 = vst [vmem:[#allocation2 + $0xd8] sm:$0xff] 0.0
    %365 = vst [vmem:[#allocation2 + $0xe0] sm:$0xff] 0.0
    %366 = vst [vmem:[#allocation2 + $0xe8] sm:$0xff] 0.0
    %367 = vst [vmem:[#allocation2 + $0xf0] sm:$0xff] 0.0
    %368 = vst [vmem:[#allocation2 + $0xf8] sm:$0xff] 0.0
    %369 = vst [vmem:[#allocation2 + $0x100] sm:$0xff] 0.0
    %370 = vst [vmem:[#allocation2 + $0x108] sm:$0xff] 0.0
    %371 = vst [vmem:[#allocation2 + $0x110] sm:$0xff] 0.0
    %372 = vst [vmem:[#allocation2 + $0x118] sm:$0xff] 0.0
    %373 = vst [vmem:[#allocation2 + $0x120] sm:$0xff] 0.0
    %374 = vst [vmem:[#allocation2 + $0x128] sm:$0xff] 0.0
    %375 = vst [vmem:[#allocation2 + $0x130] sm:$0xff] 0.0
    %376 = vst [vmem:[#allocation2 + $0x138] sm:$0xff] 0.0
    %377 = vst [vmem:[#allocation2 + $0x140] sm:$0xff] 0.0
    %378 = vst [vmem:[#allocation2 + $0x148] sm:$0xff] 0.0
    %379 = vst [vmem:[#allocation2 + $0x150] sm:$0xff] 0.0
    %380 = vst [vmem:[#allocation2 + $0x158] sm:$0xff] 0.0
    %381 = vst [vmem:[#allocation2 + $0x160] sm:$0xff] 0.0
    %382 = vst [vmem:[#allocation2 + $0x168] sm:$0xff] 0.0
    %383 = vst [vmem:[#allocation2 + $0x170] sm:$0xff] 0.0
    %384 = vst [vmem:[#allocation2 + $0x178] sm:$0xff] 0.0
    %385 = vst [vmem:[#allocation2 + $0x180] sm:$0xff] 0.0
    %386 = vst [vmem:[#allocation2 + $0x188] sm:$0xff] 0.0
    %387 = vst [vmem:[#allocation2 + $0x190] sm:$0xff] 0.0
    %388 = vst [vmem:[#allocation2 + $0x198] sm:$0xff] 0.0
    %389 = vst [vmem:[#allocation2 + $0x1a0] sm:$0xff] 0.0
    %390 = vst [vmem:[#allocation2 + $0x1a8] sm:$0xff] 0.0
    %391 = vst [vmem:[#allocation2 + $0x1b0] sm:$0xff] 0.0
    %392 = vst [vmem:[#allocation2 + $0x1b8] sm:$0xff] 0.0
    %393 = vst [vmem:[#allocation2 + $0x1c0] sm:$0xff] 0.0
    %394 = vst [vmem:[#allocation2 + $0x1c8] sm:$0xff] 0.0
    %395 = vst [vmem:[#allocation2 + $0x1d0] sm:$0xff] 0.0
    %396 = vst [vmem:[#allocation2 + $0x1d8] sm:$0xff] 0.0
    %397 = vst [vmem:[#allocation2 + $0x1e0] sm:$0xff] 0.0
    %398 = vst [vmem:[#allocation2 + $0x1e8] sm:$0xff] 0.0
    %399 = vst [vmem:[#allocation2 + $0x1f0] sm:$0xff] 0.0
    %400 = vst [vmem:[#allocation2 + $0x1f8] sm:$0xff] 0.0
    %v401 = vld [vmem:[#allocation8] sm:$0xff]
    %v402 = vld [vmem:[#allocation8 + $0x8] sm:$0xff]
    %403 = vst.msk [vmem:[#allocation2] sm:$0xff] %vm127, %v401
    %404 = vst.msk [vmem:[#allocation2 + $0x10] sm:$0xff] %vm127, %v402
    %s405 = scalar_lea.vmem [#allocation8], 16
    %v406 = vld [vmem:[%s405] sm:$0xff]
    %v407 = vld [vmem:[%s405 + $0x8] sm:$0xff]
    %410 = vrot.lane.b32.xlu0 %v406, 16
    %v411 = vpop.permute.xlu0 %410
    %412 = vrot.lane.b32.xlu0 %v407, 16
    %v413 = vpop.permute.xlu0 %412
    %vm416 = vcmask 261248
    %417 = vst.msk [vmem:[#allocation2 + $0x20] sm:$0xff] %vm416, %v411
    %418 = vst.msk [vmem:[#allocation2 + $0x30] sm:$0xff] %vm416, %v413
    %s419 = scalar_lea.vmem [#allocation8], 32
    %v420 = vld [vmem:[%s419] sm:$0xff]
    %v421 = vld [vmem:[%s419 + $0x8] sm:$0xff]
    %424 = vrot.lane.b32.xlu0 %v420, 32
    %v425 = vpop.permute.xlu0 %424
    %426 = vrot.lane.b32.xlu0 %v421, 32
    %v427 = vpop.permute.xlu0 %426
    %vm430 = vcmask 392448
    %431 = vst.msk [vmem:[#allocation2 + $0x40] sm:$0xff] %vm430, %v425
    %432 = vst.msk [vmem:[#allocation2 + $0x50] sm:$0xff] %vm430, %v427
    %s433 = scalar_lea.vmem [#allocation8], 48
    %v434 = vld [vmem:[%s433] sm:$0xff]
    %v435 = vld [vmem:[%s433 + $0x8] sm:$0xff]
    %438 = vrot.lane.b32.xlu0 %v434, 48
    %v439 = vpop.permute.xlu0 %438
    %440 = vrot.lane.b32.xlu0 %v435, 48
    %v441 = vpop.permute.xlu0 %440
    %vm444 = vcmask 523648
    %445 = vst.msk [vmem:[#allocation2 + $0x60] sm:$0xff] %vm444, %v439
    %446 = vst.msk [vmem:[#allocation2 + $0x70] sm:$0xff] %vm444, %v441
    %s447 = scalar_lea.vmem [#allocation8], 64
    %v448 = vld [vmem:[%s447] sm:$0xff]
    %v449 = vld [vmem:[%s447 + $0x8] sm:$0xff]
    %452 = vrot.lane.b32.xlu0 %v448, 64
    %v453 = vpop.permute.xlu0 %452
    %454 = vrot.lane.b32.xlu0 %v449, 64
    %v455 = vpop.permute.xlu0 %454
    %vm458 = vcmask 654848
    %459 = vst.msk [vmem:[#allocation2 + $0x80] sm:$0xff] %vm458, %v453
    %460 = vst.msk [vmem:[#allocation2 + $0x90] sm:$0xff] %vm458, %v455
    %s461 = scalar_lea.vmem [#allocation8], 80
    %v462 = vld [vmem:[%s461] sm:$0xff]
    %v463 = vld [vmem:[%s461 + $0x8] sm:$0xff]
    %466 = vrot.lane.b32.xlu0 %v462, 80
    %v467 = vpop.permute.xlu0 %466
    %468 = vrot.lane.b32.xlu0 %v463, 80
    %v469 = vpop.permute.xlu0 %468
    %vm472 = vcmask 786048
    %473 = vst.msk [vmem:[#allocation2 + $0xa0] sm:$0xff] %vm472, %v467
    %474 = vst.msk [vmem:[#allocation2 + $0xb0] sm:$0xff] %vm472, %v469
    %s475 = scalar_lea.vmem [#allocation8], 96
    %v476 = vld [vmem:[%s475] sm:$0xff]
    %v477 = vld [vmem:[%s475 + $0x8] sm:$0xff]
    %480 = vrot.lane.b32.xlu0 %v476, 96
    %v481 = vpop.permute.xlu0 %480
    %482 = vrot.lane.b32.xlu0 %v477, 96
    %v483 = vpop.permute.xlu0 %482
    %vm486 = vcmask 917248
    %487 = vst.msk [vmem:[#allocation2 + $0xc0] sm:$0xff] %vm486, %v481
    %488 = vst.msk [vmem:[#allocation2 + $0xd0] sm:$0xff] %vm486, %v483
    %s489 = scalar_lea.vmem [#allocation8], 112
    %v490 = vld [vmem:[%s489] sm:$0xff]
    %v491 = vld [vmem:[%s489 + $0x8] sm:$0xff]
    %494 = vrot.lane.b32.xlu0 %v490, 112
    %v495 = vpop.permute.xlu0 %494
    %496 = vrot.lane.b32.xlu0 %v491, 112
    %v497 = vpop.permute.xlu0 %496
    %vm500 = vcmask 1048448
    %501 = vst.msk [vmem:[#allocation2 + $0xe0] sm:$0xff] %vm500, %v495
    %502 = vst.msk [vmem:[#allocation2 + $0xf0] sm:$0xff] %vm500, %v497
    %s503 = scalar_lea.vmem [#allocation8], 128
    %v504 = vld [vmem:[%s503] sm:$0xff]
    %v505 = vld [vmem:[%s503 + $0x8] sm:$0xff]
    %506 = vst.msk [vmem:[#allocation2 + $0x108] sm:$0xff] %vm127, %v504
    %507 = vst.msk [vmem:[#allocation2 + $0x118] sm:$0xff] %vm127, %v505
    %s508 = scalar_lea.vmem [#allocation8], 144
    %v509 = vld [vmem:[%s508] sm:$0xff]
    %v510 = vld [vmem:[%s508 + $0x8] sm:$0xff]
    %513 = vrot.lane.b32.xlu0 %v509, 16
    %v514 = vpop.permute.xlu0 %513
    %515 = vrot.lane.b32.xlu0 %v510, 16
    %v516 = vpop.permute.xlu0 %515
    %519 = vst.msk [vmem:[#allocation2 + $0x128] sm:$0xff] %vm416, %v514
    %520 = vst.msk [vmem:[#allocation2 + $0x138] sm:$0xff] %vm416, %v516
    %s521 = scalar_lea.vmem [#allocation8], 160
    %v522 = vld [vmem:[%s521] sm:$0xff]
    %v523 = vld [vmem:[%s521 + $0x8] sm:$0xff]
    %526 = vrot.lane.b32.xlu0 %v522, 32
    %v527 = vpop.permute.xlu0 %526
    %528 = vrot.lane.b32.xlu0 %v523, 32
    %v529 = vpop.permute.xlu0 %528
    %532 = vst.msk [vmem:[#allocation2 + $0x148] sm:$0xff] %vm430, %v527
    %533 = vst.msk [vmem:[#allocation2 + $0x158] sm:$0xff] %vm430, %v529
    %s534 = scalar_lea.vmem [#allocation8], 176
    %v535 = vld [vmem:[%s534] sm:$0xff]
    %v536 = vld [vmem:[%s534 + $0x8] sm:$0xff]
    %539 = vrot.lane.b32.xlu0 %v535, 48
    %v540 = vpop.permute.xlu0 %539
    %541 = vrot.lane.b32.xlu0 %v536, 48
    %v542 = vpop.permute.xlu0 %541
    %545 = vst.msk [vmem:[#allocation2 + $0x168] sm:$0xff] %vm444, %v540
    %546 = vst.msk [vmem:[#allocation2 + $0x178] sm:$0xff] %vm444, %v542
    %s547 = scalar_lea.vmem [#allocation8], 192
    %v548 = vld [vmem:[%s547] sm:$0xff]
    %v549 = vld [vmem:[%s547 + $0x8] sm:$0xff]
    %552 = vrot.lane.b32.xlu0 %v548, 64
    %v553 = vpop.permute.xlu0 %552
    %554 = vrot.lane.b32.xlu0 %v549, 64
    %v555 = vpop.permute.xlu0 %554
    %558 = vst.msk [vmem:[#allocation2 + $0x188] sm:$0xff] %vm458, %v553
    %559 = vst.msk [vmem:[#allocation2 + $0x198] sm:$0xff] %vm458, %v555
    %s560 = scalar_lea.vmem [#allocation8], 208
    %v561 = vld [vmem:[%s560] sm:$0xff]
    %v562 = vld [vmem:[%s560 + $0x8] sm:$0xff]
    %565 = vrot.lane.b32.xlu0 %v561, 80
    %v566 = vpop.permute.xlu0 %565
    %567 = vrot.lane.b32.xlu0 %v562, 80
    %v568 = vpop.permute.xlu0 %567
    %571 = vst.msk [vmem:[#allocation2 + $0x1a8] sm:$0xff] %vm472, %v566
    %572 = vst.msk [vmem:[#allocation2 + $0x1b8] sm:$0xff] %vm472, %v568
    %s573 = scalar_lea.vmem [#allocation8], 224
    %v574 = vld [vmem:[%s573] sm:$0xff]
    %v575 = vld [vmem:[%s573 + $0x8] sm:$0xff]
    %578 = vrot.lane.b32.xlu0 %v574, 96
    %v579 = vpop.permute.xlu0 %578
    %580 = vrot.lane.b32.xlu0 %v575, 96
    %v581 = vpop.permute.xlu0 %580
    %584 = vst.msk [vmem:[#allocation2 + $0x1c8] sm:$0xff] %vm486, %v579
    %585 = vst.msk [vmem:[#allocation2 + $0x1d8] sm:$0xff] %vm486, %v581
    %s586 = scalar_lea.vmem [#allocation8], 240
    %v587 = vld [vmem:[%s586] sm:$0xff]
    %v588 = vld [vmem:[%s586 + $0x8] sm:$0xff]
    %591 = vrot.lane.b32.xlu0 %v587, 112
    %v592 = vpop.permute.xlu0 %591
    %593 = vrot.lane.b32.xlu0 %v588, 112
    %v594 = vpop.permute.xlu0 %593
    %597 = vst.msk [vmem:[#allocation2 + $0x1e8] sm:$0xff] %vm500, %v592
    %598 = vst.msk [vmem:[#allocation2 + $0x1f8] sm:$0xff] %vm500, %v594
    %v599 = vld [vmem:[#allocation2] sm:$0xff]
    %v600 = vld [vmem:[#allocation2 + $0x8] sm:$0xff]
    %v601 = vld [vmem:[#allocation2 + $0x10] sm:$0xff]
    %v602 = vld [vmem:[#allocation2 + $0x18] sm:$0xff]
    %v603 = vld [vmem:[#allocation2 + $0x20] sm:$0xff]
    %v604 = vld [vmem:[#allocation2 + $0x28] sm:$0xff]
    %v605 = vld [vmem:[#allocation2 + $0x30] sm:$0xff]
    %v606 = vld [vmem:[#allocation2 + $0x38] sm:$0xff]
    %v607 = vld [vmem:[#allocation2 + $0x40] sm:$0xff]
    %v608 = vld [vmem:[#allocation2 + $0x48] sm:$0xff]
    %v609 = vld [vmem:[#allocation2 + $0x50] sm:$0xff]
    %v610 = vld [vmem:[#allocation2 + $0x58] sm:$0xff]
    %v611 = vld [vmem:[#allocation2 + $0x60] sm:$0xff]
    %v612 = vld [vmem:[#allocation2 + $0x68] sm:$0xff]
    %v613 = vld [vmem:[#allocation2 + $0x70] sm:$0xff]
    %v614 = vld [vmem:[#allocation2 + $0x78] sm:$0xff]
    %v615 = vld [vmem:[#allocation2 + $0x80] sm:$0xff]
    %v616 = vld [vmem:[#allocation2 + $0x88] sm:$0xff]
    %v617 = vld [vmem:[#allocation2 + $0x90] sm:$0xff]
    %v618 = vld [vmem:[#allocation2 + $0x98] sm:$0xff]
    %v619 = vld [vmem:[#allocation2 + $0xa0] sm:$0xff]
    %v620 = vld [vmem:[#allocation2 + $0xa8] sm:$0xff]
    %v621 = vld [vmem:[#allocation2 + $0xb0] sm:$0xff]
    %v622 = vld [vmem:[#allocation2 + $0xb8] sm:$0xff]
    %v623 = vld [vmem:[#allocation2 + $0xc0] sm:$0xff]
    %v624 = vld [vmem:[#allocation2 + $0xc8] sm:$0xff]
    %v625 = vld [vmem:[#allocation2 + $0xd0] sm:$0xff]
    %v626 = vld [vmem:[#allocation2 + $0xd8] sm:$0xff]
    %v627 = vld [vmem:[#allocation2 + $0xe0] sm:$0xff]
    %v628 = vld [vmem:[#allocation2 + $0xe8] sm:$0xff]
    %v629 = vld [vmem:[#allocation2 + $0xf0] sm:$0xff]
    %v630 = vld [vmem:[#allocation2 + $0xf8] sm:$0xff]
    %v631 = vld [vmem:[#allocation2 + $0x100] sm:$0xff]
    %v632 = vld [vmem:[#allocation2 + $0x108] sm:$0xff]
    %v633 = vld [vmem:[#allocation2 + $0x110] sm:$0xff]
    %v634 = vld [vmem:[#allocation2 + $0x118] sm:$0xff]
    %v635 = vld [vmem:[#allocation2 + $0x120] sm:$0xff]
    %v636 = vld [vmem:[#allocation2 + $0x128] sm:$0xff]
    %v637 = vld [vmem:[#allocation2 + $0x130] sm:$0xff]
    %v638 = vld [vmem:[#allocation2 + $0x138] sm:$0xff]
    %v639 = vld [vmem:[#allocation2 + $0x140] sm:$0xff]
    %v640 = vld [vmem:[#allocation2 + $0x148] sm:$0xff]
    %v641 = vld [vmem:[#allocation2 + $0x150] sm:$0xff]
    %v642 = vld [vmem:[#allocation2 + $0x158] sm:$0xff]
    %v643 = vld [vmem:[#allocation2 + $0x160] sm:$0xff]
    %v644 = vld [vmem:[#allocation2 + $0x168] sm:$0xff]
    %v645 = vld [vmem:[#allocation2 + $0x170] sm:$0xff]
    %v646 = vld [vmem:[#allocation2 + $0x178] sm:$0xff]
    %v647 = vld [vmem:[#allocation2 + $0x180] sm:$0xff]
    %v648 = vld [vmem:[#allocation2 + $0x188] sm:$0xff]
    %v649 = vld [vmem:[#allocation2 + $0x190] sm:$0xff]
    %v650 = vld [vmem:[#allocation2 + $0x198] sm:$0xff]
    %v651 = vld [vmem:[#allocation2 + $0x1a0] sm:$0xff]
    %v652 = vld [vmem:[#allocation2 + $0x1a8] sm:$0xff]
    %v653 = vld [vmem:[#allocation2 + $0x1b0] sm:$0xff]
    %v654 = vld [vmem:[#allocation2 + $0x1b8] sm:$0xff]
    %v655 = vld [vmem:[#allocation2 + $0x1c0] sm:$0xff]
    %v656 = vld [vmem:[#allocation2 + $0x1c8] sm:$0xff]
    %v657 = vld [vmem:[#allocation2 + $0x1d0] sm:$0xff]
    %v658 = vld [vmem:[#allocation2 + $0x1d8] sm:$0xff]
    %v659 = vld [vmem:[#allocation2 + $0x1e0] sm:$0xff]
    %v660 = vld [vmem:[#allocation2 + $0x1e8] sm:$0xff]
    %v661 = vld [vmem:[#allocation2 + $0x1f0] sm:$0xff]
    %v662 = vld [vmem:[#allocation2 + $0x1f8] sm:$0xff]
    %v664 = vperm.slane %v89, 0
    %666 = vmatpush.msra.mxu0 %v287
    %667 = vmatpush.msra.mxu0 %v284
    %668 = vmatpush.msra.mxu0 %v281
    %669 = vmatpush.msra.mxu0 %v278
    %670 = vmatpush.msra.mxu0 %v275
    %671 = vmatpush.msra.mxu0 %v272
    %672 = vmatpush.msra.mxu0 %v269
    %673 = vmatpush.msra.mxu0 %v266
    %674 = vmatpush.msra.mxu0 %v263
    %675 = vmatpush.msra.mxu0 %v260
    %676 = vmatpush.msra.mxu0 %v257
    %677 = vmatpush.msra.mxu0 %v254
    %678 = vmatpush.msra.mxu0 %v251
    %679 = vmatpush.msra.mxu0 %v248
    %680 = vmatpush.msra.mxu0 %v245
    %681 = vmatpush.msra.mxu0 %v242
    %682 = vmatmul.f32.gmra.mxu0 %v599
    %v683 = vpop.f32.mrf.mxu0
    %v684 = vadd.f32 %v664, %v683
    %685 = vmatmul.f32.gmra.mxu0 %v601
    %v686 = vpop.f32.mrf.mxu0
    %v687 = vadd.f32 %v664, %v686
    %688 = vmatmul.f32.gmra.mxu0 %v603
    %v689 = vpop.f32.mrf.mxu0
    %v690 = vadd.f32 %v664, %v689
    %691 = vmatmul.f32.gmra.mxu0 %v605
    %v692 = vpop.f32.mrf.mxu0
    %v693 = vadd.f32 %v664, %v692
    %694 = vmatmul.f32.gmra.mxu0 %v607
    %v695 = vpop.f32.mrf.mxu0
    %v696 = vadd.f32 %v664, %v695
    %697 = vmatmul.f32.gmra.mxu0 %v609
    %v698 = vpop.f32.mrf.mxu0
    %v699 = vadd.f32 %v664, %v698
    %700 = vmatmul.f32.gmra.mxu0 %v611
    %v701 = vpop.f32.mrf.mxu0
    %v702 = vadd.f32 %v664, %v701
    %703 = vmatmul.f32.gmra.mxu0 %v613
    %v704 = vpop.f32.mrf.mxu0
    %v705 = vadd.f32 %v664, %v704
    %706 = vmatmul.f32.gmra.mxu0 %v615
    %v707 = vpop.f32.mrf.mxu0
    %v708 = vadd.f32 %v664, %v707
    %709 = vmatmul.f32.gmra.mxu0 %v617
    %v710 = vpop.f32.mrf.mxu0
    %v711 = vadd.f32 %v664, %v710
    %712 = vmatmul.f32.gmra.mxu0 %v619
    %v713 = vpop.f32.mrf.mxu0
    %v714 = vadd.f32 %v664, %v713
    %715 = vmatmul.f32.gmra.mxu0 %v621
    %v716 = vpop.f32.mrf.mxu0
    %v717 = vadd.f32 %v664, %v716
    %718 = vmatmul.f32.gmra.mxu0 %v623
    %v719 = vpop.f32.mrf.mxu0
    %v720 = vadd.f32 %v664, %v719
    %721 = vmatmul.f32.gmra.mxu0 %v625
    %v722 = vpop.f32.mrf.mxu0
    %v723 = vadd.f32 %v664, %v722
    %724 = vmatmul.f32.gmra.mxu0 %v627
    %v725 = vpop.f32.mrf.mxu0
    %v726 = vadd.f32 %v664, %v725
    %727 = vmatmul.f32.gmra.mxu0 %v629
    %v728 = vpop.f32.mrf.mxu0
    %v729 = vadd.f32 %v664, %v728
    %730 = vmatmul.f32.gmra.mxu0 %v631
    %v731 = vpop.f32.mrf.mxu0
    %v732 = vadd.f32 %v664, %v731
    %733 = vmatmul.f32.gmra.mxu0 %v633
    %v734 = vpop.f32.mrf.mxu0
    %v735 = vadd.f32 %v664, %v734
    %736 = vmatmul.f32.gmra.mxu0 %v635
    %v737 = vpop.f32.mrf.mxu0
    %v738 = vadd.f32 %v664, %v737
    %739 = vmatmul.f32.gmra.mxu0 %v637
    %v740 = vpop.f32.mrf.mxu0
    %v741 = vadd.f32 %v664, %v740
    %742 = vmatmul.f32.gmra.mxu0 %v639
    %v743 = vpop.f32.mrf.mxu0
    %v744 = vadd.f32 %v664, %v743
    %745 = vmatmul.f32.gmra.mxu0 %v641
    %v746 = vpop.f32.mrf.mxu0
    %v747 = vadd.f32 %v664, %v746
    %748 = vmatmul.f32.gmra.mxu0 %v643
    %v749 = vpop.f32.mrf.mxu0
    %v750 = vadd.f32 %v664, %v749
    %751 = vmatmul.f32.gmra.mxu0 %v645
    %v752 = vpop.f32.mrf.mxu0
    %v753 = vadd.f32 %v664, %v752
    %754 = vmatmul.f32.gmra.mxu0 %v647
    %v755 = vpop.f32.mrf.mxu0
    %v756 = vadd.f32 %v664, %v755
    %757 = vmatmul.f32.gmra.mxu0 %v649
    %v758 = vpop.f32.mrf.mxu0
    %v759 = vadd.f32 %v664, %v758
    %760 = vmatmul.f32.gmra.mxu0 %v651
    %v761 = vpop.f32.mrf.mxu0
    %v762 = vadd.f32 %v664, %v761
    %763 = vmatmul.f32.gmra.mxu0 %v653
    %v764 = vpop.f32.mrf.mxu0
    %v765 = vadd.f32 %v664, %v764
    %766 = vmatmul.f32.gmra.mxu0 %v655
    %v767 = vpop.f32.mrf.mxu0
    %v768 = vadd.f32 %v664, %v767
    %769 = vmatmul.f32.gmra.mxu0 %v657
    %v770 = vpop.f32.mrf.mxu0
    %v771 = vadd.f32 %v664, %v770
    %772 = vmatmul.f32.gmra.mxu0 %v659
    %v773 = vpop.f32.mrf.mxu0
    %v774 = vadd.f32 %v664, %v773
    %775 = vmatmul.f32.gmra.mxu0 %v661
    %v776 = vpop.f32.mrf.mxu0
    %v777 = vadd.f32 %v664, %v776
    %778 = vdwg.mxu0
    %779 = vmatpush.msra.mxu0 %v335
    %780 = vmatpush.msra.mxu0 %v332
    %781 = vmatpush.msra.mxu0 %v329
    %782 = vmatpush.msra.mxu0 %v326
    %783 = vmatpush.msra.mxu0 %v323
    %784 = vmatpush.msra.mxu0 %v320
    %785 = vmatpush.msra.mxu0 %v317
    %786 = vmatpush.msra.mxu0 %v314
    %787 = vmatpush.msra.mxu0 %v311
    %788 = vmatpush.msra.mxu0 %v308
    %789 = vmatpush.msra.mxu0 %v305
    %790 = vmatpush.msra.mxu0 %v302
    %791 = vmatpush.msra.mxu0 %v299
    %792 = vmatpush.msra.mxu0 %v296
    %793 = vmatpush.msra.mxu0 %v293
    %794 = vmatpush.msra.mxu0 %v290
    %795 = vmatmul.f32.gmra.mxu0 %v600
    %v796 = vpop.f32.mrf.mxu0
    %v797 = vadd.f32 %v684, %v796
    %798 = vmatmul.f32.gmra.mxu0 %v602
    %v799 = vpop.f32.mrf.mxu0
    %v800 = vadd.f32 %v687, %v799
    %801 = vmatmul.f32.gmra.mxu0 %v604
    %v802 = vpop.f32.mrf.mxu0
    %v803 = vadd.f32 %v690, %v802
    %804 = vmatmul.f32.gmra.mxu0 %v606
    %v805 = vpop.f32.mrf.mxu0
    %v806 = vadd.f32 %v693, %v805
    %807 = vmatmul.f32.gmra.mxu0 %v608
    %v808 = vpop.f32.mrf.mxu0
    %v809 = vadd.f32 %v696, %v808
    %810 = vmatmul.f32.gmra.mxu0 %v610
    %v811 = vpop.f32.mrf.mxu0
    %v812 = vadd.f32 %v699, %v811
    %813 = vmatmul.f32.gmra.mxu0 %v612
    %v814 = vpop.f32.mrf.mxu0
    %v815 = vadd.f32 %v702, %v814
    %816 = vmatmul.f32.gmra.mxu0 %v614
    %v817 = vpop.f32.mrf.mxu0
    %v818 = vadd.f32 %v705, %v817
    %819 = vmatmul.f32.gmra.mxu0 %v616
    %v820 = vpop.f32.mrf.mxu0
    %v821 = vadd.f32 %v708, %v820
    %822 = vmatmul.f32.gmra.mxu0 %v618
    %v823 = vpop.f32.mrf.mxu0
    %v824 = vadd.f32 %v711, %v823
    %825 = vmatmul.f32.gmra.mxu0 %v620
    %v826 = vpop.f32.mrf.mxu0
    %v827 = vadd.f32 %v714, %v826
    %828 = vmatmul.f32.gmra.mxu0 %v622
    %v829 = vpop.f32.mrf.mxu0
    %v830 = vadd.f32 %v717, %v829
    %831 = vmatmul.f32.gmra.mxu0 %v624
    %v832 = vpop.f32.mrf.mxu0
    %v833 = vadd.f32 %v720, %v832
    %834 = vmatmul.f32.gmra.mxu0 %v626
    %v835 = vpop.f32.mrf.mxu0
    %v836 = vadd.f32 %v723, %v835
    %837 = vmatmul.f32.gmra.mxu0 %v628
    %v838 = vpop.f32.mrf.mxu0
    %v839 = vadd.f32 %v726, %v838
    %840 = vmatmul.f32.gmra.mxu0 %v630
    %v841 = vpop.f32.mrf.mxu0
    %v842 = vadd.f32 %v729, %v841
    %843 = vmatmul.f32.gmra.mxu0 %v632
    %v844 = vpop.f32.mrf.mxu0
    %v845 = vadd.f32 %v732, %v844
    %846 = vmatmul.f32.gmra.mxu0 %v634
    %v847 = vpop.f32.mrf.mxu0
    %v848 = vadd.f32 %v735, %v847
    %849 = vmatmul.f32.gmra.mxu0 %v636
    %v850 = vpop.f32.mrf.mxu0
    %v851 = vadd.f32 %v738, %v850
    %852 = vmatmul.f32.gmra.mxu0 %v638
    %v853 = vpop.f32.mrf.mxu0
    %v854 = vadd.f32 %v741, %v853
    %855 = vmatmul.f32.gmra.mxu0 %v640
    %v856 = vpop.f32.mrf.mxu0
    %v857 = vadd.f32 %v744, %v856
    %858 = vmatmul.f32.gmra.mxu0 %v642
    %v859 = vpop.f32.mrf.mxu0
    %v860 = vadd.f32 %v747, %v859
    %861 = vmatmul.f32.gmra.mxu0 %v644
    %v862 = vpop.f32.mrf.mxu0
    %v863 = vadd.f32 %v750, %v862
    %864 = vmatmul.f32.gmra.mxu0 %v646
    %v865 = vpop.f32.mrf.mxu0
    %v866 = vadd.f32 %v753, %v865
    %867 = vmatmul.f32.gmra.mxu0 %v648
    %v868 = vpop.f32.mrf.mxu0
    %v869 = vadd.f32 %v756, %v868
    %870 = vmatmul.f32.gmra.mxu0 %v650
    %v871 = vpop.f32.mrf.mxu0
    %v872 = vadd.f32 %v759, %v871
    %873 = vmatmul.f32.gmra.mxu0 %v652
    %v874 = vpop.f32.mrf.mxu0
    %v875 = vadd.f32 %v762, %v874
    %876 = vmatmul.f32.gmra.mxu0 %v654
    %v877 = vpop.f32.mrf.mxu0
    %v878 = vadd.f32 %v765, %v877
    %879 = vmatmul.f32.gmra.mxu0 %v656
    %v880 = vpop.f32.mrf.mxu0
    %v881 = vadd.f32 %v768, %v880
    %882 = vmatmul.f32.gmra.mxu0 %v658
    %v883 = vpop.f32.mrf.mxu0
    %v884 = vadd.f32 %v771, %v883
    %885 = vmatmul.f32.gmra.mxu0 %v660
    %v886 = vpop.f32.mrf.mxu0
    %v887 = vadd.f32 %v774, %v886
    %888 = vmatmul.f32.gmra.mxu0 %v662
    %v889 = vpop.f32.mrf.mxu0
    %v890 = vadd.f32 %v777, %v889
    %891 = vdwg.mxu0
    %v892 = vmax.f32 %v797, 0.0
    %v893 = vmax.f32 %v800, 0.0
    %v894 = vmax.f32 %v803, 0.0
    %v895 = vmax.f32 %v806, 0.0
    %v896 = vmax.f32 %v809, 0.0
    %v897 = vmax.f32 %v812, 0.0
    %v898 = vmax.f32 %v815, 0.0
    %v899 = vmax.f32 %v818, 0.0
    %v900 = vmax.f32 %v821, 0.0
    %v901 = vmax.f32 %v824, 0.0
    %v902 = vmax.f32 %v827, 0.0
    %v903 = vmax.f32 %v830, 0.0
    %v904 = vmax.f32 %v833, 0.0
    %v905 = vmax.f32 %v836, 0.0
    %v906 = vmax.f32 %v839, 0.0
    %v907 = vmax.f32 %v842, 0.0
    %v908 = vmax.f32 %v845, 0.0
    %v909 = vmax.f32 %v848, 0.0
    %v910 = vmax.f32 %v851, 0.0
    %v911 = vmax.f32 %v854, 0.0
    %v912 = vmax.f32 %v857, 0.0
    %v913 = vmax.f32 %v860, 0.0
    %v914 = vmax.f32 %v863, 0.0
    %v915 = vmax.f32 %v866, 0.0
    %v916 = vmax.f32 %v869, 0.0
    %v917 = vmax.f32 %v872, 0.0
    %v918 = vmax.f32 %v875, 0.0
    %v919 = vmax.f32 %v878, 0.0
    %v920 = vmax.f32 %v881, 0.0
    %v921 = vmax.f32 %v884, 0.0
    %v922 = vmax.f32 %v887, 0.0
    %v923 = vmax.f32 %v890, 0.0
    %vm924 = vcmask 261120
    %v925 = vsel %vm924, %v892, -inf
    %926 = vmax.xlane.f32.xlu0 %v925
    %v927 = vpop.xlane.xlu0 %926
    %v928 = vsel %vm924, %v893, -inf
    %929 = vmax.xlane.f32.xlu0 %v928
    %v930 = vpop.xlane.xlu0 %929
    %v931 = vsel %vm924, %v894, -inf
    %932 = vmax.xlane.f32.xlu0 %v931
    %v933 = vpop.xlane.xlu0 %932
    %v934 = vsel %vm924, %v895, -inf
    %935 = vmax.xlane.f32.xlu0 %v934
    %v936 = vpop.xlane.xlu0 %935
    %v937 = vsel %vm924, %v896, -inf
    %938 = vmax.xlane.f32.xlu0 %v937
    %v939 = vpop.xlane.xlu0 %938
    %v940 = vsel %vm924, %v897, -inf
    %941 = vmax.xlane.f32.xlu0 %v940
    %v942 = vpop.xlane.xlu0 %941
    %v943 = vsel %vm924, %v898, -inf
    %944 = vmax.xlane.f32.xlu0 %v943
    %v945 = vpop.xlane.xlu0 %944
    %v946 = vsel %vm924, %v899, -inf
    %947 = vmax.xlane.f32.xlu0 %v946
    %v948 = vpop.xlane.xlu0 %947
    %v949 = vsel %vm924, %v900, -inf
    %950 = vmax.xlane.f32.xlu0 %v949
    %v951 = vpop.xlane.xlu0 %950
    %v952 = vsel %vm924, %v901, -inf
    %953 = vmax.xlane.f32.xlu0 %v952
    %v954 = vpop.xlane.xlu0 %953
    %v955 = vsel %vm924, %v902, -inf
    %956 = vmax.xlane.f32.xlu0 %v955
    %v957 = vpop.xlane.xlu0 %956
    %v958 = vsel %vm924, %v903, -inf
    %959 = vmax.xlane.f32.xlu0 %v958
    %v960 = vpop.xlane.xlu0 %959
    %v961 = vsel %vm924, %v904, -inf
    %962 = vmax.xlane.f32.xlu0 %v961
    %v963 = vpop.xlane.xlu0 %962
    %v964 = vsel %vm924, %v905, -inf
    %965 = vmax.xlane.f32.xlu0 %v964
    %v966 = vpop.xlane.xlu0 %965
    %v967 = vsel %vm924, %v906, -inf
    %968 = vmax.xlane.f32.xlu0 %v967
    %v969 = vpop.xlane.xlu0 %968
    %v970 = vsel %vm924, %v907, -inf
    %971 = vmax.xlane.f32.xlu0 %v970
    %v972 = vpop.xlane.xlu0 %971
    %v973 = vsel %vm924, %v908, -inf
    %974 = vmax.xlane.f32.xlu0 %v973
    %v975 = vpop.xlane.xlu0 %974
    %v976 = vsel %vm924, %v909, -inf
    %977 = vmax.xlane.f32.xlu0 %v976
    %v978 = vpop.xlane.xlu0 %977
    %v979 = vsel %vm924, %v910, -inf
    %980 = vmax.xlane.f32.xlu0 %v979
    %v981 = vpop.xlane.xlu0 %980
    %v982 = vsel %vm924, %v911, -inf
    %983 = vmax.xlane.f32.xlu0 %v982
    %v984 = vpop.xlane.xlu0 %983
    %v985 = vsel %vm924, %v912, -inf
    %986 = vmax.xlane.f32.xlu0 %v985
    %v987 = vpop.xlane.xlu0 %986
    %v988 = vsel %vm924, %v913, -inf
    %989 = vmax.xlane.f32.xlu0 %v988
    %v990 = vpop.xlane.xlu0 %989
    %v991 = vsel %vm924, %v914, -inf
    %992 = vmax.xlane.f32.xlu0 %v991
    %v993 = vpop.xlane.xlu0 %992
    %v994 = vsel %vm924, %v915, -inf
    %995 = vmax.xlane.f32.xlu0 %v994
    %v996 = vpop.xlane.xlu0 %995
    %v997 = vsel %vm924, %v916, -inf
    %998 = vmax.xlane.f32.xlu0 %v997
    %v999 = vpop.xlane.xlu0 %998
    %v1000 = vsel %vm924, %v917, -inf
    %1001 = vmax.xlane.f32.xlu0 %v1000
    %v1002 = vpop.xlane.xlu0 %1001
    %v1003 = vsel %vm924, %v918, -inf
    %1004 = vmax.xlane.f32.xlu0 %v1003
    %v1005 = vpop.xlane.xlu0 %1004
    %v1006 = vsel %vm924, %v919, -inf
    %1007 = vmax.xlane.f32.xlu0 %v1006
    %v1008 = vpop.xlane.xlu0 %1007
    %v1009 = vsel %vm924, %v920, -inf
    %1010 = vmax.xlane.f32.xlu0 %v1009
    %v1011 = vpop.xlane.xlu0 %1010
    %v1012 = vsel %vm924, %v921, -inf
    %1013 = vmax.xlane.f32.xlu0 %v1012
    %v1014 = vpop.xlane.xlu0 %1013
    %v1015 = vsel %vm924, %v922, -inf
    %1016 = vmax.xlane.f32.xlu0 %v1015
    %v1017 = vpop.xlane.xlu0 %1016
    %v1018 = vsel %vm924, %v923, -inf
    %1019 = vmax.xlane.f32.xlu0 %v1018
    %v1020 = vpop.xlane.xlu0 %1019
    %v1021 = vsub.f32 %v892, %v927
    %v1022 = vsub.f32 %v893, %v930
    %v1023 = vsub.f32 %v894, %v933
    %v1024 = vsub.f32 %v895, %v936
    %v1025 = vsub.f32 %v896, %v939
    %v1026 = vsub.f32 %v897, %v942
    %v1027 = vsub.f32 %v898, %v945
    %v1028 = vsub.f32 %v899, %v948
    %v1029 = vsub.f32 %v900, %v951
    %v1030 = vsub.f32 %v901, %v954
    %v1031 = vsub.f32 %v902, %v957
    %v1032 = vsub.f32 %v903, %v960
    %v1033 = vsub.f32 %v904, %v963
    %v1034 = vsub.f32 %v905, %v966
    %v1035 = vsub.f32 %v906, %v969
    %v1036 = vsub.f32 %v907, %v972
    %v1037 = vsub.f32 %v908, %v975
    %v1038 = vsub.f32 %v909, %v978
    %v1039 = vsub.f32 %v910, %v981
    %v1040 = vsub.f32 %v911, %v984
    %v1041 = vsub.f32 %v912, %v987
    %v1042 = vsub.f32 %v913, %v990
    %v1043 = vsub.f32 %v914, %v993
    %v1044 = vsub.f32 %v915, %v996
    %v1045 = vsub.f32 %v916, %v999
    %v1046 = vsub.f32 %v917, %v1002
    %v1047 = vsub.f32 %v918, %v1005
    %v1048 = vsub.f32 %v919, %v1008
    %v1049 = vsub.f32 %v920, %v1011
    %v1050 = vsub.f32 %v921, %v1014
    %v1051 = vsub.f32 %v922, %v1017
    %v1052 = vsub.f32 %v923, %v1020
    %v1053 = vmul.f32 %v1021, 1.442695
    %v1054 = vpow.pop %v1053
    %v1055 = vmul.f32 %v1022, 1.442695
    %v1056 = vpow.pop %v1055
    %v1057 = vmul.f32 %v1023, 1.442695
    %v1058 = vpow.pop %v1057
    %v1059 = vmul.f32 %v1024, 1.442695
    %v1060 = vpow.pop %v1059
    %v1061 = vmul.f32 %v1025, 1.442695
    %v1062 = vpow.pop %v1061
    %v1063 = vmul.f32 %v1026, 1.442695
    %v1064 = vpow.pop %v1063
    %v1065 = vmul.f32 %v1027, 1.442695
    %v1066 = vpow.pop %v1065
    %v1067 = vmul.f32 %v1028, 1.442695
    %v1068 = vpow.pop %v1067
    %v1069 = vmul.f32 %v1029, 1.442695
    %v1070 = vpow.pop %v1069
    %v1071 = vmul.f32 %v1030, 1.442695
    %v1072 = vpow.pop %v1071
    %v1073 = vmul.f32 %v1031, 1.442695
    %v1074 = vpow.pop %v1073
    %v1075 = vmul.f32 %v1032, 1.442695
    %v1076 = vpow.pop %v1075
    %v1077 = vmul.f32 %v1033, 1.442695
    %v1078 = vpow.pop %v1077
    %v1079 = vmul.f32 %v1034, 1.442695
    %v1080 = vpow.pop %v1079
    %v1081 = vmul.f32 %v1035, 1.442695
    %v1082 = vpow.pop %v1081
    %v1083 = vmul.f32 %v1036, 1.442695
    %v1084 = vpow.pop %v1083
    %v1085 = vmul.f32 %v1037, 1.442695
    %v1086 = vpow.pop %v1085
    %v1087 = vmul.f32 %v1038, 1.442695
    %v1088 = vpow.pop %v1087
    %v1089 = vmul.f32 %v1039, 1.442695
    %v1090 = vpow.pop %v1089
    %v1091 = vmul.f32 %v1040, 1.442695
    %v1092 = vpow.pop %v1091
    %v1093 = vmul.f32 %v1041, 1.442695
    %v1094 = vpow.pop %v1093
    %v1095 = vmul.f32 %v1042, 1.442695
    %v1096 = vpow.pop %v1095
    %v1097 = vmul.f32 %v1043, 1.442695
    %v1098 = vpow.pop %v1097
    %v1099 = vmul.f32 %v1044, 1.442695
    %v1100 = vpow.pop %v1099
    %v1101 = vmul.f32 %v1045, 1.442695
    %v1102 = vpow.pop %v1101
    %v1103 = vmul.f32 %v1046, 1.442695
    %v1104 = vpow.pop %v1103
    %v1105 = vmul.f32 %v1047, 1.442695
    %v1106 = vpow.pop %v1105
    %v1107 = vmul.f32 %v1048, 1.442695
    %v1108 = vpow.pop %v1107
    %v1109 = vmul.f32 %v1049, 1.442695
    %v1110 = vpow.pop %v1109
    %v1111 = vmul.f32 %v1050, 1.442695
    %v1112 = vpow.pop %v1111
    %v1113 = vmul.f32 %v1051, 1.442695
    %v1114 = vpow.pop %v1113
    %v1115 = vmul.f32 %v1052, 1.442695
    %v1116 = vpow.pop %v1115
    %v1117 = vsel %vm924, %v1054, 0.0
    %1118 = vadd.xlane.f32.xlu0 %v1117
    %v1119 = vpop.xlane.xlu0 %1118
    %v1120 = vsel %vm924, %v1056, 0.0
    %1121 = vadd.xlane.f32.xlu0 %v1120
    %v1122 = vpop.xlane.xlu0 %1121
    %v1123 = vsel %vm924, %v1058, 0.0
    %1124 = vadd.xlane.f32.xlu0 %v1123
    %v1125 = vpop.xlane.xlu0 %1124
    %v1126 = vsel %vm924, %v1060, 0.0
    %1127 = vadd.xlane.f32.xlu0 %v1126
    %v1128 = vpop.xlane.xlu0 %1127
    %v1129 = vsel %vm924, %v1062, 0.0
    %1130 = vadd.xlane.f32.xlu0 %v1129
    %v1131 = vpop.xlane.xlu0 %1130
    %v1132 = vsel %vm924, %v1064, 0.0
    %1133 = vadd.xlane.f32.xlu0 %v1132
    %v1134 = vpop.xlane.xlu0 %1133
    %v1135 = vsel %vm924, %v1066, 0.0
    %1136 = vadd.xlane.f32.xlu0 %v1135
    %v1137 = vpop.xlane.xlu0 %1136
    %v1138 = vsel %vm924, %v1068, 0.0
    %1139 = vadd.xlane.f32.xlu0 %v1138
    %v1140 = vpop.xlane.xlu0 %1139
    %v1141 = vsel %vm924, %v1070, 0.0
    %1142 = vadd.xlane.f32.xlu0 %v1141
    %v1143 = vpop.xlane.xlu0 %1142
    %v1144 = vsel %vm924, %v1072, 0.0
    %1145 = vadd.xlane.f32.xlu0 %v1144
    %v1146 = vpop.xlane.xlu0 %1145
    %v1147 = vsel %vm924, %v1074, 0.0
    %1148 = vadd.xlane.f32.xlu0 %v1147
    %v1149 = vpop.xlane.xlu0 %1148
    %v1150 = vsel %vm924, %v1076, 0.0
    %1151 = vadd.xlane.f32.xlu0 %v1150
    %v1152 = vpop.xlane.xlu0 %1151
    %v1153 = vsel %vm924, %v1078, 0.0
    %1154 = vadd.xlane.f32.xlu0 %v1153
    %v1155 = vpop.xlane.xlu0 %1154
    %v1156 = vsel %vm924, %v1080, 0.0
    %1157 = vadd.xlane.f32.xlu0 %v1156
    %v1158 = vpop.xlane.xlu0 %1157
    %v1159 = vsel %vm924, %v1082, 0.0
    %1160 = vadd.xlane.f32.xlu0 %v1159
    %v1161 = vpop.xlane.xlu0 %1160
    %v1162 = vsel %vm924, %v1084, 0.0
    %1163 = vadd.xlane.f32.xlu0 %v1162
    %v1164 = vpop.xlane.xlu0 %1163
    %v1165 = vsel %vm924, %v1086, 0.0
    %1166 = vadd.xlane.f32.xlu0 %v1165
    %v1167 = vpop.xlane.xlu0 %1166
    %v1168 = vsel %vm924, %v1088, 0.0
    %1169 = vadd.xlane.f32.xlu0 %v1168
    %v1170 = vpop.xlane.xlu0 %1169
    %v1171 = vsel %vm924, %v1090, 0.0
    %1172 = vadd.xlane.f32.xlu0 %v1171
    %v1173 = vpop.xlane.xlu0 %1172
    %v1174 = vsel %vm924, %v1092, 0.0
    %1175 = vadd.xlane.f32.xlu0 %v1174
    %v1176 = vpop.xlane.xlu0 %1175
    %v1177 = vsel %vm924, %v1094, 0.0
    %1178 = vadd.xlane.f32.xlu0 %v1177
    %v1179 = vpop.xlane.xlu0 %1178
    %v1180 = vsel %vm924, %v1096, 0.0
    %1181 = vadd.xlane.f32.xlu0 %v1180
    %v1182 = vpop.xlane.xlu0 %1181
    %v1183 = vsel %vm924, %v1098, 0.0
    %1184 = vadd.xlane.f32.xlu0 %v1183
    %v1185 = vpop.xlane.xlu0 %1184
    %v1186 = vsel %vm924, %v1100, 0.0
    %1187 = vadd.xlane.f32.xlu0 %v1186
    %v1188 = vpop.xlane.xlu0 %1187
    %v1189 = vsel %vm924, %v1102, 0.0
    %1190 = vadd.xlane.f32.xlu0 %v1189
    %v1191 = vpop.xlane.xlu0 %1190
    %v1192 = vsel %vm924, %v1104, 0.0
    %1193 = vadd.xlane.f32.xlu0 %v1192
    %v1194 = vpop.xlane.xlu0 %1193
    %v1195 = vsel %vm924, %v1106, 0.0
    %1196 = vadd.xlane.f32.xlu0 %v1195
    %v1197 = vpop.xlane.xlu0 %1196
    %v1198 = vsel %vm924, %v1108, 0.0
    %1199 = vadd.xlane.f32.xlu0 %v1198
    %v1200 = vpop.xlane.xlu0 %1199
    %v1201 = vsel %vm924, %v1110, 0.0
    %1202 = vadd.xlane.f32.xlu0 %v1201
    %v1203 = vpop.xlane.xlu0 %1202
    %v1204 = vsel %vm924, %v1112, 0.0
    %1205 = vadd.xlane.f32.xlu0 %v1204
    %v1206 = vpop.xlane.xlu0 %1205
    %v1207 = vsel %vm924, %v1114, 0.0
    %1208 = vadd.xlane.f32.xlu0 %v1207
    %v1209 = vpop.xlane.xlu0 %1208
    %v1210 = vsel %vm924, %v1116, 0.0
    %1211 = vadd.xlane.f32.xlu0 %v1210
    %v1212 = vpop.xlane.xlu0 %1211
    %v1213 = vlog2.pop %v1119
    %v1214 = vmul.f32 %v1213, 0.6931472
    %v1215 = vlog2.pop %v1122
    %v1216 = vmul.f32 %v1215, 0.6931472
    %v1217 = vlog2.pop %v1125
    %v1218 = vmul.f32 %v1217, 0.6931472
    %v1219 = vlog2.pop %v1128
    %v1220 = vmul.f32 %v1219, 0.6931472
    %v1221 = vlog2.pop %v1131
    %v1222 = vmul.f32 %v1221, 0.6931472
    %v1223 = vlog2.pop %v1134
    %v1224 = vmul.f32 %v1223, 0.6931472
    %v1225 = vlog2.pop %v1137
    %v1226 = vmul.f32 %v1225, 0.6931472
    %v1227 = vlog2.pop %v1140
    %v1228 = vmul.f32 %v1227, 0.6931472
    %v1229 = vlog2.pop %v1143
    %v1230 = vmul.f32 %v1229, 0.6931472
    %v1231 = vlog2.pop %v1146
    %v1232 = vmul.f32 %v1231, 0.6931472
    %v1233 = vlog2.pop %v1149
    %v1234 = vmul.f32 %v1233, 0.6931472
    %v1235 = vlog2.pop %v1152
    %v1236 = vmul.f32 %v1235, 0.6931472
    %v1237 = vlog2.pop %v1155
    %v1238 = vmul.f32 %v1237, 0.6931472
    %v1239 = vlog2.pop %v1158
    %v1240 = vmul.f32 %v1239, 0.6931472
    %v1241 = vlog2.pop %v1161
    %v1242 = vmul.f32 %v1241, 0.6931472
    %v1243 = vlog2.pop %v1164
    %v1244 = vmul.f32 %v1243, 0.6931472
    %v1245 = vlog2.pop %v1167
    %v1246 = vmul.f32 %v1245, 0.6931472
    %v1247 = vlog2.pop %v1170
    %v1248 = vmul.f32 %v1247, 0.6931472
    %v1249 = vlog2.pop %v1173
    %v1250 = vmul.f32 %v1249, 0.6931472
    %v1251 = vlog2.pop %v1176
    %v1252 = vmul.f32 %v1251, 0.6931472
    %v1253 = vlog2.pop %v1179
    %v1254 = vmul.f32 %v1253, 0.6931472
    %v1255 = vlog2.pop %v1182
    %v1256 = vmul.f32 %v1255, 0.6931472
    %v1257 = vlog2.pop %v1185
    %v1258 = vmul.f32 %v1257, 0.6931472
    %v1259 = vlog2.pop %v1188
    %v1260 = vmul.f32 %v1259, 0.6931472
    %v1261 = vlog2.pop %v1191
    %v1262 = vmul.f32 %v1261, 0.6931472
    %v1263 = vlog2.pop %v1194
    %v1264 = vmul.f32 %v1263, 0.6931472
    %v1265 = vlog2.pop %v1197
    %v1266 = vmul.f32 %v1265, 0.6931472
    %v1267 = vlog2.pop %v1200
    %v1268 = vmul.f32 %v1267, 0.6931472
    %v1269 = vlog2.pop %v1203
    %v1270 = vmul.f32 %v1269, 0.6931472
    %v1271 = vlog2.pop %v1206
    %v1272 = vmul.f32 %v1271, 0.6931472
    %v1273 = vlog2.pop %v1209
    %v1274 = vmul.f32 %v1273, 0.6931472
    %v1275 = vlog2.pop %v1212
    %v1276 = vmul.f32 %v1275, 0.6931472
    %v1277 = vsub.f32 %v1021, %v1214
    %v1278 = vsub.f32 %v1022, %v1216
    %v1279 = vsub.f32 %v1023, %v1218
    %v1280 = vsub.f32 %v1024, %v1220
    %v1281 = vsub.f32 %v1025, %v1222
    %v1282 = vsub.f32 %v1026, %v1224
    %v1283 = vsub.f32 %v1027, %v1226
    %v1284 = vsub.f32 %v1028, %v1228
    %v1285 = vsub.f32 %v1029, %v1230
    %v1286 = vsub.f32 %v1030, %v1232
    %v1287 = vsub.f32 %v1031, %v1234
    %v1288 = vsub.f32 %v1032, %v1236
    %v1289 = vsub.f32 %v1033, %v1238
    %v1290 = vsub.f32 %v1034, %v1240
    %v1291 = vsub.f32 %v1035, %v1242
    %v1292 = vsub.f32 %v1036, %v1244
    %v1293 = vsub.f32 %v1037, %v1246
    %v1294 = vsub.f32 %v1038, %v1248
    %v1295 = vsub.f32 %v1039, %v1250
    %v1296 = vsub.f32 %v1040, %v1252
    %v1297 = vsub.f32 %v1041, %v1254
    %v1298 = vsub.f32 %v1042, %v1256
    %v1299 = vsub.f32 %v1043, %v1258
    %v1300 = vsub.f32 %v1044, %v1260
    %v1301 = vsub.f32 %v1045, %v1262
    %v1302 = vsub.f32 %v1046, %v1264
    %v1303 = vsub.f32 %v1047, %v1266
    %v1304 = vsub.f32 %v1048, %v1268
    %v1305 = vsub.f32 %v1049, %v1270
    %v1306 = vsub.f32 %v1050, %v1272
    %v1307 = vsub.f32 %v1051, %v1274
    %v1308 = vsub.f32 %v1052, %v1276
    %1309 = vmatpush.msra.mxu0 %v1292
    %1310 = vmatpush.msra.mxu0 %v1291
    %1311 = vmatpush.msra.mxu0 %v1290
    %1312 = vmatpush.msra.mxu0 %v1289
    %1313 = vmatpush.msra.mxu0 %v1288
    %1314 = vmatpush.msra.mxu0 %v1287
    %1315 = vmatpush.msra.mxu0 %v1286
    %1316 = vmatpush.msra.mxu0 %v1285
    %1317 = vmatpush.msra.mxu0 %v1284
    %1318 = vmatpush.msra.mxu0 %v1283
    %1319 = vmatpush.msra.mxu0 %v1282
    %1320 = vmatpush.msra.mxu0 %v1281
    %1321 = vmatpush.msra.mxu0 %v1280
    %1322 = vmatpush.msra.mxu0 %v1279
    %1323 = vmatpush.msra.mxu0 %v1278
    %1324 = vmatpush.msra.mxu0 %v1277
    %1325 = vmatmul.f32.gmra.mxu0 %v599
    %v1326 = vpop.f32.mrf.mxu0
    %v1327 = vadd.f32 0.0, %v1326
    %1328 = vmatmul.f32.gmra.mxu0 %v601
    %v1329 = vpop.f32.mrf.mxu0
    %v1330 = vadd.f32 0.0, %v1329
    %1331 = vmatmul.f32.gmra.mxu0 %v603
    %v1332 = vpop.f32.mrf.mxu0
    %v1333 = vadd.f32 0.0, %v1332
    %1334 = vmatmul.f32.gmra.mxu0 %v605
    %v1335 = vpop.f32.mrf.mxu0
    %v1336 = vadd.f32 0.0, %v1335
    %1337 = vmatmul.f32.gmra.mxu0 %v607
    %v1338 = vpop.f32.mrf.mxu0
    %v1339 = vadd.f32 0.0, %v1338
    %1340 = vmatmul.f32.gmra.mxu0 %v609
    %v1341 = vpop.f32.mrf.mxu0
    %v1342 = vadd.f32 0.0, %v1341
    %1343 = vmatmul.f32.gmra.mxu0 %v611
    %v1344 = vpop.f32.mrf.mxu0
    %v1345 = vadd.f32 0.0, %v1344
    %1346 = vmatmul.f32.gmra.mxu0 %v613
    %v1347 = vpop.f32.mrf.mxu0
    %v1348 = vadd.f32 0.0, %v1347
    %1349 = vmatmul.f32.gmra.mxu0 %v615
    %v1350 = vpop.f32.mrf.mxu0
    %v1351 = vadd.f32 0.0, %v1350
    %1352 = vmatmul.f32.gmra.mxu0 %v617
    %v1353 = vpop.f32.mrf.mxu0
    %v1354 = vadd.f32 0.0, %v1353
    %1355 = vmatmul.f32.gmra.mxu0 %v619
    %v1356 = vpop.f32.mrf.mxu0
    %v1357 = vadd.f32 0.0, %v1356
    %1358 = vmatmul.f32.gmra.mxu0 %v621
    %v1359 = vpop.f32.mrf.mxu0
    %v1360 = vadd.f32 0.0, %v1359
    %1361 = vmatmul.f32.gmra.mxu0 %v623
    %v1362 = vpop.f32.mrf.mxu0
    %v1363 = vadd.f32 0.0, %v1362
    %1364 = vmatmul.f32.gmra.mxu0 %v625
    %v1365 = vpop.f32.mrf.mxu0
    %v1366 = vadd.f32 0.0, %v1365
    %1367 = vmatmul.f32.gmra.mxu0 %v627
    %v1368 = vpop.f32.mrf.mxu0
    %v1369 = vadd.f32 0.0, %v1368
    %1370 = vmatmul.f32.gmra.mxu0 %v629
    %v1371 = vpop.f32.mrf.mxu0
    %v1372 = vadd.f32 0.0, %v1371
    %1373 = vmatmul.f32.gmra.mxu0 %v631
    %v1374 = vpop.f32.mrf.mxu0
    %v1375 = vadd.f32 0.0, %v1374
    %1376 = vmatmul.f32.gmra.mxu0 %v633
    %v1377 = vpop.f32.mrf.mxu0
    %v1378 = vadd.f32 0.0, %v1377
    %1379 = vmatmul.f32.gmra.mxu0 %v635
    %v1380 = vpop.f32.mrf.mxu0
    %v1381 = vadd.f32 0.0, %v1380
    %1382 = vmatmul.f32.gmra.mxu0 %v637
    %v1383 = vpop.f32.mrf.mxu0
    %v1384 = vadd.f32 0.0, %v1383
    %1385 = vmatmul.f32.gmra.mxu0 %v639
    %v1386 = vpop.f32.mrf.mxu0
    %v1387 = vadd.f32 0.0, %v1386
    %1388 = vmatmul.f32.gmra.mxu0 %v641
    %v1389 = vpop.f32.mrf.mxu0
    %v1390 = vadd.f32 0.0, %v1389
    %1391 = vmatmul.f32.gmra.mxu0 %v643
    %v1392 = vpop.f32.mrf.mxu0
    %v1393 = vadd.f32 0.0, %v1392
    %1394 = vmatmul.f32.gmra.mxu0 %v645
    %v1395 = vpop.f32.mrf.mxu0
    %v1396 = vadd.f32 0.0, %v1395
    %1397 = vmatmul.f32.gmra.mxu0 %v647
    %v1398 = vpop.f32.mrf.mxu0
    %v1399 = vadd.f32 0.0, %v1398
    %1400 = vmatmul.f32.gmra.mxu0 %v649
    %v1401 = vpop.f32.mrf.mxu0
    %v1402 = vadd.f32 0.0, %v1401
    %1403 = vmatmul.f32.gmra.mxu0 %v651
    %v1404 = vpop.f32.mrf.mxu0
    %v1405 = vadd.f32 0.0, %v1404
    %1406 = vmatmul.f32.gmra.mxu0 %v653
    %v1407 = vpop.f32.mrf.mxu0
    %v1408 = vadd.f32 0.0, %v1407
    %1409 = vmatmul.f32.gmra.mxu0 %v655
    %v1410 = vpop.f32.mrf.mxu0
    %v1411 = vadd.f32 0.0, %v1410
    %1412 = vmatmul.f32.gmra.mxu0 %v657
    %v1413 = vpop.f32.mrf.mxu0
    %v1414 = vadd.f32 0.0, %v1413
    %1415 = vmatmul.f32.gmra.mxu0 %v659
    %v1416 = vpop.f32.mrf.mxu0
    %v1417 = vadd.f32 0.0, %v1416
    %1418 = vmatmul.f32.gmra.mxu0 %v661
    %v1419 = vpop.f32.mrf.mxu0
    %v1420 = vadd.f32 0.0, %v1419
    %1421 = vdwg.mxu0
    %1422 = vmatpush.msra.mxu0 %v1308
    %1423 = vmatpush.msra.mxu0 %v1307
    %1424 = vmatpush.msra.mxu0 %v1306
    %1425 = vmatpush.msra.mxu0 %v1305
    %1426 = vmatpush.msra.mxu0 %v1304
    %1427 = vmatpush.msra.mxu0 %v1303
    %1428 = vmatpush.msra.mxu0 %v1302
    %1429 = vmatpush.msra.mxu0 %v1301
    %1430 = vmatpush.msra.mxu0 %v1300
    %1431 = vmatpush.msra.mxu0 %v1299
    %1432 = vmatpush.msra.mxu0 %v1298
    %1433 = vmatpush.msra.mxu0 %v1297
    %1434 = vmatpush.msra.mxu0 %v1296
    %1435 = vmatpush.msra.mxu0 %v1295
    %1436 = vmatpush.msra.mxu0 %v1294
    %1437 = vmatpush.msra.mxu0 %v1293
    %1438 = vmatmul.f32.gmra.mxu0 %v600
    %v1439 = vpop.f32.mrf.mxu0
    %v1440 = vadd.f32 %v1327, %v1439
    %1441 = vmatmul.f32.gmra.mxu0 %v602
    %v1442 = vpop.f32.mrf.mxu0
    %v1443 = vadd.f32 %v1330, %v1442
    %1444 = vmatmul.f32.gmra.mxu0 %v604
    %v1445 = vpop.f32.mrf.mxu0
    %v1446 = vadd.f32 %v1333, %v1445
    %1447 = vmatmul.f32.gmra.mxu0 %v606
    %v1448 = vpop.f32.mrf.mxu0
    %v1449 = vadd.f32 %v1336, %v1448
    %1450 = vmatmul.f32.gmra.mxu0 %v608
    %v1451 = vpop.f32.mrf.mxu0
    %v1452 = vadd.f32 %v1339, %v1451
    %1453 = vmatmul.f32.gmra.mxu0 %v610
    %v1454 = vpop.f32.mrf.mxu0
    %v1455 = vadd.f32 %v1342, %v1454
    %1456 = vmatmul.f32.gmra.mxu0 %v612
    %v1457 = vpop.f32.mrf.mxu0
    %v1458 = vadd.f32 %v1345, %v1457
    %1459 = vmatmul.f32.gmra.mxu0 %v614
    %v1460 = vpop.f32.mrf.mxu0
    %v1461 = vadd.f32 %v1348, %v1460
    %1462 = vmatmul.f32.gmra.mxu0 %v616
    %v1463 = vpop.f32.mrf.mxu0
    %v1464 = vadd.f32 %v1351, %v1463
    %1465 = vmatmul.f32.gmra.mxu0 %v618
    %v1466 = vpop.f32.mrf.mxu0
    %v1467 = vadd.f32 %v1354, %v1466
    %1468 = vmatmul.f32.gmra.mxu0 %v620
    %v1469 = vpop.f32.mrf.mxu0
    %v1470 = vadd.f32 %v1357, %v1469
    %1471 = vmatmul.f32.gmra.mxu0 %v622
    %v1472 = vpop.f32.mrf.mxu0
    %v1473 = vadd.f32 %v1360, %v1472
    %1474 = vmatmul.f32.gmra.mxu0 %v624
    %v1475 = vpop.f32.mrf.mxu0
    %v1476 = vadd.f32 %v1363, %v1475
    %1477 = vmatmul.f32.gmra.mxu0 %v626
    %v1478 = vpop.f32.mrf.mxu0
    %v1479 = vadd.f32 %v1366, %v1478
    %1480 = vmatmul.f32.gmra.mxu0 %v628
    %v1481 = vpop.f32.mrf.mxu0
    %v1482 = vadd.f32 %v1369, %v1481
    %1483 = vmatmul.f32.gmra.mxu0 %v630
    %v1484 = vpop.f32.mrf.mxu0
    %v1485 = vadd.f32 %v1372, %v1484
    %1486 = vmatmul.f32.gmra.mxu0 %v632
    %v1487 = vpop.f32.mrf.mxu0
    %v1488 = vadd.f32 %v1375, %v1487
    %1489 = vmatmul.f32.gmra.mxu0 %v634
    %v1490 = vpop.f32.mrf.mxu0
    %v1491 = vadd.f32 %v1378, %v1490
    %1492 = vmatmul.f32.gmra.mxu0 %v636
    %v1493 = vpop.f32.mrf.mxu0
    %v1494 = vadd.f32 %v1381, %v1493
    %1495 = vmatmul.f32.gmra.mxu0 %v638
    %v1496 = vpop.f32.mrf.mxu0
    %v1497 = vadd.f32 %v1384, %v1496
    %1498 = vmatmul.f32.gmra.mxu0 %v640
    %v1499 = vpop.f32.mrf.mxu0
    %v1500 = vadd.f32 %v1387, %v1499
    %1501 = vmatmul.f32.gmra.mxu0 %v642
    %v1502 = vpop.f32.mrf.mxu0
    %v1503 = vadd.f32 %v1390, %v1502
    %1504 = vmatmul.f32.gmra.mxu0 %v644
    %v1505 = vpop.f32.mrf.mxu0
    %v1506 = vadd.f32 %v1393, %v1505
    %1507 = vmatmul.f32.gmra.mxu0 %v646
    %v1508 = vpop.f32.mrf.mxu0
    %v1509 = vadd.f32 %v1396, %v1508
    %1510 = vmatmul.f32.gmra.mxu0 %v648
    %v1511 = vpop.f32.mrf.mxu0
    %v1512 = vadd.f32 %v1399, %v1511
    %1513 = vmatmul.f32.gmra.mxu0 %v650
    %v1514 = vpop.f32.mrf.mxu0
    %v1515 = vadd.f32 %v1402, %v1514
    %1516 = vmatmul.f32.gmra.mxu0 %v652
    %v1517 = vpop.f32.mrf.mxu0
    %v1518 = vadd.f32 %v1405, %v1517
    %1519 = vmatmul.f32.gmra.mxu0 %v654
    %v1520 = vpop.f32.mrf.mxu0
    %v1521 = vadd.f32 %v1408, %v1520
    %1522 = vmatmul.f32.gmra.mxu0 %v656
    %v1523 = vpop.f32.mrf.mxu0
    %v1524 = vadd.f32 %v1411, %v1523
    %1525 = vmatmul.f32.gmra.mxu0 %v658
    %v1526 = vpop.f32.mrf.mxu0
    %v1527 = vadd.f32 %v1414, %v1526
    %1528 = vmatmul.f32.gmra.mxu0 %v660
    %v1529 = vpop.f32.mrf.mxu0
    %v1530 = vadd.f32 %v1417, %v1529
    %1531 = vmatmul.f32.gmra.mxu0 %v662
    %v1532 = vpop.f32.mrf.mxu0
    %v1533 = vadd.f32 %v1420, %v1532
    %1534 = vdwg.mxu0
    %1535 = vst [vmem:[#allocation3] sm:$0xff] 0.0
    %1536 = vst [vmem:[#allocation3 + $0x8] sm:$0xff] 0.0
    %1537 = vst [vmem:[#allocation3 + $0x10] sm:$0xff] 0.0
    %1538 = vst [vmem:[#allocation3 + $0x18] sm:$0xff] 0.0
    %1539 = vst [vmem:[#allocation3 + $0x20] sm:$0xff] 0.0
    %1540 = vst [vmem:[#allocation3 + $0x28] sm:$0xff] 0.0
    %1541 = vst [vmem:[#allocation3 + $0x30] sm:$0xff] 0.0
    %1542 = vst [vmem:[#allocation3 + $0x38] sm:$0xff] 0.0
    %1543 = vst [vmem:[#allocation3 + $0x40] sm:$0xff] 0.0
    %1544 = vst [vmem:[#allocation3 + $0x48] sm:$0xff] 0.0
    %1545 = vst [vmem:[#allocation3 + $0x50] sm:$0xff] 0.0
    %1546 = vst [vmem:[#allocation3 + $0x58] sm:$0xff] 0.0
    %1547 = vst [vmem:[#allocation3 + $0x60] sm:$0xff] 0.0
    %1548 = vst [vmem:[#allocation3 + $0x68] sm:$0xff] 0.0
    %1549 = vst [vmem:[#allocation3 + $0x70] sm:$0xff] 0.0
    %1550 = vst [vmem:[#allocation3 + $0x78] sm:$0xff] 0.0
    %1551 = vst [vmem:[#allocation3 + $0x80] sm:$0xff] 0.0
    %1552 = vst [vmem:[#allocation3 + $0x88] sm:$0xff] 0.0
    %1553 = vst [vmem:[#allocation3 + $0x90] sm:$0xff] 0.0
    %1554 = vst [vmem:[#allocation3 + $0x98] sm:$0xff] 0.0
    %1555 = vst [vmem:[#allocation3 + $0xa0] sm:$0xff] 0.0
    %1556 = vst [vmem:[#allocation3 + $0xa8] sm:$0xff] 0.0
    %1557 = vst [vmem:[#allocation3 + $0xb0] sm:$0xff] 0.0
    %1558 = vst [vmem:[#allocation3 + $0xb8] sm:$0xff] 0.0
    %1559 = vst [vmem:[#allocation3 + $0xc0] sm:$0xff] 0.0
    %1560 = vst [vmem:[#allocation3 + $0xc8] sm:$0xff] 0.0
    %1561 = vst [vmem:[#allocation3 + $0xd0] sm:$0xff] 0.0
    %1562 = vst [vmem:[#allocation3 + $0xd8] sm:$0xff] 0.0
    %1563 = vst [vmem:[#allocation3 + $0xe0] sm:$0xff] 0.0
    %1564 = vst [vmem:[#allocation3 + $0xe8] sm:$0xff] 0.0
    %1565 = vst [vmem:[#allocation3 + $0xf0] sm:$0xff] 0.0
    %1566 = vst [vmem:[#allocation3 + $0xf8] sm:$0xff] 0.0
    %1567 = vst [vmem:[#allocation3 + $0x100] sm:$0xff] 0.0
    %1568 = vst [vmem:[#allocation3 + $0x108] sm:$0xff] 0.0
    %1569 = vst [vmem:[#allocation3 + $0x110] sm:$0xff] 0.0
    %1570 = vst [vmem:[#allocation3 + $0x118] sm:$0xff] 0.0
    %1571 = vst [vmem:[#allocation3 + $0x120] sm:$0xff] 0.0
    %1572 = vst [vmem:[#allocation3 + $0x128] sm:$0xff] 0.0
    %1573 = vst [vmem:[#allocation3 + $0x130] sm:$0xff] 0.0
    %1574 = vst [vmem:[#allocation3 + $0x138] sm:$0xff] 0.0
    %1575 = vst [vmem:[#allocation3 + $0x140] sm:$0xff] 0.0
    %1576 = vst [vmem:[#allocation3 + $0x148] sm:$0xff] 0.0
    %1577 = vst [vmem:[#allocation3 + $0x150] sm:$0xff] 0.0
    %1578 = vst [vmem:[#allocation3 + $0x158] sm:$0xff] 0.0
    %1579 = vst [vmem:[#allocation3 + $0x160] sm:$0xff] 0.0
    %1580 = vst [vmem:[#allocation3 + $0x168] sm:$0xff] 0.0
    %1581 = vst [vmem:[#allocation3 + $0x170] sm:$0xff] 0.0
    %1582 = vst [vmem:[#allocation3 + $0x178] sm:$0xff] 0.0
    %1583 = vst [vmem:[#allocation3 + $0x180] sm:$0xff] 0.0
    %1584 = vst [vmem:[#allocation3 + $0x188] sm:$0xff] 0.0
    %1585 = vst [vmem:[#allocation3 + $0x190] sm:$0xff] 0.0
    %1586 = vst [vmem:[#allocation3 + $0x198] sm:$0xff] 0.0
    %1587 = vst [vmem:[#allocation3 + $0x1a0] sm:$0xff] 0.0
    %1588 = vst [vmem:[#allocation3 + $0x1a8] sm:$0xff] 0.0
    %1589 = vst [vmem:[#allocation3 + $0x1b0] sm:$0xff] 0.0
    %1590 = vst [vmem:[#allocation3 + $0x1b8] sm:$0xff] 0.0
    %1591 = vst [vmem:[#allocation3 + $0x1c0] sm:$0xff] 0.0
    %1592 = vst [vmem:[#allocation3 + $0x1c8] sm:$0xff] 0.0
    %1593 = vst [vmem:[#allocation3 + $0x1d0] sm:$0xff] 0.0
    %1594 = vst [vmem:[#allocation3 + $0x1d8] sm:$0xff] 0.0
    %1595 = vst [vmem:[#allocation3 + $0x1e0] sm:$0xff] 0.0
    %1596 = vst [vmem:[#allocation3 + $0x1e8] sm:$0xff] 0.0
    %1597 = vst [vmem:[#allocation3 + $0x1f0] sm:$0xff] 0.0
    %1598 = vst [vmem:[#allocation3 + $0x1f8] sm:$0xff] 0.0
    %1599 = vst [vmem:[#allocation3 + $0x200] sm:$0xff] 0.0
    %1600 = vst [vmem:[#allocation3 + $0x208] sm:$0xff] 0.0
    %1601 = vst [vmem:[#allocation3 + $0x210] sm:$0xff] 0.0
    %1602 = vst [vmem:[#allocation3 + $0x218] sm:$0xff] 0.0
    %1603 = vst [vmem:[#allocation3 + $0x220] sm:$0xff] 0.0
    %1604 = vst [vmem:[#allocation3 + $0x228] sm:$0xff] 0.0
    %1605 = vst [vmem:[#allocation3 + $0x230] sm:$0xff] 0.0
    %1606 = vst [vmem:[#allocation3 + $0x238] sm:$0xff] 0.0
    %1607 = vst [vmem:[#allocation3 + $0x240] sm:$0xff] 0.0
    %1608 = vst [vmem:[#allocation3 + $0x248] sm:$0xff] 0.0
    %1609 = vst [vmem:[#allocation3 + $0x250] sm:$0xff] 0.0
    %1610 = vst [vmem:[#allocation3 + $0x258] sm:$0xff] 0.0
    %1611 = vst [vmem:[#allocation3 + $0x260] sm:$0xff] 0.0
    %1612 = vst [vmem:[#allocation3 + $0x268] sm:$0xff] 0.0
    %1613 = vst [vmem:[#allocation3 + $0x270] sm:$0xff] 0.0
    %1614 = vst [vmem:[#allocation3 + $0x278] sm:$0xff] 0.0
    %1615 = vst [vmem:[#allocation3 + $0x280] sm:$0xff] 0.0
    %1616 = vst [vmem:[#allocation3 + $0x288] sm:$0xff] 0.0
    %1617 = vst [vmem:[#allocation3 + $0x290] sm:$0xff] 0.0
    %1618 = vst [vmem:[#allocation3 + $0x298] sm:$0xff] 0.0
    %1619 = vst [vmem:[#allocation3 + $0x2a0] sm:$0xff] 0.0
    %1620 = vst [vmem:[#allocation3 + $0x2a8] sm:$0xff] 0.0
    %1621 = vst [vmem:[#allocation3 + $0x2b0] sm:$0xff] 0.0
    %1622 = vst [vmem:[#allocation3 + $0x2b8] sm:$0xff] 0.0
    %1623 = vst [vmem:[#allocation3 + $0x2c0] sm:$0xff] 0.0
    %1624 = vst [vmem:[#allocation3 + $0x2c8] sm:$0xff] 0.0
    %1625 = vst [vmem:[#allocation3 + $0x2d0] sm:$0xff] 0.0
    %1626 = vst [vmem:[#allocation3 + $0x2d8] sm:$0xff] 0.0
    %1627 = vst [vmem:[#allocation3 + $0x2e0] sm:$0xff] 0.0
    %1628 = vst [vmem:[#allocation3 + $0x2e8] sm:$0xff] 0.0
    %1629 = vst [vmem:[#allocation3 + $0x2f0] sm:$0xff] 0.0
    %1630 = vst [vmem:[#allocation3 + $0x2f8] sm:$0xff] 0.0
    %1631 = vst [vmem:[#allocation3 + $0x300] sm:$0xff] 0.0
    %1632 = vst [vmem:[#allocation3 + $0x308] sm:$0xff] 0.0
    %1633 = vst [vmem:[#allocation3 + $0x310] sm:$0xff] 0.0
    %1634 = vst [vmem:[#allocation3 + $0x318] sm:$0xff] 0.0
    %1635 = vst [vmem:[#allocation3 + $0x320] sm:$0xff] 0.0
    %1636 = vst [vmem:[#allocation3 + $0x328] sm:$0xff] 0.0
    %1637 = vst [vmem:[#allocation3 + $0x330] sm:$0xff] 0.0
    %1638 = vst [vmem:[#allocation3 + $0x338] sm:$0xff] 0.0
    %1639 = vst [vmem:[#allocation3 + $0x340] sm:$0xff] 0.0
    %1640 = vst [vmem:[#allocation3 + $0x348] sm:$0xff] 0.0
    %1641 = vst [vmem:[#allocation3 + $0x350] sm:$0xff] 0.0
    %1642 = vst [vmem:[#allocation3 + $0x358] sm:$0xff] 0.0
    %1643 = vst [vmem:[#allocation3 + $0x360] sm:$0xff] 0.0
    %1644 = vst [vmem:[#allocation3 + $0x368] sm:$0xff] 0.0
    %1645 = vst [vmem:[#allocation3 + $0x370] sm:$0xff] 0.0
    %1646 = vst [vmem:[#allocation3 + $0x378] sm:$0xff] 0.0
    %1647 = vst [vmem:[#allocation3 + $0x380] sm:$0xff] 0.0
    %1648 = vst [vmem:[#allocation3 + $0x388] sm:$0xff] 0.0
    %1649 = vst [vmem:[#allocation3 + $0x390] sm:$0xff] 0.0
    %1650 = vst [vmem:[#allocation3 + $0x398] sm:$0xff] 0.0
    %1651 = vst [vmem:[#allocation3 + $0x3a0] sm:$0xff] 0.0
    %1652 = vst [vmem:[#allocation3 + $0x3a8] sm:$0xff] 0.0
    %1653 = vst [vmem:[#allocation3 + $0x3b0] sm:$0xff] 0.0
    %1654 = vst [vmem:[#allocation3 + $0x3b8] sm:$0xff] 0.0
    %1655 = vst [vmem:[#allocation3 + $0x3c0] sm:$0xff] 0.0
    %1656 = vst [vmem:[#allocation3 + $0x3c8] sm:$0xff] 0.0
    %1657 = vst [vmem:[#allocation3 + $0x3d0] sm:$0xff] 0.0
    %1658 = vst [vmem:[#allocation3 + $0x3d8] sm:$0xff] 0.0
    %1659 = vst [vmem:[#allocation3 + $0x3e0] sm:$0xff] 0.0
    %1660 = vst [vmem:[#allocation3 + $0x3e8] sm:$0xff] 0.0
    %1661 = vst [vmem:[#allocation3 + $0x3f0] sm:$0xff] 0.0
    %1662 = vst [vmem:[#allocation3 + $0x3f8] sm:$0xff] 0.0
    %1663 = vst.msk [vmem:[#allocation3] sm:$0xff] %vm924, %v1277
    %1664 = vst.msk [vmem:[#allocation3 + $0x20] sm:$0xff] %vm924, %v1278
    %1667 = vrot.lane.b32.xlu0 %v1279, 32
    %v1668 = vpop.permute.xlu0 %1667
    %1669 = vrot.lane.b32.xlu0 %v1280, 32
    %v1670 = vpop.permute.xlu0 %1669
    %vm1673 = vcmask 523520
    %1674 = vst.msk [vmem:[#allocation3 + $0x40] sm:$0xff] %vm1673, %v1668
    %1675 = vst.msk [vmem:[#allocation3 + $0x60] sm:$0xff] %vm1673, %v1670
    %1678 = vrot.lane.b32.xlu0 %v1281, 64
    %v1679 = vpop.permute.xlu0 %1678
    %1680 = vrot.lane.b32.xlu0 %v1282, 64
    %v1681 = vpop.permute.xlu0 %1680
    %vm1684 = vcmask 785920
    %1685 = vst.msk [vmem:[#allocation3 + $0x80] sm:$0xff] %vm1684, %v1679
    %1686 = vst.msk [vmem:[#allocation3 + $0xa0] sm:$0xff] %vm1684, %v1681
    %1689 = vrot.lane.b32.xlu0 %v1283, 96
    %v1690 = vpop.permute.xlu0 %1689
    %1691 = vrot.lane.b32.xlu0 %v1284, 96
    %v1692 = vpop.permute.xlu0 %1691
    %vm1695 = vcmask 1048320
    %1696 = vst.msk [vmem:[#allocation3 + $0xc0] sm:$0xff] %vm1695, %v1690
    %1697 = vst.msk [vmem:[#allocation3 + $0xe0] sm:$0xff] %vm1695, %v1692
    %1698 = vst.msk [vmem:[#allocation3 + $0x108] sm:$0xff] %vm924, %v1285
    %1699 = vst.msk [vmem:[#allocation3 + $0x128] sm:$0xff] %vm924, %v1286
    %1702 = vrot.lane.b32.xlu0 %v1287, 32
    %v1703 = vpop.permute.xlu0 %1702
    %1704 = vrot.lane.b32.xlu0 %v1288, 32
    %v1705 = vpop.permute.xlu0 %1704
    %1708 = vst.msk [vmem:[#allocation3 + $0x148] sm:$0xff] %vm1673, %v1703
    %1709 = vst.msk [vmem:[#allocation3 + $0x168] sm:$0xff] %vm1673, %v1705
    %1712 = vrot.lane.b32.xlu0 %v1289, 64
    %v1713 = vpop.permute.xlu0 %1712
    %1714 = vrot.lane.b32.xlu0 %v1290, 64
    %v1715 = vpop.permute.xlu0 %1714
    %1718 = vst.msk [vmem:[#allocation3 + $0x188] sm:$0xff] %vm1684, %v1713
    %1719 = vst.msk [vmem:[#allocation3 + $0x1a8] sm:$0xff] %vm1684, %v1715
    %1722 = vrot.lane.b32.xlu0 %v1291, 96
    %v1723 = vpop.permute.xlu0 %1722
    %1724 = vrot.lane.b32.xlu0 %v1292, 96
    %v1725 = vpop.permute.xlu0 %1724
    %1728 = vst.msk [vmem:[#allocation3 + $0x1c8] sm:$0xff] %vm1695, %v1723
    %1729 = vst.msk [vmem:[#allocation3 + $0x1e8] sm:$0xff] %vm1695, %v1725
    %1730 = vst.msk [vmem:[#allocation3 + $0x210] sm:$0xff] %vm924, %v1293
    %1731 = vst.msk [vmem:[#allocation3 + $0x230] sm:$0xff] %vm924, %v1294
    %1734 = vrot.lane.b32.xlu0 %v1295, 32
    %v1735 = vpop.permute.xlu0 %1734
    %1736 = vrot.lane.b32.xlu0 %v1296, 32
    %v1737 = vpop.permute.xlu0 %1736
    %1740 = vst.msk [vmem:[#allocation3 + $0x250] sm:$0xff] %vm1673, %v1735
    %1741 = vst.msk [vmem:[#allocation3 + $0x270] sm:$0xff] %vm1673, %v1737
    %1744 = vrot.lane.b32.xlu0 %v1297, 64
    %v1745 = vpop.permute.xlu0 %1744
    %1746 = vrot.lane.b32.xlu0 %v1298, 64
    %v1747 = vpop.permute.xlu0 %1746
    %1750 = vst.msk [vmem:[#allocation3 + $0x290] sm:$0xff] %vm1684, %v1745
    %1751 = vst.msk [vmem:[#allocation3 + $0x2b0] sm:$0xff] %vm1684, %v1747
    %1754 = vrot.lane.b32.xlu0 %v1299, 96
    %v1755 = vpop.permute.xlu0 %1754
    %1756 = vrot.lane.b32.xlu0 %v1300, 96
    %v1757 = vpop.permute.xlu0 %1756
    %1760 = vst.msk [vmem:[#allocation3 + $0x2d0] sm:$0xff] %vm1695, %v1755
    %1761 = vst.msk [vmem:[#allocation3 + $0x2f0] sm:$0xff] %vm1695, %v1757
    %1762 = vst.msk [vmem:[#allocation3 + $0x318] sm:$0xff] %vm924, %v1301
    %1763 = vst.msk [vmem:[#allocation3 + $0x338] sm:$0xff] %vm924, %v1302
    %1766 = vrot.lane.b32.xlu0 %v1303, 32
    %v1767 = vpop.permute.xlu0 %1766
    %1768 = vrot.lane.b32.xlu0 %v1304, 32
    %v1769 = vpop.permute.xlu0 %1768
    %1772 = vst.msk [vmem:[#allocation3 + $0x358] sm:$0xff] %vm1673, %v1767
    %1773 = vst.msk [vmem:[#allocation3 + $0x378] sm:$0xff] %vm1673, %v1769
    %1776 = vrot.lane.b32.xlu0 %v1305, 64
    %v1777 = vpop.permute.xlu0 %1776
    %1778 = vrot.lane.b32.xlu0 %v1306, 64
    %v1779 = vpop.permute.xlu0 %1778
    %1782 = vst.msk [vmem:[#allocation3 + $0x398] sm:$0xff] %vm1684, %v1777
    %1783 = vst.msk [vmem:[#allocation3 + $0x3b8] sm:$0xff] %vm1684, %v1779
    %1786 = vrot.lane.b32.xlu0 %v1307, 96
    %v1787 = vpop.permute.xlu0 %1786
    %1788 = vrot.lane.b32.xlu0 %v1308, 96
    %v1789 = vpop.permute.xlu0 %1788
    %1792 = vst.msk [vmem:[#allocation3 + $0x3d8] sm:$0xff] %vm1695, %v1787
    %1793 = vst.msk [vmem:[#allocation3 + $0x3f8] sm:$0xff] %vm1695, %v1789
    %1826 = vrot.lane.b32.xlu0 %v1440, 32
    %v1827 = vpop.permute.xlu0 %1826
    %1828 = vrot.lane.b32.xlu0 %v1443, 32
    %v1829 = vpop.permute.xlu0 %1828
    %1830 = vrot.lane.b32.xlu0 %v1446, 32
    %v1831 = vpop.permute.xlu0 %1830
    %1832 = vrot.lane.b32.xlu0 %v1449, 32
    %v1833 = vpop.permute.xlu0 %1832
    %1834 = vrot.lane.b32.xlu0 %v1452, 32
    %v1835 = vpop.permute.xlu0 %1834
    %1836 = vrot.lane.b32.xlu0 %v1455, 32
    %v1837 = vpop.permute.xlu0 %1836
    %1838 = vrot.lane.b32.xlu0 %v1458, 32
    %v1839 = vpop.permute.xlu0 %1838
    %1840 = vrot.lane.b32.xlu0 %v1461, 32
    %v1841 = vpop.permute.xlu0 %1840
    %1842 = vrot.lane.b32.xlu0 %v1464, 32
    %v1843 = vpop.permute.xlu0 %1842
    %1844 = vrot.lane.b32.xlu0 %v1467, 32
    %v1845 = vpop.permute.xlu0 %1844
    %1846 = vrot.lane.b32.xlu0 %v1470, 32
    %v1847 = vpop.permute.xlu0 %1846
    %1848 = vrot.lane.b32.xlu0 %v1473, 32
    %v1849 = vpop.permute.xlu0 %1848
    %1850 = vrot.lane.b32.xlu0 %v1476, 32
    %v1851 = vpop.permute.xlu0 %1850
    %1852 = vrot.lane.b32.xlu0 %v1479, 32
    %v1853 = vpop.permute.xlu0 %1852
    %1854 = vrot.lane.b32.xlu0 %v1482, 32
    %v1855 = vpop.permute.xlu0 %1854
    %1856 = vrot.lane.b32.xlu0 %v1485, 32
    %v1857 = vpop.permute.xlu0 %1856
    %1858 = vrot.lane.b32.xlu0 %v1488, 32
    %v1859 = vpop.permute.xlu0 %1858
    %1860 = vrot.lane.b32.xlu0 %v1491, 32
    %v1861 = vpop.permute.xlu0 %1860
    %1862 = vrot.lane.b32.xlu0 %v1494, 32
    %v1863 = vpop.permute.xlu0 %1862
    %1864 = vrot.lane.b32.xlu0 %v1497, 32
    %v1865 = vpop.permute.xlu0 %1864
    %1866 = vrot.lane.b32.xlu0 %v1500, 32
    %v1867 = vpop.permute.xlu0 %1866
    %1868 = vrot.lane.b32.xlu0 %v1503, 32
    %v1869 = vpop.permute.xlu0 %1868
    %1870 = vrot.lane.b32.xlu0 %v1506, 32
    %v1871 = vpop.permute.xlu0 %1870
    %1872 = vrot.lane.b32.xlu0 %v1509, 32
    %v1873 = vpop.permute.xlu0 %1872
    %1874 = vrot.lane.b32.xlu0 %v1512, 32
    %v1875 = vpop.permute.xlu0 %1874
    %1876 = vrot.lane.b32.xlu0 %v1515, 32
    %v1877 = vpop.permute.xlu0 %1876
    %1878 = vrot.lane.b32.xlu0 %v1518, 32
    %v1879 = vpop.permute.xlu0 %1878
    %1880 = vrot.lane.b32.xlu0 %v1521, 32
    %v1881 = vpop.permute.xlu0 %1880
    %1882 = vrot.lane.b32.xlu0 %v1524, 32
    %v1883 = vpop.permute.xlu0 %1882
    %1884 = vrot.lane.b32.xlu0 %v1527, 32
    %v1885 = vpop.permute.xlu0 %1884
    %1886 = vrot.lane.b32.xlu0 %v1530, 32
    %v1887 = vpop.permute.xlu0 %1886
    %1888 = vrot.lane.b32.xlu0 %v1533, 32
    %v1889 = vpop.permute.xlu0 %1888
    %v1922 = vsel %vm924, %v892, %v1827
    %v1923 = vsel %vm924, %v893, %v1829
    %v1924 = vsel %vm924, %v894, %v1831
    %v1925 = vsel %vm924, %v895, %v1833
    %v1926 = vsel %vm924, %v896, %v1835
    %v1927 = vsel %vm924, %v897, %v1837
    %v1928 = vsel %vm924, %v898, %v1839
    %v1929 = vsel %vm924, %v899, %v1841
    %v1930 = vsel %vm924, %v900, %v1843
    %v1931 = vsel %vm924, %v901, %v1845
    %v1932 = vsel %vm924, %v902, %v1847
    %v1933 = vsel %vm924, %v903, %v1849
    %v1934 = vsel %vm924, %v904, %v1851
    %v1935 = vsel %vm924, %v905, %v1853
    %v1936 = vsel %vm924, %v906, %v1855
    %v1937 = vsel %vm924, %v907, %v1857
    %v1938 = vsel %vm924, %v908, %v1859
    %v1939 = vsel %vm924, %v909, %v1861
    %v1940 = vsel %vm924, %v910, %v1863
    %v1941 = vsel %vm924, %v911, %v1865
    %v1942 = vsel %vm924, %v912, %v1867
    %v1943 = vsel %vm924, %v913, %v1869
    %v1944 = vsel %vm924, %v914, %v1871
    %v1945 = vsel %vm924, %v915, %v1873
    %v1946 = vsel %vm924, %v916, %v1875
    %v1947 = vsel %vm924, %v917, %v1877
    %v1948 = vsel %vm924, %v918, %v1879
    %v1949 = vsel %vm924, %v919, %v1881
    %v1950 = vsel %vm924, %v920, %v1883
    %v1951 = vsel %vm924, %v921, %v1885
    %v1952 = vsel %vm924, %v922, %v1887
    %v1953 = vsel %vm924, %v923, %v1889
    %v1954 = vld [vmem:[#allocation3] sm:$0xff]
    %v1955 = vld [vmem:[#allocation3 + $0x8] sm:$0xff]
    %v1956 = vld [vmem:[#allocation3 + $0x10] sm:$0xff]
    %v1957 = vld [vmem:[#allocation3 + $0x18] sm:$0xff]
    %v1958 = vld [vmem:[#allocation3 + $0x20] sm:$0xff]
    %v1959 = vld [vmem:[#allocation3 + $0x28] sm:$0xff]
    %v1960 = vld [vmem:[#allocation3 + $0x30] sm:$0xff]
    %v1961 = vld [vmem:[#allocation3 + $0x38] sm:$0xff]
    %v1962 = vld [vmem:[#allocation3 + $0x40] sm:$0xff]
    %v1963 = vld [vmem:[#allocation3 + $0x48] sm:$0xff]
    %v1964 = vld [vmem:[#allocation3 + $0x50] sm:$0xff]
    %v1965 = vld [vmem:[#allocation3 + $0x58] sm:$0xff]
    %v1966 = vld [vmem:[#allocation3 + $0x60] sm:$0xff]
    %v1967 = vld [vmem:[#allocation3 + $0x68] sm:$0xff]
    %v1968 = vld [vmem:[#allocation3 + $0x70] sm:$0xff]
    %v1969 = vld [vmem:[#allocation3 + $0x78] sm:$0xff]
    %v1970 = vld [vmem:[#allocation3 + $0x80] sm:$0xff]
    %v1971 = vld [vmem:[#allocation3 + $0x88] sm:$0xff]
    %v1972 = vld [vmem:[#allocation3 + $0x90] sm:$0xff]
    %v1973 = vld [vmem:[#allocation3 + $0x98] sm:$0xff]
    %v1974 = vld [vmem:[#allocation3 + $0xa0] sm:$0xff]
    %v1975 = vld [vmem:[#allocation3 + $0xa8] sm:$0xff]
    %v1976 = vld [vmem:[#allocation3 + $0xb0] sm:$0xff]
    %v1977 = vld [vmem:[#allocation3 + $0xb8] sm:$0xff]
    %v1978 = vld [vmem:[#allocation3 + $0xc0] sm:$0xff]
    %v1979 = vld [vmem:[#allocation3 + $0xc8] sm:$0xff]
    %v1980 = vld [vmem:[#allocation3 + $0xd0] sm:$0xff]
    %v1981 = vld [vmem:[#allocation3 + $0xd8] sm:$0xff]
    %v1982 = vld [vmem:[#allocation3 + $0xe0] sm:$0xff]
    %v1983 = vld [vmem:[#allocation3 + $0xe8] sm:$0xff]
    %v1984 = vld [vmem:[#allocation3 + $0xf0] sm:$0xff]
    %v1985 = vld [vmem:[#allocation3 + $0xf8] sm:$0xff]
    %v1986 = vld [vmem:[#allocation3 + $0x100] sm:$0xff]
    %v1987 = vld [vmem:[#allocation3 + $0x108] sm:$0xff]
    %v1988 = vld [vmem:[#allocation3 + $0x110] sm:$0xff]
    %v1989 = vld [vmem:[#allocation3 + $0x118] sm:$0xff]
    %v1990 = vld [vmem:[#allocation3 + $0x120] sm:$0xff]
    %v1991 = vld [vmem:[#allocation3 + $0x128] sm:$0xff]
    %v1992 = vld [vmem:[#allocation3 + $0x130] sm:$0xff]
    %v1993 = vld [vmem:[#allocation3 + $0x138] sm:$0xff]
    %v1994 = vld [vmem:[#allocation3 + $0x140] sm:$0xff]
    %v1995 = vld [vmem:[#allocation3 + $0x148] sm:$0xff]
    %v1996 = vld [vmem:[#allocation3 + $0x150] sm:$0xff]
    %v1997 = vld [vmem:[#allocation3 + $0x158] sm:$0xff]
    %v1998 = vld [vmem:[#allocation3 + $0x160] sm:$0xff]
    %v1999 = vld [vmem:[#allocation3 + $0x168] sm:$0xff]
    %v2000 = vld [vmem:[#allocation3 + $0x170] sm:$0xff]
    %v2001 = vld [vmem:[#allocation3 + $0x178] sm:$0xff]
    %v2002 = vld [vmem:[#allocation3 + $0x180] sm:$0xff]
    %v2003 = vld [vmem:[#allocation3 + $0x188] sm:$0xff]
    %v2004 = vld [vmem:[#allocation3 + $0x190] sm:$0xff]
    %v2005 = vld [vmem:[#allocation3 + $0x198] sm:$0xff]
    %v2006 = vld [vmem:[#allocation3 + $0x1a0] sm:$0xff]
    %v2007 = vld [vmem:[#allocation3 + $0x1a8] sm:$0xff]
    %v2008 = vld [vmem:[#allocation3 + $0x1b0] sm:$0xff]
    %v2009 = vld [vmem:[#allocation3 + $0x1b8] sm:$0xff]
    %v2010 = vld [vmem:[#allocation3 + $0x1c0] sm:$0xff]
    %v2011 = vld [vmem:[#allocation3 + $0x1c8] sm:$0xff]
    %v2012 = vld [vmem:[#allocation3 + $0x1d0] sm:$0xff]
    %v2013 = vld [vmem:[#allocation3 + $0x1d8] sm:$0xff]
    %v2014 = vld [vmem:[#allocation3 + $0x1e0] sm:$0xff]
    %v2015 = vld [vmem:[#allocation3 + $0x1e8] sm:$0xff]
    %v2016 = vld [vmem:[#allocation3 + $0x1f0] sm:$0xff]
    %v2017 = vld [vmem:[#allocation3 + $0x1f8] sm:$0xff]
    %v2018 = vld [vmem:[#allocation3 + $0x200] sm:$0xff]
    %v2019 = vld [vmem:[#allocation3 + $0x208] sm:$0xff]
    %v2020 = vld [vmem:[#allocation3 + $0x210] sm:$0xff]
    %v2021 = vld [vmem:[#allocation3 + $0x218] sm:$0xff]
    %v2022 = vld [vmem:[#allocation3 + $0x220] sm:$0xff]
    %v2023 = vld [vmem:[#allocation3 + $0x228] sm:$0xff]
    %v2024 = vld [vmem:[#allocation3 + $0x230] sm:$0xff]
    %v2025 = vld [vmem:[#allocation3 + $0x238] sm:$0xff]
    %v2026 = vld [vmem:[#allocation3 + $0x240] sm:$0xff]
    %v2027 = vld [vmem:[#allocation3 + $0x248] sm:$0xff]
    %v2028 = vld [vmem:[#allocation3 + $0x250] sm:$0xff]
    %v2029 = vld [vmem:[#allocation3 + $0x258] sm:$0xff]
    %v2030 = vld [vmem:[#allocation3 + $0x260] sm:$0xff]
    %v2031 = vld [vmem:[#allocation3 + $0x268] sm:$0xff]
    %v2032 = vld [vmem:[#allocation3 + $0x270] sm:$0xff]
    %v2033 = vld [vmem:[#allocation3 + $0x278] sm:$0xff]
    %v2034 = vld [vmem:[#allocation3 + $0x280] sm:$0xff]
    %v2035 = vld [vmem:[#allocation3 + $0x288] sm:$0xff]
    %v2036 = vld [vmem:[#allocation3 + $0x290] sm:$0xff]
    %v2037 = vld [vmem:[#allocation3 + $0x298] sm:$0xff]
    %v2038 = vld [vmem:[#allocation3 + $0x2a0] sm:$0xff]
    %v2039 = vld [vmem:[#allocation3 + $0x2a8] sm:$0xff]
    %v2040 = vld [vmem:[#allocation3 + $0x2b0] sm:$0xff]
    %v2041 = vld [vmem:[#allocation3 + $0x2b8] sm:$0xff]
    %v2042 = vld [vmem:[#allocation3 + $0x2c0] sm:$0xff]
    %v2043 = vld [vmem:[#allocation3 + $0x2c8] sm:$0xff]
    %v2044 = vld [vmem:[#allocation3 + $0x2d0] sm:$0xff]
    %v2045 = vld [vmem:[#allocation3 + $0x2d8] sm:$0xff]
    %v2046 = vld [vmem:[#allocation3 + $0x2e0] sm:$0xff]
    %v2047 = vld [vmem:[#allocation3 + $0x2e8] sm:$0xff]
    %v2048 = vld [vmem:[#allocation3 + $0x2f0] sm:$0xff]
    %v2049 = vld [vmem:[#allocation3 + $0x2f8] sm:$0xff]
    %v2050 = vld [vmem:[#allocation3 + $0x300] sm:$0xff]
    %v2051 = vld [vmem:[#allocation3 + $0x308] sm:$0xff]
    %v2052 = vld [vmem:[#allocation3 + $0x310] sm:$0xff]
    %v2053 = vld [vmem:[#allocation3 + $0x318] sm:$0xff]
    %v2054 = vld [vmem:[#allocation3 + $0x320] sm:$0xff]
    %v2055 = vld [vmem:[#allocation3 + $0x328] sm:$0xff]
    %v2056 = vld [vmem:[#allocation3 + $0x330] sm:$0xff]
    %v2057 = vld [vmem:[#allocation3 + $0x338] sm:$0xff]
    %v2058 = vld [vmem:[#allocation3 + $0x340] sm:$0xff]
    %v2059 = vld [vmem:[#allocation3 + $0x348] sm:$0xff]
    %v2060 = vld [vmem:[#allocation3 + $0x350] sm:$0xff]
    %v2061 = vld [vmem:[#allocation3 + $0x358] sm:$0xff]
    %v2062 = vld [vmem:[#allocation3 + $0x360] sm:$0xff]
    %v2063 = vld [vmem:[#allocation3 + $0x368] sm:$0xff]
    %v2064 = vld [vmem:[#allocation3 + $0x370] sm:$0xff]
    %v2065 = vld [vmem:[#allocation3 + $0x378] sm:$0xff]
    %v2066 = vld [vmem:[#allocation3 + $0x380] sm:$0xff]
    %v2067 = vld [vmem:[#allocation3 + $0x388] sm:$0xff]
    %v2068 = vld [vmem:[#allocation3 + $0x390] sm:$0xff]
    %v2069 = vld [vmem:[#allocation3 + $0x398] sm:$0xff]
    %v2070 = vld [vmem:[#allocation3 + $0x3a0] sm:$0xff]
    %v2071 = vld [vmem:[#allocation3 + $0x3a8] sm:$0xff]
    %v2072 = vld [vmem:[#allocation3 + $0x3b0] sm:$0xff]
    %v2073 = vld [vmem:[#allocation3 + $0x3b8] sm:$0xff]
    %v2074 = vld [vmem:[#allocation3 + $0x3c0] sm:$0xff]
    %v2075 = vld [vmem:[#allocation3 + $0x3c8] sm:$0xff]
    %v2076 = vld [vmem:[#allocation3 + $0x3d0] sm:$0xff]
    %v2077 = vld [vmem:[#allocation3 + $0x3d8] sm:$0xff]
    %v2078 = vld [vmem:[#allocation3 + $0x3e0] sm:$0xff]
    %v2079 = vld [vmem:[#allocation3 + $0x3e8] sm:$0xff]
    %v2080 = vld [vmem:[#allocation3 + $0x3f0] sm:$0xff]
    %v2081 = vld [vmem:[#allocation3 + $0x3f8] sm:$0xff]
    %2082 = vxpose.xlu0.b32.start [1/16] %v1954, 128
    %2083 = vxpose.xlu0.b32.cont [2/16] %v1958, 128
    %2084 = vxpose.xlu0.b32.cont [3/16] %v1962, 128
    %2085 = vxpose.xlu0.b32.cont [4/16] %v1966, 128
    %2086 = vxpose.xlu0.b32.cont [5/16] %v1970, 128
    %2087 = vxpose.xlu0.b32.cont [6/16] %v1974, 128
    %2088 = vxpose.xlu0.b32.cont [7/16] %v1978, 128
    %2089 = vxpose.xlu0.b32.cont [8/16] %v1982, 128
    %2090 = vxpose.xlu0.b32.cont [9/16] %v1986, 128
    %2091 = vxpose.xlu0.b32.cont [10/16] %v1990, 128
    %2092 = vxpose.xlu0.b32.cont [11/16] %v1994, 128
    %2093 = vxpose.xlu0.b32.cont [12/16] %v1998, 128
    %2094 = vxpose.xlu0.b32.cont [13/16] %v2002, 128
    %2095 = vxpose.xlu0.b32.cont [14/16] %v2006, 128
    %2096 = vxpose.xlu0.b32.cont [15/16] %v2010, 128
    %2097 = vxpose.xlu0.b32.end [16/16] %v2014, 128
    %v2098 = vpop.trf.xlu0
    %v2099 = vpop.trf.xlu0
    %v2100 = vpop.trf.xlu0
    %v2101 = vpop.trf.xlu0
    %v2102 = vpop.trf.xlu0
    %v2103 = vpop.trf.xlu0
    %v2104 = vpop.trf.xlu0
    %v2105 = vpop.trf.xlu0
    %v2106 = vpop.trf.xlu0
    %v2107 = vpop.trf.xlu0
    %v2108 = vpop.trf.xlu0
    %v2109 = vpop.trf.xlu0
    %v2110 = vpop.trf.xlu0
    %v2111 = vpop.trf.xlu0
    %v2112 = vpop.trf.xlu0
    %v2113 = vpop.trf.xlu0
    %2114 = vxpose.xlu0.b32.start [1/16] %v1955, 128
    %2115 = vxpose.xlu0.b32.cont [2/16] %v1959, 128
    %2116 = vxpose.xlu0.b32.cont [3/16] %v1963, 128
    %2117 = vxpose.xlu0.b32.cont [4/16] %v1967, 128
    %2118 = vxpose.xlu0.b32.cont [5/16] %v1971, 128
    %2119 = vxpose.xlu0.b32.cont [6/16] %v1975, 128
    %2120 = vxpose.xlu0.b32.cont [7/16] %v1979, 128
    %2121 = vxpose.xlu0.b32.cont [8/16] %v1983, 128
    %2122 = vxpose.xlu0.b32.cont [9/16] %v1987, 128
    %2123 = vxpose.xlu0.b32.cont [10/16] %v1991, 128
    %2124 = vxpose.xlu0.b32.cont [11/16] %v1995, 128
    %2125 = vxpose.xlu0.b32.cont [12/16] %v1999, 128
    %2126 = vxpose.xlu0.b32.cont [13/16] %v2003, 128
    %2127 = vxpose.xlu0.b32.cont [14/16] %v2007, 128
    %2128 = vxpose.xlu0.b32.cont [15/16] %v2011, 128
    %2129 = vxpose.xlu0.b32.end [16/16] %v2015, 128
    %v2130 = vpop.trf.xlu0
    %v2131 = vpop.trf.xlu0
    %v2132 = vpop.trf.xlu0
    %v2133 = vpop.trf.xlu0
    %v2134 = vpop.trf.xlu0
    %v2135 = vpop.trf.xlu0
    %v2136 = vpop.trf.xlu0
    %v2137 = vpop.trf.xlu0
    %v2138 = vpop.trf.xlu0
    %v2139 = vpop.trf.xlu0
    %v2140 = vpop.trf.xlu0
    %v2141 = vpop.trf.xlu0
    %v2142 = vpop.trf.xlu0
    %v2143 = vpop.trf.xlu0
    %v2144 = vpop.trf.xlu0
    %v2145 = vpop.trf.xlu0
    %2146 = vxpose.xlu0.b32.start [1/16] %v1956, 128
    %2147 = vxpose.xlu0.b32.cont [2/16] %v1960, 128
    %2148 = vxpose.xlu0.b32.cont [3/16] %v1964, 128
    %2149 = vxpose.xlu0.b32.cont [4/16] %v1968, 128
    %2150 = vxpose.xlu0.b32.cont [5/16] %v1972, 128
    %2151 = vxpose.xlu0.b32.cont [6/16] %v1976, 128
    %2152 = vxpose.xlu0.b32.cont [7/16] %v1980, 128
    %2153 = vxpose.xlu0.b32.cont [8/16] %v1984, 128
    %2154 = vxpose.xlu0.b32.cont [9/16] %v1988, 128
    %2155 = vxpose.xlu0.b32.cont [10/16] %v1992, 128
    %2156 = vxpose.xlu0.b32.cont [11/16] %v1996, 128
    %2157 = vxpose.xlu0.b32.cont [12/16] %v2000, 128
    %2158 = vxpose.xlu0.b32.cont [13/16] %v2004, 128
    %2159 = vxpose.xlu0.b32.cont [14/16] %v2008, 128
    %2160 = vxpose.xlu0.b32.cont [15/16] %v2012, 128
    %2161 = vxpose.xlu0.b32.end [16/16] %v2016, 128
    %v2162 = vpop.trf.xlu0
    %v2163 = vpop.trf.xlu0
    %v2164 = vpop.trf.xlu0
    %v2165 = vpop.trf.xlu0
    %v2166 = vpop.trf.xlu0
    %v2167 = vpop.trf.xlu0
    %v2168 = vpop.trf.xlu0
    %v2169 = vpop.trf.xlu0
    %v2170 = vpop.trf.xlu0
    %v2171 = vpop.trf.xlu0
    %v2172 = vpop.trf.xlu0
    %v2173 = vpop.trf.xlu0
    %v2174 = vpop.trf.xlu0
    %v2175 = vpop.trf.xlu0
    %v2176 = vpop.trf.xlu0
    %v2177 = vpop.trf.xlu0
    %2178 = vxpose.xlu0.b32.start [1/16] %v1957, 128
    %2179 = vxpose.xlu0.b32.cont [2/16] %v1961, 128
    %2180 = vxpose.xlu0.b32.cont [3/16] %v1965, 128
    %2181 = vxpose.xlu0.b32.cont [4/16] %v1969, 128
    %2182 = vxpose.xlu0.b32.cont [5/16] %v1973, 128
    %2183 = vxpose.xlu0.b32.cont [6/16] %v1977, 128
    %2184 = vxpose.xlu0.b32.cont [7/16] %v1981, 128
    %2185 = vxpose.xlu0.b32.cont [8/16] %v1985, 128
    %2186 = vxpose.xlu0.b32.cont [9/16] %v1989, 128
    %2187 = vxpose.xlu0.b32.cont [10/16] %v1993, 128
    %2188 = vxpose.xlu0.b32.cont [11/16] %v1997, 128
    %2189 = vxpose.xlu0.b32.cont [12/16] %v2001, 128
    %2190 = vxpose.xlu0.b32.cont [13/16] %v2005, 128
    %2191 = vxpose.xlu0.b32.cont [14/16] %v2009, 128
    %2192 = vxpose.xlu0.b32.cont [15/16] %v2013, 128
    %2193 = vxpose.xlu0.b32.end [16/16] %v2017, 128
    %v2194 = vpop.trf.xlu0
    %v2195 = vpop.trf.xlu0
    %v2196 = vpop.trf.xlu0
    %v2197 = vpop.trf.xlu0
    %v2198 = vpop.trf.xlu0
    %v2199 = vpop.trf.xlu0
    %v2200 = vpop.trf.xlu0
    %v2201 = vpop.trf.xlu0
    %v2202 = vpop.trf.xlu0
    %v2203 = vpop.trf.xlu0
    %v2204 = vpop.trf.xlu0
    %v2205 = vpop.trf.xlu0
    %v2206 = vpop.trf.xlu0
    %v2207 = vpop.trf.xlu0
    %v2208 = vpop.trf.xlu0
    %v2209 = vpop.trf.xlu0
    %2210 = vxpose.xlu0.b32.start [1/16] %v2018, 128
    %2211 = vxpose.xlu0.b32.cont [2/16] %v2022, 128
    %2212 = vxpose.xlu0.b32.cont [3/16] %v2026, 128
    %2213 = vxpose.xlu0.b32.cont [4/16] %v2030, 128
    %2214 = vxpose.xlu0.b32.cont [5/16] %v2034, 128
    %2215 = vxpose.xlu0.b32.cont [6/16] %v2038, 128
    %2216 = vxpose.xlu0.b32.cont [7/16] %v2042, 128
    %2217 = vxpose.xlu0.b32.cont [8/16] %v2046, 128
    %2218 = vxpose.xlu0.b32.cont [9/16] %v2050, 128
    %2219 = vxpose.xlu0.b32.cont [10/16] %v2054, 128
    %2220 = vxpose.xlu0.b32.cont [11/16] %v2058, 128
    %2221 = vxpose.xlu0.b32.cont [12/16] %v2062, 128
    %2222 = vxpose.xlu0.b32.cont [13/16] %v2066, 128
    %2223 = vxpose.xlu0.b32.cont [14/16] %v2070, 128
    %2224 = vxpose.xlu0.b32.cont [15/16] %v2074, 128
    %2225 = vxpose.xlu0.b32.end [16/16] %v2078, 128
    %v2226 = vpop.trf.xlu0
    %v2227 = vpop.trf.xlu0
    %v2228 = vpop.trf.xlu0
    %v2229 = vpop.trf.xlu0
    %v2230 = vpop.trf.xlu0
    %v2231 = vpop.trf.xlu0
    %v2232 = vpop.trf.xlu0
    %v2233 = vpop.trf.xlu0
    %v2234 = vpop.trf.xlu0
    %v2235 = vpop.trf.xlu0
    %v2236 = vpop.trf.xlu0
    %v2237 = vpop.trf.xlu0
    %v2238 = vpop.trf.xlu0
    %v2239 = vpop.trf.xlu0
    %v2240 = vpop.trf.xlu0
    %v2241 = vpop.trf.xlu0
    %2242 = vxpose.xlu0.b32.start [1/16] %v2019, 128
    %2243 = vxpose.xlu0.b32.cont [2/16] %v2023, 128
    %2244 = vxpose.xlu0.b32.cont [3/16] %v2027, 128
    %2245 = vxpose.xlu0.b32.cont [4/16] %v2031, 128
    %2246 = vxpose.xlu0.b32.cont [5/16] %v2035, 128
    %2247 = vxpose.xlu0.b32.cont [6/16] %v2039, 128
    %2248 = vxpose.xlu0.b32.cont [7/16] %v2043, 128
    %2249 = vxpose.xlu0.b32.cont [8/16] %v2047, 128
    %2250 = vxpose.xlu0.b32.cont [9/16] %v2051, 128
    %2251 = vxpose.xlu0.b32.cont [10/16] %v2055, 128
    %2252 = vxpose.xlu0.b32.cont [11/16] %v2059, 128
    %2253 = vxpose.xlu0.b32.cont [12/16] %v2063, 128
    %2254 = vxpose.xlu0.b32.cont [13/16] %v2067, 128
    %2255 = vxpose.xlu0.b32.cont [14/16] %v2071, 128
    %2256 = vxpose.xlu0.b32.cont [15/16] %v2075, 128
    %2257 = vxpose.xlu0.b32.end [16/16] %v2079, 128
    %v2258 = vpop.trf.xlu0
    %v2259 = vpop.trf.xlu0
    %v2260 = vpop.trf.xlu0
    %v2261 = vpop.trf.xlu0
    %v2262 = vpop.trf.xlu0
    %v2263 = vpop.trf.xlu0
    %v2264 = vpop.trf.xlu0
    %v2265 = vpop.trf.xlu0
    %v2266 = vpop.trf.xlu0
    %v2267 = vpop.trf.xlu0
    %v2268 = vpop.trf.xlu0
    %v2269 = vpop.trf.xlu0
    %v2270 = vpop.trf.xlu0
    %v2271 = vpop.trf.xlu0
    %v2272 = vpop.trf.xlu0
    %v2273 = vpop.trf.xlu0
    %2274 = vxpose.xlu0.b32.start [1/16] %v2020, 128
    %2275 = vxpose.xlu0.b32.cont [2/16] %v2024, 128
    %2276 = vxpose.xlu0.b32.cont [3/16] %v2028, 128
    %2277 = vxpose.xlu0.b32.cont [4/16] %v2032, 128
    %2278 = vxpose.xlu0.b32.cont [5/16] %v2036, 128
    %2279 = vxpose.xlu0.b32.cont [6/16] %v2040, 128
    %2280 = vxpose.xlu0.b32.cont [7/16] %v2044, 128
    %2281 = vxpose.xlu0.b32.cont [8/16] %v2048, 128
    %2282 = vxpose.xlu0.b32.cont [9/16] %v2052, 128
    %2283 = vxpose.xlu0.b32.cont [10/16] %v2056, 128
    %2284 = vxpose.xlu0.b32.cont [11/16] %v2060, 128
    %2285 = vxpose.xlu0.b32.cont [12/16] %v2064, 128
    %2286 = vxpose.xlu0.b32.cont [13/16] %v2068, 128
    %2287 = vxpose.xlu0.b32.cont [14/16] %v2072, 128
    %2288 = vxpose.xlu0.b32.cont [15/16] %v2076, 128
    %2289 = vxpose.xlu0.b32.end [16/16] %v2080, 128
    %v2290 = vpop.trf.xlu0
    %v2291 = vpop.trf.xlu0
    %v2292 = vpop.trf.xlu0
    %v2293 = vpop.trf.xlu0
    %v2294 = vpop.trf.xlu0
    %v2295 = vpop.trf.xlu0
    %v2296 = vpop.trf.xlu0
    %v2297 = vpop.trf.xlu0
    %v2298 = vpop.trf.xlu0
    %v2299 = vpop.trf.xlu0
    %v2300 = vpop.trf.xlu0
    %v2301 = vpop.trf.xlu0
    %v2302 = vpop.trf.xlu0
    %v2303 = vpop.trf.xlu0
    %v2304 = vpop.trf.xlu0
    %v2305 = vpop.trf.xlu0
    %2306 = vxpose.xlu0.b32.start [1/16] %v2021, 128
    %2307 = vxpose.xlu0.b32.cont [2/16] %v2025, 128
    %2308 = vxpose.xlu0.b32.cont [3/16] %v2029, 128
    %2309 = vxpose.xlu0.b32.cont [4/16] %v2033, 128
    %2310 = vxpose.xlu0.b32.cont [5/16] %v2037, 128
    %2311 = vxpose.xlu0.b32.cont [6/16] %v2041, 128
    %2312 = vxpose.xlu0.b32.cont [7/16] %v2045, 128
    %2313 = vxpose.xlu0.b32.cont [8/16] %v2049, 128
    %2314 = vxpose.xlu0.b32.cont [9/16] %v2053, 128
    %2315 = vxpose.xlu0.b32.cont [10/16] %v2057, 128
    %2316 = vxpose.xlu0.b32.cont [11/16] %v2061, 128
    %2317 = vxpose.xlu0.b32.cont [12/16] %v2065, 128
    %2318 = vxpose.xlu0.b32.cont [13/16] %v2069, 128
    %2319 = vxpose.xlu0.b32.cont [14/16] %v2073, 128
    %2320 = vxpose.xlu0.b32.cont [15/16] %v2077, 128
    %2321 = vxpose.xlu0.b32.end [16/16] %v2081, 128
    %v2322 = vpop.trf.xlu0
    %v2323 = vpop.trf.xlu0
    %v2324 = vpop.trf.xlu0
    %v2325 = vpop.trf.xlu0
    %v2326 = vpop.trf.xlu0
    %v2327 = vpop.trf.xlu0
    %v2328 = vpop.trf.xlu0
    %v2329 = vpop.trf.xlu0
    %v2330 = vpop.trf.xlu0
    %v2331 = vpop.trf.xlu0
    %v2332 = vpop.trf.xlu0
    %v2333 = vpop.trf.xlu0
    %v2334 = vpop.trf.xlu0
    %v2335 = vpop.trf.xlu0
    %v2336 = vpop.trf.xlu0
    %v2337 = vpop.trf.xlu0
    %2338 = vmatpush.msra.mxu0 %v1937
    %2339 = vmatpush.msra.mxu0 %v1936
    %2340 = vmatpush.msra.mxu0 %v1935
    %2341 = vmatpush.msra.mxu0 %v1934
    %2342 = vmatpush.msra.mxu0 %v1933
    %2343 = vmatpush.msra.mxu0 %v1932
    %2344 = vmatpush.msra.mxu0 %v1931
    %2345 = vmatpush.msra.mxu0 %v1930
    %2346 = vmatpush.msra.mxu0 %v1929
    %2347 = vmatpush.msra.mxu0 %v1928
    %2348 = vmatpush.msra.mxu0 %v1927
    %2349 = vmatpush.msra.mxu0 %v1926
    %2350 = vmatpush.msra.mxu0 %v1925
    %2351 = vmatpush.msra.mxu0 %v1924
    %2352 = vmatpush.msra.mxu0 %v1923
    %2353 = vmatpush.msra.mxu0 %v1922
    %2354 = vmatmul.f32.gmra.mxu0 %v2098
    %v2355 = vpop.f32.mrf.mxu0
    %v2356 = vadd.f32 0.0, %v2355
    %2357 = vmatmul.f32.gmra.mxu0 %v2099
    %v2358 = vpop.f32.mrf.mxu0
    %v2359 = vadd.f32 0.0, %v2358
    %2360 = vmatmul.f32.gmra.mxu0 %v2100
    %v2361 = vpop.f32.mrf.mxu0
    %v2362 = vadd.f32 0.0, %v2361
    %2363 = vmatmul.f32.gmra.mxu0 %v2101
    %v2364 = vpop.f32.mrf.mxu0
    %v2365 = vadd.f32 0.0, %v2364
    %2366 = vmatmul.f32.gmra.mxu0 %v2102
    %v2367 = vpop.f32.mrf.mxu0
    %v2368 = vadd.f32 0.0, %v2367
    %2369 = vmatmul.f32.gmra.mxu0 %v2103
    %v2370 = vpop.f32.mrf.mxu0
    %v2371 = vadd.f32 0.0, %v2370
    %2372 = vmatmul.f32.gmra.mxu0 %v2104
    %v2373 = vpop.f32.mrf.mxu0
    %v2374 = vadd.f32 0.0, %v2373
    %2375 = vmatmul.f32.gmra.mxu0 %v2105
    %v2376 = vpop.f32.mrf.mxu0
    %v2377 = vadd.f32 0.0, %v2376
    %2378 = vmatmul.f32.gmra.mxu0 %v2106
    %v2379 = vpop.f32.mrf.mxu0
    %v2380 = vadd.f32 0.0, %v2379
    %2381 = vmatmul.f32.gmra.mxu0 %v2107
    %v2382 = vpop.f32.mrf.mxu0
    %v2383 = vadd.f32 0.0, %v2382
    %2384 = vmatmul.f32.gmra.mxu0 %v2108
    %v2385 = vpop.f32.mrf.mxu0
    %v2386 = vadd.f32 0.0, %v2385
    %2387 = vmatmul.f32.gmra.mxu0 %v2109
    %v2388 = vpop.f32.mrf.mxu0
    %v2389 = vadd.f32 0.0, %v2388
    %2390 = vmatmul.f32.gmra.mxu0 %v2110
    %v2391 = vpop.f32.mrf.mxu0
    %v2392 = vadd.f32 0.0, %v2391
    %2393 = vmatmul.f32.gmra.mxu0 %v2111
    %v2394 = vpop.f32.mrf.mxu0
    %v2395 = vadd.f32 0.0, %v2394
    %2396 = vmatmul.f32.gmra.mxu0 %v2112
    %v2397 = vpop.f32.mrf.mxu0
    %v2398 = vadd.f32 0.0, %v2397
    %2399 = vmatmul.f32.gmra.mxu0 %v2113
    %v2400 = vpop.f32.mrf.mxu0
    %v2401 = vadd.f32 0.0, %v2400
    %2402 = vmatmul.f32.gmra.mxu0 %v2130
    %v2403 = vpop.f32.mrf.mxu0
    %v2404 = vadd.f32 0.0, %v2403
    %2405 = vmatmul.f32.gmra.mxu0 %v2131
    %v2406 = vpop.f32.mrf.mxu0
    %v2407 = vadd.f32 0.0, %v2406
    %2408 = vmatmul.f32.gmra.mxu0 %v2132
    %v2409 = vpop.f32.mrf.mxu0
    %v2410 = vadd.f32 0.0, %v2409
    %2411 = vmatmul.f32.gmra.mxu0 %v2133
    %v2412 = vpop.f32.mrf.mxu0
    %v2413 = vadd.f32 0.0, %v2412
    %2414 = vmatmul.f32.gmra.mxu0 %v2134
    %v2415 = vpop.f32.mrf.mxu0
    %v2416 = vadd.f32 0.0, %v2415
    %2417 = vmatmul.f32.gmra.mxu0 %v2135
    %v2418 = vpop.f32.mrf.mxu0
    %v2419 = vadd.f32 0.0, %v2418
    %2420 = vmatmul.f32.gmra.mxu0 %v2136
    %v2421 = vpop.f32.mrf.mxu0
    %v2422 = vadd.f32 0.0, %v2421
    %2423 = vmatmul.f32.gmra.mxu0 %v2137
    %v2424 = vpop.f32.mrf.mxu0
    %v2425 = vadd.f32 0.0, %v2424
    %2426 = vmatmul.f32.gmra.mxu0 %v2138
    %v2427 = vpop.f32.mrf.mxu0
    %v2428 = vadd.f32 0.0, %v2427
    %2429 = vmatmul.f32.gmra.mxu0 %v2139
    %v2430 = vpop.f32.mrf.mxu0
    %v2431 = vadd.f32 0.0, %v2430
    %2432 = vmatmul.f32.gmra.mxu0 %v2140
    %v2433 = vpop.f32.mrf.mxu0
    %v2434 = vadd.f32 0.0, %v2433
    %2435 = vmatmul.f32.gmra.mxu0 %v2141
    %v2436 = vpop.f32.mrf.mxu0
    %v2437 = vadd.f32 0.0, %v2436
    %2438 = vmatmul.f32.gmra.mxu0 %v2142
    %v2439 = vpop.f32.mrf.mxu0
    %v2440 = vadd.f32 0.0, %v2439
    %2441 = vmatmul.f32.gmra.mxu0 %v2143
    %v2442 = vpop.f32.mrf.mxu0
    %v2443 = vadd.f32 0.0, %v2442
    %2444 = vmatmul.f32.gmra.mxu0 %v2144
    %v2445 = vpop.f32.mrf.mxu0
    %v2446 = vadd.f32 0.0, %v2445
    %2447 = vmatmul.f32.gmra.mxu0 %v2145
    %v2448 = vpop.f32.mrf.mxu0
    %v2449 = vadd.f32 0.0, %v2448
    %2450 = vmatmul.f32.gmra.mxu0 %v2162
    %v2451 = vpop.f32.mrf.mxu0
    %v2452 = vadd.f32 0.0, %v2451
    %2453 = vmatmul.f32.gmra.mxu0 %v2163
    %v2454 = vpop.f32.mrf.mxu0
    %v2455 = vadd.f32 0.0, %v2454
    %2456 = vmatmul.f32.gmra.mxu0 %v2164
    %v2457 = vpop.f32.mrf.mxu0
    %v2458 = vadd.f32 0.0, %v2457
    %2459 = vmatmul.f32.gmra.mxu0 %v2165
    %v2460 = vpop.f32.mrf.mxu0
    %v2461 = vadd.f32 0.0, %v2460
    %2462 = vmatmul.f32.gmra.mxu0 %v2166
    %v2463 = vpop.f32.mrf.mxu0
    %v2464 = vadd.f32 0.0, %v2463
    %2465 = vmatmul.f32.gmra.mxu0 %v2167
    %v2466 = vpop.f32.mrf.mxu0
    %v2467 = vadd.f32 0.0, %v2466
    %2468 = vmatmul.f32.gmra.mxu0 %v2168
    %v2469 = vpop.f32.mrf.mxu0
    %v2470 = vadd.f32 0.0, %v2469
    %2471 = vmatmul.f32.gmra.mxu0 %v2169
    %v2472 = vpop.f32.mrf.mxu0
    %v2473 = vadd.f32 0.0, %v2472
    %2474 = vmatmul.f32.gmra.mxu0 %v2170
    %v2475 = vpop.f32.mrf.mxu0
    %v2476 = vadd.f32 0.0, %v2475
    %2477 = vmatmul.f32.gmra.mxu0 %v2171
    %v2478 = vpop.f32.mrf.mxu0
    %v2479 = vadd.f32 0.0, %v2478
    %2480 = vmatmul.f32.gmra.mxu0 %v2172
    %v2481 = vpop.f32.mrf.mxu0
    %v2482 = vadd.f32 0.0, %v2481
    %2483 = vmatmul.f32.gmra.mxu0 %v2173
    %v2484 = vpop.f32.mrf.mxu0
    %v2485 = vadd.f32 0.0, %v2484
    %2486 = vmatmul.f32.gmra.mxu0 %v2174
    %v2487 = vpop.f32.mrf.mxu0
    %v2488 = vadd.f32 0.0, %v2487
    %2489 = vmatmul.f32.gmra.mxu0 %v2175
    %v2490 = vpop.f32.mrf.mxu0
    %v2491 = vadd.f32 0.0, %v2490
    %2492 = vmatmul.f32.gmra.mxu0 %v2176
    %v2493 = vpop.f32.mrf.mxu0
    %v2494 = vadd.f32 0.0, %v2493
    %2495 = vmatmul.f32.gmra.mxu0 %v2177
    %v2496 = vpop.f32.mrf.mxu0
    %v2497 = vadd.f32 0.0, %v2496
    %2498 = vmatmul.f32.gmra.mxu0 %v2194
    %v2499 = vpop.f32.mrf.mxu0
    %v2500 = vadd.f32 0.0, %v2499
    %2501 = vmatmul.f32.gmra.mxu0 %v2195
    %v2502 = vpop.f32.mrf.mxu0
    %v2503 = vadd.f32 0.0, %v2502
    %2504 = vmatmul.f32.gmra.mxu0 %v2196
    %v2505 = vpop.f32.mrf.mxu0
    %v2506 = vadd.f32 0.0, %v2505
    %2507 = vmatmul.f32.gmra.mxu0 %v2197
    %v2508 = vpop.f32.mrf.mxu0
    %v2509 = vadd.f32 0.0, %v2508
    %2510 = vmatmul.f32.gmra.mxu0 %v2198
    %v2511 = vpop.f32.mrf.mxu0
    %v2512 = vadd.f32 0.0, %v2511
    %2513 = vmatmul.f32.gmra.mxu0 %v2199
    %v2514 = vpop.f32.mrf.mxu0
    %v2515 = vadd.f32 0.0, %v2514
    %2516 = vmatmul.f32.gmra.mxu0 %v2200
    %v2517 = vpop.f32.mrf.mxu0
    %v2518 = vadd.f32 0.0, %v2517
    %2519 = vmatmul.f32.gmra.mxu0 %v2201
    %v2520 = vpop.f32.mrf.mxu0
    %v2521 = vadd.f32 0.0, %v2520
    %2522 = vmatmul.f32.gmra.mxu0 %v2202
    %v2523 = vpop.f32.mrf.mxu0
    %v2524 = vadd.f32 0.0, %v2523
    %2525 = vmatmul.f32.gmra.mxu0 %v2203
    %v2526 = vpop.f32.mrf.mxu0
    %v2527 = vadd.f32 0.0, %v2526
    %2528 = vmatmul.f32.gmra.mxu0 %v2204
    %v2529 = vpop.f32.mrf.mxu0
    %v2530 = vadd.f32 0.0, %v2529
    %2531 = vmatmul.f32.gmra.mxu0 %v2205
    %v2532 = vpop.f32.mrf.mxu0
    %v2533 = vadd.f32 0.0, %v2532
    %2534 = vmatmul.f32.gmra.mxu0 %v2206
    %v2535 = vpop.f32.mrf.mxu0
    %v2536 = vadd.f32 0.0, %v2535
    %2537 = vmatmul.f32.gmra.mxu0 %v2207
    %v2538 = vpop.f32.mrf.mxu0
    %v2539 = vadd.f32 0.0, %v2538
    %2540 = vmatmul.f32.gmra.mxu0 %v2208
    %v2541 = vpop.f32.mrf.mxu0
    %v2542 = vadd.f32 0.0, %v2541
    %2543 = vmatmul.f32.gmra.mxu0 %v2209
    %v2544 = vpop.f32.mrf.mxu0
    %v2545 = vadd.f32 0.0, %v2544
    %2546 = vdwg.mxu0
    %2547 = vmatpush.msra.mxu0 %v1953
    %2548 = vmatpush.msra.mxu0 %v1952
    %2549 = vmatpush.msra.mxu0 %v1951
    %2550 = vmatpush.msra.mxu0 %v1950
    %2551 = vmatpush.msra.mxu0 %v1949
    %2552 = vmatpush.msra.mxu0 %v1948
    %2553 = vmatpush.msra.mxu0 %v1947
    %2554 = vmatpush.msra.mxu0 %v1946
    %2555 = vmatpush.msra.mxu0 %v1945
    %2556 = vmatpush.msra.mxu0 %v1944
    %2557 = vmatpush.msra.mxu0 %v1943
    %2558 = vmatpush.msra.mxu0 %v1942
    %2559 = vmatpush.msra.mxu0 %v1941
    %2560 = vmatpush.msra.mxu0 %v1940
    %2561 = vmatpush.msra.mxu0 %v1939
    %2562 = vmatpush.msra.mxu0 %v1938
    %2563 = vmatmul.f32.gmra.mxu0 %v2226
    %v2564 = vpop.f32.mrf.mxu0
    %v2565 = vadd.f32 %v2356, %v2564
    %2566 = vmatmul.f32.gmra.mxu0 %v2227
    %v2567 = vpop.f32.mrf.mxu0
    %v2568 = vadd.f32 %v2359, %v2567
    %2569 = vmatmul.f32.gmra.mxu0 %v2228
    %v2570 = vpop.f32.mrf.mxu0
    %v2571 = vadd.f32 %v2362, %v2570
    %2572 = vmatmul.f32.gmra.mxu0 %v2229
    %v2573 = vpop.f32.mrf.mxu0
    %v2574 = vadd.f32 %v2365, %v2573
    %2575 = vmatmul.f32.gmra.mxu0 %v2230
    %v2576 = vpop.f32.mrf.mxu0
    %v2577 = vadd.f32 %v2368, %v2576
    %2578 = vmatmul.f32.gmra.mxu0 %v2231
    %v2579 = vpop.f32.mrf.mxu0
    %v2580 = vadd.f32 %v2371, %v2579
    %2581 = vmatmul.f32.gmra.mxu0 %v2232
    %v2582 = vpop.f32.mrf.mxu0
    %v2583 = vadd.f32 %v2374, %v2582
    %2584 = vmatmul.f32.gmra.mxu0 %v2233
    %v2585 = vpop.f32.mrf.mxu0
    %v2586 = vadd.f32 %v2377, %v2585
    %2587 = vmatmul.f32.gmra.mxu0 %v2234
    %v2588 = vpop.f32.mrf.mxu0
    %v2589 = vadd.f32 %v2380, %v2588
    %2590 = vmatmul.f32.gmra.mxu0 %v2235
    %v2591 = vpop.f32.mrf.mxu0
    %v2592 = vadd.f32 %v2383, %v2591
    %2593 = vmatmul.f32.gmra.mxu0 %v2236
    %v2594 = vpop.f32.mrf.mxu0
    %v2595 = vadd.f32 %v2386, %v2594
    %2596 = vmatmul.f32.gmra.mxu0 %v2237
    %v2597 = vpop.f32.mrf.mxu0
    %v2598 = vadd.f32 %v2389, %v2597
    %2599 = vmatmul.f32.gmra.mxu0 %v2238
    %v2600 = vpop.f32.mrf.mxu0
    %v2601 = vadd.f32 %v2392, %v2600
    %2602 = vmatmul.f32.gmra.mxu0 %v2239
    %v2603 = vpop.f32.mrf.mxu0
    %v2604 = vadd.f32 %v2395, %v2603
    %2605 = vmatmul.f32.gmra.mxu0 %v2240
    %v2606 = vpop.f32.mrf.mxu0
    %v2607 = vadd.f32 %v2398, %v2606
    %2608 = vmatmul.f32.gmra.mxu0 %v2241
    %v2609 = vpop.f32.mrf.mxu0
    %v2610 = vadd.f32 %v2401, %v2609
    %2611 = vmatmul.f32.gmra.mxu0 %v2258
    %v2612 = vpop.f32.mrf.mxu0
    %v2613 = vadd.f32 %v2404, %v2612
    %2614 = vmatmul.f32.gmra.mxu0 %v2259
    %v2615 = vpop.f32.mrf.mxu0
    %v2616 = vadd.f32 %v2407, %v2615
    %2617 = vmatmul.f32.gmra.mxu0 %v2260
    %v2618 = vpop.f32.mrf.mxu0
    %v2619 = vadd.f32 %v2410, %v2618
    %2620 = vmatmul.f32.gmra.mxu0 %v2261
    %v2621 = vpop.f32.mrf.mxu0
    %v2622 = vadd.f32 %v2413, %v2621
    %2623 = vmatmul.f32.gmra.mxu0 %v2262
    %v2624 = vpop.f32.mrf.mxu0
    %v2625 = vadd.f32 %v2416, %v2624
    %2626 = vmatmul.f32.gmra.mxu0 %v2263
    %v2627 = vpop.f32.mrf.mxu0
    %v2628 = vadd.f32 %v2419, %v2627
    %2629 = vmatmul.f32.gmra.mxu0 %v2264
    %v2630 = vpop.f32.mrf.mxu0
    %v2631 = vadd.f32 %v2422, %v2630
    %2632 = vmatmul.f32.gmra.mxu0 %v2265
    %v2633 = vpop.f32.mrf.mxu0
    %v2634 = vadd.f32 %v2425, %v2633
    %2635 = vmatmul.f32.gmra.mxu0 %v2266
    %v2636 = vpop.f32.mrf.mxu0
    %v2637 = vadd.f32 %v2428, %v2636
    %2638 = vmatmul.f32.gmra.mxu0 %v2267
    %v2639 = vpop.f32.mrf.mxu0
    %v2640 = vadd.f32 %v2431, %v2639
    %2641 = vmatmul.f32.gmra.mxu0 %v2268
    %v2642 = vpop.f32.mrf.mxu0
    %v2643 = vadd.f32 %v2434, %v2642
    %2644 = vmatmul.f32.gmra.mxu0 %v2269
    %v2645 = vpop.f32.mrf.mxu0
    %v2646 = vadd.f32 %v2437, %v2645
    %2647 = vmatmul.f32.gmra.mxu0 %v2270
    %v2648 = vpop.f32.mrf.mxu0
    %v2649 = vadd.f32 %v2440, %v2648
    %2650 = vmatmul.f32.gmra.mxu0 %v2271
    %v2651 = vpop.f32.mrf.mxu0
    %v2652 = vadd.f32 %v2443, %v2651
    %2653 = vmatmul.f32.gmra.mxu0 %v2272
    %v2654 = vpop.f32.mrf.mxu0
    %v2655 = vadd.f32 %v2446, %v2654
    %2656 = vmatmul.f32.gmra.mxu0 %v2273
    %v2657 = vpop.f32.mrf.mxu0
    %v2658 = vadd.f32 %v2449, %v2657
    %2659 = vmatmul.f32.gmra.mxu0 %v2290
    %v2660 = vpop.f32.mrf.mxu0
    %v2661 = vadd.f32 %v2452, %v2660
    %2662 = vmatmul.f32.gmra.mxu0 %v2291
    %v2663 = vpop.f32.mrf.mxu0
    %v2664 = vadd.f32 %v2455, %v2663
    %2665 = vmatmul.f32.gmra.mxu0 %v2292
    %v2666 = vpop.f32.mrf.mxu0
    %v2667 = vadd.f32 %v2458, %v2666
    %2668 = vmatmul.f32.gmra.mxu0 %v2293
    %v2669 = vpop.f32.mrf.mxu0
    %v2670 = vadd.f32 %v2461, %v2669
    %2671 = vmatmul.f32.gmra.mxu0 %v2294
    %v2672 = vpop.f32.mrf.mxu0
    %v2673 = vadd.f32 %v2464, %v2672
    %2674 = vmatmul.f32.gmra.mxu0 %v2295
    %v2675 = vpop.f32.mrf.mxu0
    %v2676 = vadd.f32 %v2467, %v2675
    %2677 = vmatmul.f32.gmra.mxu0 %v2296
    %v2678 = vpop.f32.mrf.mxu0
    %v2679 = vadd.f32 %v2470, %v2678
    %2680 = vmatmul.f32.gmra.mxu0 %v2297
    %v2681 = vpop.f32.mrf.mxu0
    %v2682 = vadd.f32 %v2473, %v2681
    %2683 = vmatmul.f32.gmra.mxu0 %v2298
    %v2684 = vpop.f32.mrf.mxu0
    %v2685 = vadd.f32 %v2476, %v2684
    %2686 = vmatmul.f32.gmra.mxu0 %v2299
    %v2687 = vpop.f32.mrf.mxu0
    %v2688 = vadd.f32 %v2479, %v2687
    %2689 = vmatmul.f32.gmra.mxu0 %v2300
    %v2690 = vpop.f32.mrf.mxu0
    %v2691 = vadd.f32 %v2482, %v2690
    %2692 = vmatmul.f32.gmra.mxu0 %v2301
    %v2693 = vpop.f32.mrf.mxu0
    %v2694 = vadd.f32 %v2485, %v2693
    %2695 = vmatmul.f32.gmra.mxu0 %v2302
    %v2696 = vpop.f32.mrf.mxu0
    %v2697 = vadd.f32 %v2488, %v2696
    %2698 = vmatmul.f32.gmra.mxu0 %v2303
    %v2699 = vpop.f32.mrf.mxu0
    %v2700 = vadd.f32 %v2491, %v2699
    %2701 = vmatmul.f32.gmra.mxu0 %v2304
    %v2702 = vpop.f32.mrf.mxu0
    %v2703 = vadd.f32 %v2494, %v2702
    %2704 = vmatmul.f32.gmra.mxu0 %v2305
    %v2705 = vpop.f32.mrf.mxu0
    %v2706 = vadd.f32 %v2497, %v2705
    %2707 = vmatmul.f32.gmra.mxu0 %v2322
    %v2708 = vpop.f32.mrf.mxu0
    %v2709 = vadd.f32 %v2500, %v2708
    %2710 = vmatmul.f32.gmra.mxu0 %v2323
    %v2711 = vpop.f32.mrf.mxu0
    %v2712 = vadd.f32 %v2503, %v2711
    %2713 = vmatmul.f32.gmra.mxu0 %v2324
    %v2714 = vpop.f32.mrf.mxu0
    %v2715 = vadd.f32 %v2506, %v2714
    %2716 = vmatmul.f32.gmra.mxu0 %v2325
    %v2717 = vpop.f32.mrf.mxu0
    %v2718 = vadd.f32 %v2509, %v2717
    %2719 = vmatmul.f32.gmra.mxu0 %v2326
    %v2720 = vpop.f32.mrf.mxu0
    %v2721 = vadd.f32 %v2512, %v2720
    %2722 = vmatmul.f32.gmra.mxu0 %v2327
    %v2723 = vpop.f32.mrf.mxu0
    %v2724 = vadd.f32 %v2515, %v2723
    %2725 = vmatmul.f32.gmra.mxu0 %v2328
    %v2726 = vpop.f32.mrf.mxu0
    %v2727 = vadd.f32 %v2518, %v2726
    %2728 = vmatmul.f32.gmra.mxu0 %v2329
    %v2729 = vpop.f32.mrf.mxu0
    %v2730 = vadd.f32 %v2521, %v2729
    %2731 = vmatmul.f32.gmra.mxu0 %v2330
    %v2732 = vpop.f32.mrf.mxu0
    %v2733 = vadd.f32 %v2524, %v2732
    %2734 = vmatmul.f32.gmra.mxu0 %v2331
    %v2735 = vpop.f32.mrf.mxu0
    %v2736 = vadd.f32 %v2527, %v2735
    %2737 = vmatmul.f32.gmra.mxu0 %v2332
    %v2738 = vpop.f32.mrf.mxu0
    %v2739 = vadd.f32 %v2530, %v2738
    %2740 = vmatmul.f32.gmra.mxu0 %v2333
    %v2741 = vpop.f32.mrf.mxu0
    %v2742 = vadd.f32 %v2533, %v2741
    %2743 = vmatmul.f32.gmra.mxu0 %v2334
    %v2744 = vpop.f32.mrf.mxu0
    %v2745 = vadd.f32 %v2536, %v2744
    %2746 = vmatmul.f32.gmra.mxu0 %v2335
    %v2747 = vpop.f32.mrf.mxu0
    %v2748 = vadd.f32 %v2539, %v2747
    %2749 = vmatmul.f32.gmra.mxu0 %v2336
    %v2750 = vpop.f32.mrf.mxu0
    %v2751 = vadd.f32 %v2542, %v2750
    %2752 = vmatmul.f32.gmra.mxu0 %v2337
    %v2753 = vpop.f32.mrf.mxu0
    %v2754 = vadd.f32 %v2545, %v2753
    %2755 = vdwg.mxu0
    %v2757 = vsel %vm924, %v2565, 0
    %v2760 = vsel %vm924, %v2568, 0
    %v2763 = vsel %vm924, %v2571, 0
    %v2766 = vsel %vm924, %v2574, 0
    %v2769 = vsel %vm924, %v2577, 0
    %v2772 = vsel %vm924, %v2580, 0
    %v2775 = vsel %vm924, %v2583, 0
    %v2778 = vsel %vm924, %v2586, 0
    %v2781 = vsel %vm924, %v2589, 0
    %v2784 = vsel %vm924, %v2592, 0
    %v2787 = vsel %vm924, %v2595, 0
    %v2790 = vsel %vm924, %v2598, 0
    %v2793 = vsel %vm924, %v2601, 0
    %v2796 = vsel %vm924, %v2604, 0
    %v2799 = vsel %vm924, %v2607, 0
    %v2802 = vsel %vm924, %v2610, 0
    %v2805 = vsel %vm924, %v2613, 0
    %v2808 = vsel %vm924, %v2616, 0
    %v2811 = vsel %vm924, %v2619, 0
    %v2814 = vsel %vm924, %v2622, 0
    %v2817 = vsel %vm924, %v2625, 0
    %v2820 = vsel %vm924, %v2628, 0
    %v2823 = vsel %vm924, %v2631, 0
    %v2826 = vsel %vm924, %v2634, 0
    %v2829 = vsel %vm924, %v2637, 0
    %v2832 = vsel %vm924, %v2640, 0
    %v2835 = vsel %vm924, %v2643, 0
    %v2838 = vsel %vm924, %v2646, 0
    %v2841 = vsel %vm924, %v2649, 0
    %v2844 = vsel %vm924, %v2652, 0
    %v2847 = vsel %vm924, %v2655, 0
    %v2850 = vsel %vm924, %v2658, 0
    %v2853 = vsel %vm924, %v2661, 0
    %v2856 = vsel %vm924, %v2664, 0
    %v2859 = vsel %vm924, %v2667, 0
    %v2862 = vsel %vm924, %v2670, 0
    %v2865 = vsel %vm924, %v2673, 0
    %v2868 = vsel %vm924, %v2676, 0
    %v2871 = vsel %vm924, %v2679, 0
    %v2874 = vsel %vm924, %v2682, 0
    %v2877 = vsel %vm924, %v2685, 0
    %v2880 = vsel %vm924, %v2688, 0
    %v2883 = vsel %vm924, %v2691, 0
    %v2886 = vsel %vm924, %v2694, 0
    %v2889 = vsel %vm924, %v2697, 0
    %v2892 = vsel %vm924, %v2700, 0
    %v2895 = vsel %vm924, %v2703, 0
    %v2898 = vsel %vm924, %v2706, 0
    %v2901 = vsel %vm924, %v2709, 0
    %v2904 = vsel %vm924, %v2712, 0
    %v2907 = vsel %vm924, %v2715, 0
    %v2910 = vsel %vm924, %v2718, 0
    %v2913 = vsel %vm924, %v2721, 0
    %v2916 = vsel %vm924, %v2724, 0
    %v2919 = vsel %vm924, %v2727, 0
    %v2922 = vsel %vm924, %v2730, 0
    %v2925 = vsel %vm924, %v2733, 0
    %v2928 = vsel %vm924, %v2736, 0
    %v2931 = vsel %vm924, %v2739, 0
    %v2934 = vsel %vm924, %v2742, 0
    %v2937 = vsel %vm924, %v2745, 0
    %v2940 = vsel %vm924, %v2748, 0
    %v2943 = vsel %vm924, %v2751, 0
    %v2946 = vsel %vm924, %v2754, 0
    %2948 = vmatpush.msra.mxu0 0.0
    %2949 = vmatpush.msra.mxu0 0.0
    %2950 = vmatpush.msra.mxu0 0.0
    %2951 = vmatpush.msra.mxu0 0.0
    %2952 = vmatpush.msra.mxu0 0.0
    %2953 = vmatpush.msra.mxu0 0.0
    %2954 = vmatpush.msra.mxu0 0.0
    %2955 = vmatpush.msra.mxu0 0.0
    %2956 = vmatpush.msra.mxu0 0.0
    %2957 = vmatpush.msra.mxu0 0.0
    %2958 = vmatpush.msra.mxu0 0.0
    %2959 = vmatpush.msra.mxu0 0.0
    %2960 = vmatpush.msra.mxu0 %v93
    %2961 = vmatpush.msra.mxu0 %v92
    %2962 = vmatpush.msra.mxu0 %v91
    %2963 = vmatpush.msra.mxu0 %v90
    %2964 = vmatmul.f32.gmra.mxu0 %v2757
    %v2965 = vpop.f32.mrf.mxu0
    %v2966 = vadd.f32 0.0, %v2965
    %2967 = vmatmul.f32.gmra.mxu0 %v2760
    %v2968 = vpop.f32.mrf.mxu0
    %v2969 = vadd.f32 0.0, %v2968
    %2970 = vmatmul.f32.gmra.mxu0 %v2763
    %v2971 = vpop.f32.mrf.mxu0
    %v2972 = vadd.f32 0.0, %v2971
    %2973 = vmatmul.f32.gmra.mxu0 %v2766
    %v2974 = vpop.f32.mrf.mxu0
    %v2975 = vadd.f32 0.0, %v2974
    %2976 = vmatmul.f32.gmra.mxu0 %v2769
    %v2977 = vpop.f32.mrf.mxu0
    %v2978 = vadd.f32 0.0, %v2977
    %2979 = vmatmul.f32.gmra.mxu0 %v2772
    %v2980 = vpop.f32.mrf.mxu0
    %v2981 = vadd.f32 0.0, %v2980
    %2982 = vmatmul.f32.gmra.mxu0 %v2775
    %v2983 = vpop.f32.mrf.mxu0
    %v2984 = vadd.f32 0.0, %v2983
    %2985 = vmatmul.f32.gmra.mxu0 %v2778
    %v2986 = vpop.f32.mrf.mxu0
    %v2987 = vadd.f32 0.0, %v2986
    %2988 = vmatmul.f32.gmra.mxu0 %v2781
    %v2989 = vpop.f32.mrf.mxu0
    %v2990 = vadd.f32 0.0, %v2989
    %2991 = vmatmul.f32.gmra.mxu0 %v2784
    %v2992 = vpop.f32.mrf.mxu0
    %v2993 = vadd.f32 0.0, %v2992
    %2994 = vmatmul.f32.gmra.mxu0 %v2787
    %v2995 = vpop.f32.mrf.mxu0
    %v2996 = vadd.f32 0.0, %v2995
    %2997 = vmatmul.f32.gmra.mxu0 %v2790
    %v2998 = vpop.f32.mrf.mxu0
    %v2999 = vadd.f32 0.0, %v2998
    %3000 = vmatmul.f32.gmra.mxu0 %v2793
    %v3001 = vpop.f32.mrf.mxu0
    %v3002 = vadd.f32 0.0, %v3001
    %3003 = vmatmul.f32.gmra.mxu0 %v2796
    %v3004 = vpop.f32.mrf.mxu0
    %v3005 = vadd.f32 0.0, %v3004
    %3006 = vmatmul.f32.gmra.mxu0 %v2799
    %v3007 = vpop.f32.mrf.mxu0
    %v3008 = vadd.f32 0.0, %v3007
    %3009 = vmatmul.f32.gmra.mxu0 %v2802
    %v3010 = vpop.f32.mrf.mxu0
    %v3011 = vadd.f32 0.0, %v3010
    %3012 = vmatmul.f32.gmra.mxu0 %v2805
    %v3013 = vpop.f32.mrf.mxu0
    %v3014 = vadd.f32 0.0, %v3013
    %3015 = vmatmul.f32.gmra.mxu0 %v2808
    %v3016 = vpop.f32.mrf.mxu0
    %v3017 = vadd.f32 0.0, %v3016
    %3018 = vmatmul.f32.gmra.mxu0 %v2811
    %v3019 = vpop.f32.mrf.mxu0
    %v3020 = vadd.f32 0.0, %v3019
    %3021 = vmatmul.f32.gmra.mxu0 %v2814
    %v3022 = vpop.f32.mrf.mxu0
    %v3023 = vadd.f32 0.0, %v3022
    %3024 = vmatmul.f32.gmra.mxu0 %v2817
    %v3025 = vpop.f32.mrf.mxu0
    %v3026 = vadd.f32 0.0, %v3025
    %3027 = vmatmul.f32.gmra.mxu0 %v2820
    %v3028 = vpop.f32.mrf.mxu0
    %v3029 = vadd.f32 0.0, %v3028
    %3030 = vmatmul.f32.gmra.mxu0 %v2823
    %v3031 = vpop.f32.mrf.mxu0
    %v3032 = vadd.f32 0.0, %v3031
    %3033 = vmatmul.f32.gmra.mxu0 %v2826
    %v3034 = vpop.f32.mrf.mxu0
    %v3035 = vadd.f32 0.0, %v3034
    %3036 = vmatmul.f32.gmra.mxu0 %v2829
    %v3037 = vpop.f32.mrf.mxu0
    %v3038 = vadd.f32 0.0, %v3037
    %3039 = vmatmul.f32.gmra.mxu0 %v2832
    %v3040 = vpop.f32.mrf.mxu0
    %v3041 = vadd.f32 0.0, %v3040
    %3042 = vmatmul.f32.gmra.mxu0 %v2835
    %v3043 = vpop.f32.mrf.mxu0
    %v3044 = vadd.f32 0.0, %v3043
    %3045 = vmatmul.f32.gmra.mxu0 %v2838
    %v3046 = vpop.f32.mrf.mxu0
    %v3047 = vadd.f32 0.0, %v3046
    %3048 = vmatmul.f32.gmra.mxu0 %v2841
    %v3049 = vpop.f32.mrf.mxu0
    %v3050 = vadd.f32 0.0, %v3049
    %3051 = vmatmul.f32.gmra.mxu0 %v2844
    %v3052 = vpop.f32.mrf.mxu0
    %v3053 = vadd.f32 0.0, %v3052
    %3054 = vmatmul.f32.gmra.mxu0 %v2847
    %v3055 = vpop.f32.mrf.mxu0
    %v3056 = vadd.f32 0.0, %v3055
    %3057 = vmatmul.f32.gmra.mxu0 %v2850
    %v3058 = vpop.f32.mrf.mxu0
    %v3059 = vadd.f32 0.0, %v3058
    %3060 = vmatmul.f32.gmra.mxu0 %v2853
    %v3061 = vpop.f32.mrf.mxu0
    %v3062 = vadd.f32 0.0, %v3061
    %3063 = vmatmul.f32.gmra.mxu0 %v2856
    %v3064 = vpop.f32.mrf.mxu0
    %v3065 = vadd.f32 0.0, %v3064
    %3066 = vmatmul.f32.gmra.mxu0 %v2859
    %v3067 = vpop.f32.mrf.mxu0
    %v3068 = vadd.f32 0.0, %v3067
    %3069 = vmatmul.f32.gmra.mxu0 %v2862
    %v3070 = vpop.f32.mrf.mxu0
    %v3071 = vadd.f32 0.0, %v3070
    %3072 = vmatmul.f32.gmra.mxu0 %v2865
    %v3073 = vpop.f32.mrf.mxu0
    %v3074 = vadd.f32 0.0, %v3073
    %3075 = vmatmul.f32.gmra.mxu0 %v2868
    %v3076 = vpop.f32.mrf.mxu0
    %v3077 = vadd.f32 0.0, %v3076
    %3078 = vmatmul.f32.gmra.mxu0 %v2871
    %v3079 = vpop.f32.mrf.mxu0
    %v3080 = vadd.f32 0.0, %v3079
    %3081 = vmatmul.f32.gmra.mxu0 %v2874
    %v3082 = vpop.f32.mrf.mxu0
    %v3083 = vadd.f32 0.0, %v3082
    %3084 = vmatmul.f32.gmra.mxu0 %v2877
    %v3085 = vpop.f32.mrf.mxu0
    %v3086 = vadd.f32 0.0, %v3085
    %3087 = vmatmul.f32.gmra.mxu0 %v2880
    %v3088 = vpop.f32.mrf.mxu0
    %v3089 = vadd.f32 0.0, %v3088
    %3090 = vmatmul.f32.gmra.mxu0 %v2883
    %v3091 = vpop.f32.mrf.mxu0
    %v3092 = vadd.f32 0.0, %v3091
    %3093 = vmatmul.f32.gmra.mxu0 %v2886
    %v3094 = vpop.f32.mrf.mxu0
    %v3095 = vadd.f32 0.0, %v3094
    %3096 = vmatmul.f32.gmra.mxu0 %v2889
    %v3097 = vpop.f32.mrf.mxu0
    %v3098 = vadd.f32 0.0, %v3097
    %3099 = vmatmul.f32.gmra.mxu0 %v2892
    %v3100 = vpop.f32.mrf.mxu0
    %v3101 = vadd.f32 0.0, %v3100
    %3102 = vmatmul.f32.gmra.mxu0 %v2895
    %v3103 = vpop.f32.mrf.mxu0
    %v3104 = vadd.f32 0.0, %v3103
    %3105 = vmatmul.f32.gmra.mxu0 %v2898
    %v3106 = vpop.f32.mrf.mxu0
    %v3107 = vadd.f32 0.0, %v3106
    %3108 = vmatmul.f32.gmra.mxu0 %v2901
    %v3109 = vpop.f32.mrf.mxu0
    %v3110 = vadd.f32 0.0, %v3109
    %3111 = vmatmul.f32.gmra.mxu0 %v2904
    %v3112 = vpop.f32.mrf.mxu0
    %v3113 = vadd.f32 0.0, %v3112
    %3114 = vmatmul.f32.gmra.mxu0 %v2907
    %v3115 = vpop.f32.mrf.mxu0
    %v3116 = vadd.f32 0.0, %v3115
    %3117 = vmatmul.f32.gmra.mxu0 %v2910
    %v3118 = vpop.f32.mrf.mxu0
    %v3119 = vadd.f32 0.0, %v3118
    %3120 = vmatmul.f32.gmra.mxu0 %v2913
    %v3121 = vpop.f32.mrf.mxu0
    %v3122 = vadd.f32 0.0, %v3121
    %3123 = vmatmul.f32.gmra.mxu0 %v2916
    %v3124 = vpop.f32.mrf.mxu0
    %v3125 = vadd.f32 0.0, %v3124
    %3126 = vmatmul.f32.gmra.mxu0 %v2919
    %v3127 = vpop.f32.mrf.mxu0
    %v3128 = vadd.f32 0.0, %v3127
    %3129 = vmatmul.f32.gmra.mxu0 %v2922
    %v3130 = vpop.f32.mrf.mxu0
    %v3131 = vadd.f32 0.0, %v3130
    %3132 = vmatmul.f32.gmra.mxu0 %v2925
    %v3133 = vpop.f32.mrf.mxu0
    %v3134 = vadd.f32 0.0, %v3133
    %3135 = vmatmul.f32.gmra.mxu0 %v2928
    %v3136 = vpop.f32.mrf.mxu0
    %v3137 = vadd.f32 0.0, %v3136
    %3138 = vmatmul.f32.gmra.mxu0 %v2931
    %v3139 = vpop.f32.mrf.mxu0
    %v3140 = vadd.f32 0.0, %v3139
    %3141 = vmatmul.f32.gmra.mxu0 %v2934
    %v3142 = vpop.f32.mrf.mxu0
    %v3143 = vadd.f32 0.0, %v3142
    %3144 = vmatmul.f32.gmra.mxu0 %v2937
    %v3145 = vpop.f32.mrf.mxu0
    %v3146 = vadd.f32 0.0, %v3145
    %3147 = vmatmul.f32.gmra.mxu0 %v2940
    %v3148 = vpop.f32.mrf.mxu0
    %v3149 = vadd.f32 0.0, %v3148
    %3150 = vmatmul.f32.gmra.mxu0 %v2943
    %v3151 = vpop.f32.mrf.mxu0
    %v3152 = vadd.f32 0.0, %v3151
    %3153 = vmatmul.f32.gmra.mxu0 %v2946
    %v3154 = vpop.f32.mrf.mxu0
    %v3155 = vadd.f32 0.0, %v3154
    %3156 = vdwg.mxu0
    %3157 = vst [vmem:[#allocation4] sm:$0xff] 0.0
    %3158 = vst [vmem:[#allocation4 + $0x8] sm:$0xff] 0.0
    %3159 = vst [vmem:[#allocation4 + $0x10] sm:$0xff] 0.0
    %3160 = vst [vmem:[#allocation4 + $0x18] sm:$0xff] 0.0
    %3161 = vst [vmem:[#allocation4 + $0x20] sm:$0xff] 0.0
    %3162 = vst [vmem:[#allocation4 + $0x28] sm:$0xff] 0.0
    %3163 = vst [vmem:[#allocation4 + $0x30] sm:$0xff] 0.0
    %3164 = vst [vmem:[#allocation4 + $0x38] sm:$0xff] 0.0
    %3165 = vst [vmem:[#allocation4 + $0x40] sm:$0xff] 0.0
    %3166 = vst [vmem:[#allocation4 + $0x48] sm:$0xff] 0.0
    %3167 = vst [vmem:[#allocation4 + $0x50] sm:$0xff] 0.0
    %3168 = vst [vmem:[#allocation4 + $0x58] sm:$0xff] 0.0
    %3169 = vst [vmem:[#allocation4 + $0x60] sm:$0xff] 0.0
    %3170 = vst [vmem:[#allocation4 + $0x68] sm:$0xff] 0.0
    %3171 = vst [vmem:[#allocation4 + $0x70] sm:$0xff] 0.0
    %3172 = vst [vmem:[#allocation4 + $0x78] sm:$0xff] 0.0
    %3173 = vst [vmem:[#allocation4 + $0x80] sm:$0xff] 0.0
    %3174 = vst [vmem:[#allocation4 + $0x88] sm:$0xff] 0.0
    %3175 = vst [vmem:[#allocation4 + $0x90] sm:$0xff] 0.0
    %3176 = vst [vmem:[#allocation4 + $0x98] sm:$0xff] 0.0
    %3177 = vst [vmem:[#allocation4 + $0xa0] sm:$0xff] 0.0
    %3178 = vst [vmem:[#allocation4 + $0xa8] sm:$0xff] 0.0
    %3179 = vst [vmem:[#allocation4 + $0xb0] sm:$0xff] 0.0
    %3180 = vst [vmem:[#allocation4 + $0xb8] sm:$0xff] 0.0
    %3181 = vst [vmem:[#allocation4 + $0xc0] sm:$0xff] 0.0
    %3182 = vst [vmem:[#allocation4 + $0xc8] sm:$0xff] 0.0
    %3183 = vst [vmem:[#allocation4 + $0xd0] sm:$0xff] 0.0
    %3184 = vst [vmem:[#allocation4 + $0xd8] sm:$0xff] 0.0
    %3185 = vst [vmem:[#allocation4 + $0xe0] sm:$0xff] 0.0
    %3186 = vst [vmem:[#allocation4 + $0xe8] sm:$0xff] 0.0
    %3187 = vst [vmem:[#allocation4 + $0xf0] sm:$0xff] 0.0
    %3188 = vst [vmem:[#allocation4 + $0xf8] sm:$0xff] 0.0
    %3189 = vst [vmem:[#allocation4 + $0x100] sm:$0xff] 0.0
    %3190 = vst [vmem:[#allocation4 + $0x108] sm:$0xff] 0.0
    %3191 = vst [vmem:[#allocation4 + $0x110] sm:$0xff] 0.0
    %3192 = vst [vmem:[#allocation4 + $0x118] sm:$0xff] 0.0
    %3193 = vst [vmem:[#allocation4 + $0x120] sm:$0xff] 0.0
    %3194 = vst [vmem:[#allocation4 + $0x128] sm:$0xff] 0.0
    %3195 = vst [vmem:[#allocation4 + $0x130] sm:$0xff] 0.0
    %3196 = vst [vmem:[#allocation4 + $0x138] sm:$0xff] 0.0
    %3197 = vst [vmem:[#allocation4 + $0x140] sm:$0xff] 0.0
    %3198 = vst [vmem:[#allocation4 + $0x148] sm:$0xff] 0.0
    %3199 = vst [vmem:[#allocation4 + $0x150] sm:$0xff] 0.0
    %3200 = vst [vmem:[#allocation4 + $0x158] sm:$0xff] 0.0
    %3201 = vst [vmem:[#allocation4 + $0x160] sm:$0xff] 0.0
    %3202 = vst [vmem:[#allocation4 + $0x168] sm:$0xff] 0.0
    %3203 = vst [vmem:[#allocation4 + $0x170] sm:$0xff] 0.0
    %3204 = vst [vmem:[#allocation4 + $0x178] sm:$0xff] 0.0
    %3205 = vst [vmem:[#allocation4 + $0x180] sm:$0xff] 0.0
    %3206 = vst [vmem:[#allocation4 + $0x188] sm:$0xff] 0.0
    %3207 = vst [vmem:[#allocation4 + $0x190] sm:$0xff] 0.0
    %3208 = vst [vmem:[#allocation4 + $0x198] sm:$0xff] 0.0
    %3209 = vst [vmem:[#allocation4 + $0x1a0] sm:$0xff] 0.0
    %3210 = vst [vmem:[#allocation4 + $0x1a8] sm:$0xff] 0.0
    %3211 = vst [vmem:[#allocation4 + $0x1b0] sm:$0xff] 0.0
    %3212 = vst [vmem:[#allocation4 + $0x1b8] sm:$0xff] 0.0
    %3213 = vst [vmem:[#allocation4 + $0x1c0] sm:$0xff] 0.0
    %3214 = vst [vmem:[#allocation4 + $0x1c8] sm:$0xff] 0.0
    %3215 = vst [vmem:[#allocation4 + $0x1d0] sm:$0xff] 0.0
    %3216 = vst [vmem:[#allocation4 + $0x1d8] sm:$0xff] 0.0
    %3217 = vst [vmem:[#allocation4 + $0x1e0] sm:$0xff] 0.0
    %3218 = vst [vmem:[#allocation4 + $0x1e8] sm:$0xff] 0.0
    %3219 = vst [vmem:[#allocation4 + $0x1f0] sm:$0xff] 0.0
    %3220 = vst [vmem:[#allocation4 + $0x1f8] sm:$0xff] 0.0
    %3221 = vst [vmem:[#allocation4 + $0x200] sm:$0xff] 0.0
    %3222 = vst [vmem:[#allocation4 + $0x208] sm:$0xff] 0.0
    %3223 = vst [vmem:[#allocation4 + $0x210] sm:$0xff] 0.0
    %3224 = vst [vmem:[#allocation4 + $0x218] sm:$0xff] 0.0
    %3225 = vst [vmem:[#allocation4 + $0x220] sm:$0xff] 0.0
    %3226 = vst [vmem:[#allocation4 + $0x228] sm:$0xff] 0.0
    %3227 = vst [vmem:[#allocation4 + $0x230] sm:$0xff] 0.0
    %3228 = vst [vmem:[#allocation4 + $0x238] sm:$0xff] 0.0
    %3229 = vst [vmem:[#allocation4 + $0x240] sm:$0xff] 0.0
    %3230 = vst [vmem:[#allocation4 + $0x248] sm:$0xff] 0.0
    %3231 = vst [vmem:[#allocation4 + $0x250] sm:$0xff] 0.0
    %3232 = vst [vmem:[#allocation4 + $0x258] sm:$0xff] 0.0
    %3233 = vst [vmem:[#allocation4 + $0x260] sm:$0xff] 0.0
    %3234 = vst [vmem:[#allocation4 + $0x268] sm:$0xff] 0.0
    %3235 = vst [vmem:[#allocation4 + $0x270] sm:$0xff] 0.0
    %3236 = vst [vmem:[#allocation4 + $0x278] sm:$0xff] 0.0
    %3237 = vst [vmem:[#allocation4 + $0x280] sm:$0xff] 0.0
    %3238 = vst [vmem:[#allocation4 + $0x288] sm:$0xff] 0.0
    %3239 = vst [vmem:[#allocation4 + $0x290] sm:$0xff] 0.0
    %3240 = vst [vmem:[#allocation4 + $0x298] sm:$0xff] 0.0
    %3241 = vst [vmem:[#allocation4 + $0x2a0] sm:$0xff] 0.0
    %3242 = vst [vmem:[#allocation4 + $0x2a8] sm:$0xff] 0.0
    %3243 = vst [vmem:[#allocation4 + $0x2b0] sm:$0xff] 0.0
    %3244 = vst [vmem:[#allocation4 + $0x2b8] sm:$0xff] 0.0
    %3245 = vst [vmem:[#allocation4 + $0x2c0] sm:$0xff] 0.0
    %3246 = vst [vmem:[#allocation4 + $0x2c8] sm:$0xff] 0.0
    %3247 = vst [vmem:[#allocation4 + $0x2d0] sm:$0xff] 0.0
    %3248 = vst [vmem:[#allocation4 + $0x2d8] sm:$0xff] 0.0
    %3249 = vst [vmem:[#allocation4 + $0x2e0] sm:$0xff] 0.0
    %3250 = vst [vmem:[#allocation4 + $0x2e8] sm:$0xff] 0.0
    %3251 = vst [vmem:[#allocation4 + $0x2f0] sm:$0xff] 0.0
    %3252 = vst [vmem:[#allocation4 + $0x2f8] sm:$0xff] 0.0
    %3253 = vst [vmem:[#allocation4 + $0x300] sm:$0xff] 0.0
    %3254 = vst [vmem:[#allocation4 + $0x308] sm:$0xff] 0.0
    %3255 = vst [vmem:[#allocation4 + $0x310] sm:$0xff] 0.0
    %3256 = vst [vmem:[#allocation4 + $0x318] sm:$0xff] 0.0
    %3257 = vst [vmem:[#allocation4 + $0x320] sm:$0xff] 0.0
    %3258 = vst [vmem:[#allocation4 + $0x328] sm:$0xff] 0.0
    %3259 = vst [vmem:[#allocation4 + $0x330] sm:$0xff] 0.0
    %3260 = vst [vmem:[#allocation4 + $0x338] sm:$0xff] 0.0
    %3261 = vst [vmem:[#allocation4 + $0x340] sm:$0xff] 0.0
    %3262 = vst [vmem:[#allocation4 + $0x348] sm:$0xff] 0.0
    %3263 = vst [vmem:[#allocation4 + $0x350] sm:$0xff] 0.0
    %3264 = vst [vmem:[#allocation4 + $0x358] sm:$0xff] 0.0
    %3265 = vst [vmem:[#allocation4 + $0x360] sm:$0xff] 0.0
    %3266 = vst [vmem:[#allocation4 + $0x368] sm:$0xff] 0.0
    %3267 = vst [vmem:[#allocation4 + $0x370] sm:$0xff] 0.0
    %3268 = vst [vmem:[#allocation4 + $0x378] sm:$0xff] 0.0
    %3269 = vst [vmem:[#allocation4 + $0x380] sm:$0xff] 0.0
    %3270 = vst [vmem:[#allocation4 + $0x388] sm:$0xff] 0.0
    %3271 = vst [vmem:[#allocation4 + $0x390] sm:$0xff] 0.0
    %3272 = vst [vmem:[#allocation4 + $0x398] sm:$0xff] 0.0
    %3273 = vst [vmem:[#allocation4 + $0x3a0] sm:$0xff] 0.0
    %3274 = vst [vmem:[#allocation4 + $0x3a8] sm:$0xff] 0.0
    %3275 = vst [vmem:[#allocation4 + $0x3b0] sm:$0xff] 0.0
    %3276 = vst [vmem:[#allocation4 + $0x3b8] sm:$0xff] 0.0
    %3277 = vst [vmem:[#allocation4 + $0x3c0] sm:$0xff] 0.0
    %3278 = vst [vmem:[#allocation4 + $0x3c8] sm:$0xff] 0.0
    %3279 = vst [vmem:[#allocation4 + $0x3d0] sm:$0xff] 0.0
    %3280 = vst [vmem:[#allocation4 + $0x3d8] sm:$0xff] 0.0
    %3281 = vst [vmem:[#allocation4 + $0x3e0] sm:$0xff] 0.0
    %3282 = vst [vmem:[#allocation4 + $0x3e8] sm:$0xff] 0.0
    %3283 = vst [vmem:[#allocation4 + $0x3f0] sm:$0xff] 0.0
    %3284 = vst [vmem:[#allocation4 + $0x3f8] sm:$0xff] 0.0
    %3285 = vst [vmem:[#allocation4 + $0x400] sm:$0xff] 0.0
    %3286 = vst [vmem:[#allocation4 + $0x408] sm:$0xff] 0.0
    %3287 = vst [vmem:[#allocation4 + $0x410] sm:$0xff] 0.0
    %3288 = vst [vmem:[#allocation4 + $0x418] sm:$0xff] 0.0
    %3289 = vst [vmem:[#allocation4 + $0x420] sm:$0xff] 0.0
    %3290 = vst [vmem:[#allocation4 + $0x428] sm:$0xff] 0.0
    %3291 = vst [vmem:[#allocation4 + $0x430] sm:$0xff] 0.0
    %3292 = vst [vmem:[#allocation4 + $0x438] sm:$0xff] 0.0
    %3293 = vst [vmem:[#allocation4 + $0x440] sm:$0xff] 0.0
    %3294 = vst [vmem:[#allocation4 + $0x448] sm:$0xff] 0.0
    %3295 = vst [vmem:[#allocation4 + $0x450] sm:$0xff] 0.0
    %3296 = vst [vmem:[#allocation4 + $0x458] sm:$0xff] 0.0
    %3297 = vst [vmem:[#allocation4 + $0x460] sm:$0xff] 0.0
    %3298 = vst [vmem:[#allocation4 + $0x468] sm:$0xff] 0.0
    %3299 = vst [vmem:[#allocation4 + $0x470] sm:$0xff] 0.0
    %3300 = vst [vmem:[#allocation4 + $0x478] sm:$0xff] 0.0
    %3301 = vst [vmem:[#allocation4 + $0x480] sm:$0xff] 0.0
    %3302 = vst [vmem:[#allocation4 + $0x488] sm:$0xff] 0.0
    %3303 = vst [vmem:[#allocation4 + $0x490] sm:$0xff] 0.0
    %3304 = vst [vmem:[#allocation4 + $0x498] sm:$0xff] 0.0
    %3305 = vst [vmem:[#allocation4 + $0x4a0] sm:$0xff] 0.0
    %3306 = vst [vmem:[#allocation4 + $0x4a8] sm:$0xff] 0.0
    %3307 = vst [vmem:[#allocation4 + $0x4b0] sm:$0xff] 0.0
    %3308 = vst [vmem:[#allocation4 + $0x4b8] sm:$0xff] 0.0
    %3309 = vst [vmem:[#allocation4 + $0x4c0] sm:$0xff] 0.0
    %3310 = vst [vmem:[#allocation4 + $0x4c8] sm:$0xff] 0.0
    %3311 = vst [vmem:[#allocation4 + $0x4d0] sm:$0xff] 0.0
    %3312 = vst [vmem:[#allocation4 + $0x4d8] sm:$0xff] 0.0
    %3313 = vst [vmem:[#allocation4 + $0x4e0] sm:$0xff] 0.0
    %3314 = vst [vmem:[#allocation4 + $0x4e8] sm:$0xff] 0.0
    %3315 = vst [vmem:[#allocation4 + $0x4f0] sm:$0xff] 0.0
    %3316 = vst [vmem:[#allocation4 + $0x4f8] sm:$0xff] 0.0
    %3317 = vst [vmem:[#allocation4 + $0x500] sm:$0xff] 0.0
    %3318 = vst [vmem:[#allocation4 + $0x508] sm:$0xff] 0.0
    %3319 = vst [vmem:[#allocation4 + $0x510] sm:$0xff] 0.0
    %3320 = vst [vmem:[#allocation4 + $0x518] sm:$0xff] 0.0
    %3321 = vst [vmem:[#allocation4 + $0x520] sm:$0xff] 0.0
    %3322 = vst [vmem:[#allocation4 + $0x528] sm:$0xff] 0.0
    %3323 = vst [vmem:[#allocation4 + $0x530] sm:$0xff] 0.0
    %3324 = vst [vmem:[#allocation4 + $0x538] sm:$0xff] 0.0
    %3325 = vst [vmem:[#allocation4 + $0x540] sm:$0xff] 0.0
    %3326 = vst [vmem:[#allocation4 + $0x548] sm:$0xff] 0.0
    %3327 = vst [vmem:[#allocation4 + $0x550] sm:$0xff] 0.0
    %3328 = vst [vmem:[#allocation4 + $0x558] sm:$0xff] 0.0
    %3329 = vst [vmem:[#allocation4 + $0x560] sm:$0xff] 0.0
    %3330 = vst [vmem:[#allocation4 + $0x568] sm:$0xff] 0.0
    %3331 = vst [vmem:[#allocation4 + $0x570] sm:$0xff] 0.0
    %3332 = vst [vmem:[#allocation4 + $0x578] sm:$0xff] 0.0
    %3333 = vst [vmem:[#allocation4 + $0x580] sm:$0xff] 0.0
    %3334 = vst [vmem:[#allocation4 + $0x588] sm:$0xff] 0.0
    %3335 = vst [vmem:[#allocation4 + $0x590] sm:$0xff] 0.0
    %3336 = vst [vmem:[#allocation4 + $0x598] sm:$0xff] 0.0
    %3337 = vst [vmem:[#allocation4 + $0x5a0] sm:$0xff] 0.0
    %3338 = vst [vmem:[#allocation4 + $0x5a8] sm:$0xff] 0.0
    %3339 = vst [vmem:[#allocation4 + $0x5b0] sm:$0xff] 0.0
    %3340 = vst [vmem:[#allocation4 + $0x5b8] sm:$0xff] 0.0
    %3341 = vst [vmem:[#allocation4 + $0x5c0] sm:$0xff] 0.0
    %3342 = vst [vmem:[#allocation4 + $0x5c8] sm:$0xff] 0.0
    %3343 = vst [vmem:[#allocation4 + $0x5d0] sm:$0xff] 0.0
    %3344 = vst [vmem:[#allocation4 + $0x5d8] sm:$0xff] 0.0
    %3345 = vst [vmem:[#allocation4 + $0x5e0] sm:$0xff] 0.0
    %3346 = vst [vmem:[#allocation4 + $0x5e8] sm:$0xff] 0.0
    %3347 = vst [vmem:[#allocation4 + $0x5f0] sm:$0xff] 0.0
    %3348 = vst [vmem:[#allocation4 + $0x5f8] sm:$0xff] 0.0
    %3349 = vst [vmem:[#allocation4 + $0x600] sm:$0xff] 0.0
    %3350 = vst [vmem:[#allocation4 + $0x608] sm:$0xff] 0.0
    %3351 = vst [vmem:[#allocation4 + $0x610] sm:$0xff] 0.0
    %3352 = vst [vmem:[#allocation4 + $0x618] sm:$0xff] 0.0
    %3353 = vst [vmem:[#allocation4 + $0x620] sm:$0xff] 0.0
    %3354 = vst [vmem:[#allocation4 + $0x628] sm:$0xff] 0.0
    %3355 = vst [vmem:[#allocation4 + $0x630] sm:$0xff] 0.0
    %3356 = vst [vmem:[#allocation4 + $0x638] sm:$0xff] 0.0
    %3357 = vst [vmem:[#allocation4 + $0x640] sm:$0xff] 0.0
    %3358 = vst [vmem:[#allocation4 + $0x648] sm:$0xff] 0.0
    %3359 = vst [vmem:[#allocation4 + $0x650] sm:$0xff] 0.0
    %3360 = vst [vmem:[#allocation4 + $0x658] sm:$0xff] 0.0
    %3361 = vst [vmem:[#allocation4 + $0x660] sm:$0xff] 0.0
    %3362 = vst [vmem:[#allocation4 + $0x668] sm:$0xff] 0.0
    %3363 = vst [vmem:[#allocation4 + $0x670] sm:$0xff] 0.0
    %3364 = vst [vmem:[#allocation4 + $0x678] sm:$0xff] 0.0
    %3365 = vst [vmem:[#allocation4 + $0x680] sm:$0xff] 0.0
    %3366 = vst [vmem:[#allocation4 + $0x688] sm:$0xff] 0.0
    %3367 = vst [vmem:[#allocation4 + $0x690] sm:$0xff] 0.0
    %3368 = vst [vmem:[#allocation4 + $0x698] sm:$0xff] 0.0
    %3369 = vst [vmem:[#allocation4 + $0x6a0] sm:$0xff] 0.0
    %3370 = vst [vmem:[#allocation4 + $0x6a8] sm:$0xff] 0.0
    %3371 = vst [vmem:[#allocation4 + $0x6b0] sm:$0xff] 0.0
    %3372 = vst [vmem:[#allocation4 + $0x6b8] sm:$0xff] 0.0
    %3373 = vst [vmem:[#allocation4 + $0x6c0] sm:$0xff] 0.0
    %3374 = vst [vmem:[#allocation4 + $0x6c8] sm:$0xff] 0.0
    %3375 = vst [vmem:[#allocation4 + $0x6d0] sm:$0xff] 0.0
    %3376 = vst [vmem:[#allocation4 + $0x6d8] sm:$0xff] 0.0
    %3377 = vst [vmem:[#allocation4 + $0x6e0] sm:$0xff] 0.0
    %3378 = vst [vmem:[#allocation4 + $0x6e8] sm:$0xff] 0.0
    %3379 = vst [vmem:[#allocation4 + $0x6f0] sm:$0xff] 0.0
    %3380 = vst [vmem:[#allocation4 + $0x6f8] sm:$0xff] 0.0
    %3381 = vst [vmem:[#allocation4 + $0x700] sm:$0xff] 0.0
    %3382 = vst [vmem:[#allocation4 + $0x708] sm:$0xff] 0.0
    %3383 = vst [vmem:[#allocation4 + $0x710] sm:$0xff] 0.0
    %3384 = vst [vmem:[#allocation4 + $0x718] sm:$0xff] 0.0
    %3385 = vst [vmem:[#allocation4 + $0x720] sm:$0xff] 0.0
    %3386 = vst [vmem:[#allocation4 + $0x728] sm:$0xff] 0.0
    %3387 = vst [vmem:[#allocation4 + $0x730] sm:$0xff] 0.0
    %3388 = vst [vmem:[#allocation4 + $0x738] sm:$0xff] 0.0
    %3389 = vst [vmem:[#allocation4 + $0x740] sm:$0xff] 0.0
    %3390 = vst [vmem:[#allocation4 + $0x748] sm:$0xff] 0.0
    %3391 = vst [vmem:[#allocation4 + $0x750] sm:$0xff] 0.0
    %3392 = vst [vmem:[#allocation4 + $0x758] sm:$0xff] 0.0
    %3393 = vst [vmem:[#allocation4 + $0x760] sm:$0xff] 0.0
    %3394 = vst [vmem:[#allocation4 + $0x768] sm:$0xff] 0.0
    %3395 = vst [vmem:[#allocation4 + $0x770] sm:$0xff] 0.0
    %3396 = vst [vmem:[#allocation4 + $0x778] sm:$0xff] 0.0
    %3397 = vst [vmem:[#allocation4 + $0x780] sm:$0xff] 0.0
    %3398 = vst [vmem:[#allocation4 + $0x788] sm:$0xff] 0.0
    %3399 = vst [vmem:[#allocation4 + $0x790] sm:$0xff] 0.0
    %3400 = vst [vmem:[#allocation4 + $0x798] sm:$0xff] 0.0
    %3401 = vst [vmem:[#allocation4 + $0x7a0] sm:$0xff] 0.0
    %3402 = vst [vmem:[#allocation4 + $0x7a8] sm:$0xff] 0.0
    %3403 = vst [vmem:[#allocation4 + $0x7b0] sm:$0xff] 0.0
    %3404 = vst [vmem:[#allocation4 + $0x7b8] sm:$0xff] 0.0
    %3405 = vst [vmem:[#allocation4 + $0x7c0] sm:$0xff] 0.0
    %3406 = vst [vmem:[#allocation4 + $0x7c8] sm:$0xff] 0.0
    %3407 = vst [vmem:[#allocation4 + $0x7d0] sm:$0xff] 0.0
    %3408 = vst [vmem:[#allocation4 + $0x7d8] sm:$0xff] 0.0
    %3409 = vst [vmem:[#allocation4 + $0x7e0] sm:$0xff] 0.0
    %3410 = vst [vmem:[#allocation4 + $0x7e8] sm:$0xff] 0.0
    %3411 = vst [vmem:[#allocation4 + $0x7f0] sm:$0xff] 0.0
    %3412 = vst [vmem:[#allocation4 + $0x7f8] sm:$0xff] 0.0
    %3413 = vrot.lane.b32.xlu0 %v2565, 96
    %v3414 = vpop.permute.xlu0 %3413
    %3415 = vrot.lane.b32.xlu0 %v2568, 96
    %v3416 = vpop.permute.xlu0 %3415
    %3417 = vrot.lane.b32.xlu0 %v2571, 96
    %v3418 = vpop.permute.xlu0 %3417
    %3419 = vrot.lane.b32.xlu0 %v2574, 96
    %v3420 = vpop.permute.xlu0 %3419
    %3425 = vst.msk [vmem:[#allocation4] sm:$0xff] %vm924, %v3414
    %3426 = vst.msk [vmem:[#allocation4 + $0x20] sm:$0xff] %vm924, %v3416
    %3427 = vst.msk [vmem:[#allocation4 + $0x40] sm:$0xff] %vm924, %v3418
    %3428 = vst.msk [vmem:[#allocation4 + $0x60] sm:$0xff] %vm924, %v3420
    %3429 = vst.msk [vmem:[#allocation4 + $0x80] sm:$0xff] %vm1673, %v2577
    %3430 = vst.msk [vmem:[#allocation4 + $0xa0] sm:$0xff] %vm1673, %v2580
    %3431 = vst.msk [vmem:[#allocation4 + $0xc0] sm:$0xff] %vm1673, %v2583
    %3432 = vst.msk [vmem:[#allocation4 + $0xe0] sm:$0xff] %vm1673, %v2586
    %3433 = vrot.lane.b32.xlu0 %v2589, 32
    %v3434 = vpop.permute.xlu0 %3433
    %3435 = vrot.lane.b32.xlu0 %v2592, 32
    %v3436 = vpop.permute.xlu0 %3435
    %3437 = vrot.lane.b32.xlu0 %v2595, 32
    %v3438 = vpop.permute.xlu0 %3437
    %3439 = vrot.lane.b32.xlu0 %v2598, 32
    %v3440 = vpop.permute.xlu0 %3439
    %3445 = vst.msk [vmem:[#allocation4 + $0x100] sm:$0xff] %vm1684, %v3434
    %3446 = vst.msk [vmem:[#allocation4 + $0x120] sm:$0xff] %vm1684, %v3436
    %3447 = vst.msk [vmem:[#allocation4 + $0x140] sm:$0xff] %vm1684, %v3438
    %3448 = vst.msk [vmem:[#allocation4 + $0x160] sm:$0xff] %vm1684, %v3440
    %3449 = vrot.lane.b32.xlu0 %v2601, 64
    %v3450 = vpop.permute.xlu0 %3449
    %3451 = vrot.lane.b32.xlu0 %v2604, 64
    %v3452 = vpop.permute.xlu0 %3451
    %3453 = vrot.lane.b32.xlu0 %v2607, 64
    %v3454 = vpop.permute.xlu0 %3453
    %3455 = vrot.lane.b32.xlu0 %v2610, 64
    %v3456 = vpop.permute.xlu0 %3455
    %3461 = vst.msk [vmem:[#allocation4 + $0x180] sm:$0xff] %vm1695, %v3450
    %3462 = vst.msk [vmem:[#allocation4 + $0x1a0] sm:$0xff] %vm1695, %v3452
    %3463 = vst.msk [vmem:[#allocation4 + $0x1c0] sm:$0xff] %vm1695, %v3454
    %3464 = vst.msk [vmem:[#allocation4 + $0x1e0] sm:$0xff] %vm1695, %v3456
    %3465 = vrot.lane.b32.xlu0 %v2613, 96
    %v3466 = vpop.permute.xlu0 %3465
    %3467 = vrot.lane.b32.xlu0 %v2616, 96
    %v3468 = vpop.permute.xlu0 %3467
    %3469 = vrot.lane.b32.xlu0 %v2619, 96
    %v3470 = vpop.permute.xlu0 %3469
    %3471 = vrot.lane.b32.xlu0 %v2622, 96
    %v3472 = vpop.permute.xlu0 %3471
    %3477 = vst.msk [vmem:[#allocation4 + $0x208] sm:$0xff] %vm924, %v3466
    %3478 = vst.msk [vmem:[#allocation4 + $0x228] sm:$0xff] %vm924, %v3468
    %3479 = vst.msk [vmem:[#allocation4 + $0x248] sm:$0xff] %vm924, %v3470
    %3480 = vst.msk [vmem:[#allocation4 + $0x268] sm:$0xff] %vm924, %v3472
    %3481 = vst.msk [vmem:[#allocation4 + $0x288] sm:$0xff] %vm1673, %v2625
    %3482 = vst.msk [vmem:[#allocation4 + $0x2a8] sm:$0xff] %vm1673, %v2628
    %3483 = vst.msk [vmem:[#allocation4 + $0x2c8] sm:$0xff] %vm1673, %v2631
    %3484 = vst.msk [vmem:[#allocation4 + $0x2e8] sm:$0xff] %vm1673, %v2634
    %3485 = vrot.lane.b32.xlu0 %v2637, 32
    %v3486 = vpop.permute.xlu0 %3485
    %3487 = vrot.lane.b32.xlu0 %v2640, 32
    %v3488 = vpop.permute.xlu0 %3487
    %3489 = vrot.lane.b32.xlu0 %v2643, 32
    %v3490 = vpop.permute.xlu0 %3489
    %3491 = vrot.lane.b32.xlu0 %v2646, 32
    %v3492 = vpop.permute.xlu0 %3491
    %3497 = vst.msk [vmem:[#allocation4 + $0x308] sm:$0xff] %vm1684, %v3486
    %3498 = vst.msk [vmem:[#allocation4 + $0x328] sm:$0xff] %vm1684, %v3488
    %3499 = vst.msk [vmem:[#allocation4 + $0x348] sm:$0xff] %vm1684, %v3490
    %3500 = vst.msk [vmem:[#allocation4 + $0x368] sm:$0xff] %vm1684, %v3492
    %3501 = vrot.lane.b32.xlu0 %v2649, 64
    %v3502 = vpop.permute.xlu0 %3501
    %3503 = vrot.lane.b32.xlu0 %v2652, 64
    %v3504 = vpop.permute.xlu0 %3503
    %3505 = vrot.lane.b32.xlu0 %v2655, 64
    %v3506 = vpop.permute.xlu0 %3505
    %3507 = vrot.lane.b32.xlu0 %v2658, 64
    %v3508 = vpop.permute.xlu0 %3507
    %3513 = vst.msk [vmem:[#allocation4 + $0x388] sm:$0xff] %vm1695, %v3502
    %3514 = vst.msk [vmem:[#allocation4 + $0x3a8] sm:$0xff] %vm1695, %v3504
    %3515 = vst.msk [vmem:[#allocation4 + $0x3c8] sm:$0xff] %vm1695, %v3506
    %3516 = vst.msk [vmem:[#allocation4 + $0x3e8] sm:$0xff] %vm1695, %v3508
    %3517 = vrot.lane.b32.xlu0 %v2661, 96
    %v3518 = vpop.permute.xlu0 %3517
    %3519 = vrot.lane.b32.xlu0 %v2664, 96
    %v3520 = vpop.permute.xlu0 %3519
    %3521 = vrot.lane.b32.xlu0 %v2667, 96
    %v3522 = vpop.permute.xlu0 %3521
    %3523 = vrot.lane.b32.xlu0 %v2670, 96
    %v3524 = vpop.permute.xlu0 %3523
    %3529 = vst.msk [vmem:[#allocation4 + $0x410] sm:$0xff] %vm924, %v3518
    %3530 = vst.msk [vmem:[#allocation4 + $0x430] sm:$0xff] %vm924, %v3520
    %3531 = vst.msk [vmem:[#allocation4 + $0x450] sm:$0xff] %vm924, %v3522
    %3532 = vst.msk [vmem:[#allocation4 + $0x470] sm:$0xff] %vm924, %v3524
    %3533 = vst.msk [vmem:[#allocation4 + $0x490] sm:$0xff] %vm1673, %v2673
    %3534 = vst.msk [vmem:[#allocation4 + $0x4b0] sm:$0xff] %vm1673, %v2676
    %3535 = vst.msk [vmem:[#allocation4 + $0x4d0] sm:$0xff] %vm1673, %v2679
    %3536 = vst.msk [vmem:[#allocation4 + $0x4f0] sm:$0xff] %vm1673, %v2682
    %3537 = vrot.lane.b32.xlu0 %v2685, 32
    %v3538 = vpop.permute.xlu0 %3537
    %3539 = vrot.lane.b32.xlu0 %v2688, 32
    %v3540 = vpop.permute.xlu0 %3539
    %3541 = vrot.lane.b32.xlu0 %v2691, 32
    %v3542 = vpop.permute.xlu0 %3541
    %3543 = vrot.lane.b32.xlu0 %v2694, 32
    %v3544 = vpop.permute.xlu0 %3543
    %3549 = vst.msk [vmem:[#allocation4 + $0x510] sm:$0xff] %vm1684, %v3538
    %3550 = vst.msk [vmem:[#allocation4 + $0x530] sm:$0xff] %vm1684, %v3540
    %3551 = vst.msk [vmem:[#allocation4 + $0x550] sm:$0xff] %vm1684, %v3542
    %3552 = vst.msk [vmem:[#allocation4 + $0x570] sm:$0xff] %vm1684, %v3544
    %3553 = vrot.lane.b32.xlu0 %v2697, 64
    %v3554 = vpop.permute.xlu0 %3553
    %3555 = vrot.lane.b32.xlu0 %v2700, 64
    %v3556 = vpop.permute.xlu0 %3555
    %3557 = vrot.lane.b32.xlu0 %v2703, 64
    %v3558 = vpop.permute.xlu0 %3557
    %3559 = vrot.lane.b32.xlu0 %v2706, 64
    %v3560 = vpop.permute.xlu0 %3559
    %3565 = vst.msk [vmem:[#allocation4 + $0x590] sm:$0xff] %vm1695, %v3554
    %3566 = vst.msk [vmem:[#allocation4 + $0x5b0] sm:$0xff] %vm1695, %v3556
    %3567 = vst.msk [vmem:[#allocation4 + $0x5d0] sm:$0xff] %vm1695, %v3558
    %3568 = vst.msk [vmem:[#allocation4 + $0x5f0] sm:$0xff] %vm1695, %v3560
    %3569 = vrot.lane.b32.xlu0 %v2709, 96
    %v3570 = vpop.permute.xlu0 %3569
    %3571 = vrot.lane.b32.xlu0 %v2712, 96
    %v3572 = vpop.permute.xlu0 %3571
    %3573 = vrot.lane.b32.xlu0 %v2715, 96
    %v3574 = vpop.permute.xlu0 %3573
    %3575 = vrot.lane.b32.xlu0 %v2718, 96
    %v3576 = vpop.permute.xlu0 %3575
    %3581 = vst.msk [vmem:[#allocation4 + $0x618] sm:$0xff] %vm924, %v3570
    %3582 = vst.msk [vmem:[#allocation4 + $0x638] sm:$0xff] %vm924, %v3572
    %3583 = vst.msk [vmem:[#allocation4 + $0x658] sm:$0xff] %vm924, %v3574
    %3584 = vst.msk [vmem:[#allocation4 + $0x678] sm:$0xff] %vm924, %v3576
    %3585 = vst.msk [vmem:[#allocation4 + $0x698] sm:$0xff] %vm1673, %v2721
    %3586 = vst.msk [vmem:[#allocation4 + $0x6b8] sm:$0xff] %vm1673, %v2724
    %3587 = vst.msk [vmem:[#allocation4 + $0x6d8] sm:$0xff] %vm1673, %v2727
    %3588 = vst.msk [vmem:[#allocation4 + $0x6f8] sm:$0xff] %vm1673, %v2730
    %3589 = vrot.lane.b32.xlu0 %v2733, 32
    %v3590 = vpop.permute.xlu0 %3589
    %3591 = vrot.lane.b32.xlu0 %v2736, 32
    %v3592 = vpop.permute.xlu0 %3591
    %3593 = vrot.lane.b32.xlu0 %v2739, 32
    %v3594 = vpop.permute.xlu0 %3593
    %3595 = vrot.lane.b32.xlu0 %v2742, 32
    %v3596 = vpop.permute.xlu0 %3595
    %3601 = vst.msk [vmem:[#allocation4 + $0x718] sm:$0xff] %vm1684, %v3590
    %3602 = vst.msk [vmem:[#allocation4 + $0x738] sm:$0xff] %vm1684, %v3592
    %3603 = vst.msk [vmem:[#allocation4 + $0x758] sm:$0xff] %vm1684, %v3594
    %3604 = vst.msk [vmem:[#allocation4 + $0x778] sm:$0xff] %vm1684, %v3596
    %3605 = vrot.lane.b32.xlu0 %v2745, 64
    %v3606 = vpop.permute.xlu0 %3605
    %3607 = vrot.lane.b32.xlu0 %v2748, 64
    %v3608 = vpop.permute.xlu0 %3607
    %3609 = vrot.lane.b32.xlu0 %v2751, 64
    %v3610 = vpop.permute.xlu0 %3609
    %3611 = vrot.lane.b32.xlu0 %v2754, 64
    %v3612 = vpop.permute.xlu0 %3611
    %3617 = vst.msk [vmem:[#allocation4 + $0x798] sm:$0xff] %vm1695, %v3606
    %3618 = vst.msk [vmem:[#allocation4 + $0x7b8] sm:$0xff] %vm1695, %v3608
    %3619 = vst.msk [vmem:[#allocation4 + $0x7d8] sm:$0xff] %vm1695, %v3610
    %3620 = vst.msk [vmem:[#allocation4 + $0x7f8] sm:$0xff] %vm1695, %v3612
    %v3621 = vld [vmem:[#allocation4] sm:$0xff]
    %v3622 = vld [vmem:[#allocation4 + $0x8] sm:$0xff]
    %v3623 = vld [vmem:[#allocation4 + $0x10] sm:$0xff]
    %v3624 = vld [vmem:[#allocation4 + $0x18] sm:$0xff]
    %v3625 = vld [vmem:[#allocation4 + $0x20] sm:$0xff]
    %v3626 = vld [vmem:[#allocation4 + $0x28] sm:$0xff]
    %v3627 = vld [vmem:[#allocation4 + $0x30] sm:$0xff]
    %v3628 = vld [vmem:[#allocation4 + $0x38] sm:$0xff]
    %v3629 = vld [vmem:[#allocation4 + $0x40] sm:$0xff]
    %v3630 = vld [vmem:[#allocation4 + $0x48] sm:$0xff]
    %v3631 = vld [vmem:[#allocation4 + $0x50] sm:$0xff]
    %v3632 = vld [vmem:[#allocation4 + $0x58] sm:$0xff]
    %v3633 = vld [vmem:[#allocation4 + $0x60] sm:$0xff]
    %v3634 = vld [vmem:[#allocation4 + $0x68] sm:$0xff]
    %v3635 = vld [vmem:[#allocation4 + $0x70] sm:$0xff]
    %v3636 = vld [vmem:[#allocation4 + $0x78] sm:$0xff]
    %v3637 = vld [vmem:[#allocation4 + $0x80] sm:$0xff]
    %v3638 = vld [vmem:[#allocation4 + $0x88] sm:$0xff]
    %v3639 = vld [vmem:[#allocation4 + $0x90] sm:$0xff]
    %v3640 = vld [vmem:[#allocation4 + $0x98] sm:$0xff]
    %v3641 = vld [vmem:[#allocation4 + $0xa0] sm:$0xff]
    %v3642 = vld [vmem:[#allocation4 + $0xa8] sm:$0xff]
    %v3643 = vld [vmem:[#allocation4 + $0xb0] sm:$0xff]
    %v3644 = vld [vmem:[#allocation4 + $0xb8] sm:$0xff]
    %v3645 = vld [vmem:[#allocation4 + $0xc0] sm:$0xff]
    %v3646 = vld [vmem:[#allocation4 + $0xc8] sm:$0xff]
    %v3647 = vld [vmem:[#allocation4 + $0xd0] sm:$0xff]
    %v3648 = vld [vmem:[#allocation4 + $0xd8] sm:$0xff]
    %v3649 = vld [vmem:[#allocation4 + $0xe0] sm:$0xff]
    %v3650 = vld [vmem:[#allocation4 + $0xe8] sm:$0xff]
    %v3651 = vld [vmem:[#allocation4 + $0xf0] sm:$0xff]
    %v3652 = vld [vmem:[#allocation4 + $0xf8] sm:$0xff]
    %v3653 = vld [vmem:[#allocation4 + $0x100] sm:$0xff]
    %v3654 = vld [vmem:[#allocation4 + $0x108] sm:$0xff]
    %v3655 = vld [vmem:[#allocation4 + $0x110] sm:$0xff]
    %v3656 = vld [vmem:[#allocation4 + $0x118] sm:$0xff]
    %v3657 = vld [vmem:[#allocation4 + $0x120] sm:$0xff]
    %v3658 = vld [vmem:[#allocation4 + $0x128] sm:$0xff]
    %v3659 = vld [vmem:[#allocation4 + $0x130] sm:$0xff]
    %v3660 = vld [vmem:[#allocation4 + $0x138] sm:$0xff]
    %v3661 = vld [vmem:[#allocation4 + $0x140] sm:$0xff]
    %v3662 = vld [vmem:[#allocation4 + $0x148] sm:$0xff]
    %v3663 = vld [vmem:[#allocation4 + $0x150] sm:$0xff]
    %v3664 = vld [vmem:[#allocation4 + $0x158] sm:$0xff]
    %v3665 = vld [vmem:[#allocation4 + $0x160] sm:$0xff]
    %v3666 = vld [vmem:[#allocation4 + $0x168] sm:$0xff]
    %v3667 = vld [vmem:[#allocation4 + $0x170] sm:$0xff]
    %v3668 = vld [vmem:[#allocation4 + $0x178] sm:$0xff]
    %v3669 = vld [vmem:[#allocation4 + $0x180] sm:$0xff]
    %v3670 = vld [vmem:[#allocation4 + $0x188] sm:$0xff]
    %v3671 = vld [vmem:[#allocation4 + $0x190] sm:$0xff]
    %v3672 = vld [vmem:[#allocation4 + $0x198] sm:$0xff]
    %v3673 = vld [vmem:[#allocation4 + $0x1a0] sm:$0xff]
    %v3674 = vld [vmem:[#allocation4 + $0x1a8] sm:$0xff]
    %v3675 = vld [vmem:[#allocation4 + $0x1b0] sm:$0xff]
    %v3676 = vld [vmem:[#allocation4 + $0x1b8] sm:$0xff]
    %v3677 = vld [vmem:[#allocation4 + $0x1c0] sm:$0xff]
    %v3678 = vld [vmem:[#allocation4 + $0x1c8] sm:$0xff]
    %v3679 = vld [vmem:[#allocation4 + $0x1d0] sm:$0xff]
    %v3680 = vld [vmem:[#allocation4 + $0x1d8] sm:$0xff]
    %v3681 = vld [vmem:[#allocation4 + $0x1e0] sm:$0xff]
    %v3682 = vld [vmem:[#allocation4 + $0x1e8] sm:$0xff]
    %v3683 = vld [vmem:[#allocation4 + $0x1f0] sm:$0xff]
    %v3684 = vld [vmem:[#allocation4 + $0x1f8] sm:$0xff]
    %v3685 = vld [vmem:[#allocation4 + $0x200] sm:$0xff]
    %v3686 = vld [vmem:[#allocation4 + $0x208] sm:$0xff]
    %v3687 = vld [vmem:[#allocation4 + $0x210] sm:$0xff]
    %v3688 = vld [vmem:[#allocation4 + $0x218] sm:$0xff]
    %v3689 = vld [vmem:[#allocation4 + $0x220] sm:$0xff]
    %v3690 = vld [vmem:[#allocation4 + $0x228] sm:$0xff]
    %v3691 = vld [vmem:[#allocation4 + $0x230] sm:$0xff]
    %v3692 = vld [vmem:[#allocation4 + $0x238] sm:$0xff]
    %v3693 = vld [vmem:[#allocation4 + $0x240] sm:$0xff]
    %v3694 = vld [vmem:[#allocation4 + $0x248] sm:$0xff]
    %v3695 = vld [vmem:[#allocation4 + $0x250] sm:$0xff]
    %v3696 = vld [vmem:[#allocation4 + $0x258] sm:$0xff]
    %v3697 = vld [vmem:[#allocation4 + $0x260] sm:$0xff]
    %v3698 = vld [vmem:[#allocation4 + $0x268] sm:$0xff]
    %v3699 = vld [vmem:[#allocation4 + $0x270] sm:$0xff]
    %v3700 = vld [vmem:[#allocation4 + $0x278] sm:$0xff]
    %v3701 = vld [vmem:[#allocation4 + $0x280] sm:$0xff]
    %v3702 = vld [vmem:[#allocation4 + $0x288] sm:$0xff]
    %v3703 = vld [vmem:[#allocation4 + $0x290] sm:$0xff]
    %v3704 = vld [vmem:[#allocation4 + $0x298] sm:$0xff]
    %v3705 = vld [vmem:[#allocation4 + $0x2a0] sm:$0xff]
    %v3706 = vld [vmem:[#allocation4 + $0x2a8] sm:$0xff]
    %v3707 = vld [vmem:[#allocation4 + $0x2b0] sm:$0xff]
    %v3708 = vld [vmem:[#allocation4 + $0x2b8] sm:$0xff]
    %v3709 = vld [vmem:[#allocation4 + $0x2c0] sm:$0xff]
    %v3710 = vld [vmem:[#allocation4 + $0x2c8] sm:$0xff]
    %v3711 = vld [vmem:[#allocation4 + $0x2d0] sm:$0xff]
    %v3712 = vld [vmem:[#allocation4 + $0x2d8] sm:$0xff]
    %v3713 = vld [vmem:[#allocation4 + $0x2e0] sm:$0xff]
    %v3714 = vld [vmem:[#allocation4 + $0x2e8] sm:$0xff]
    %v3715 = vld [vmem:[#allocation4 + $0x2f0] sm:$0xff]
    %v3716 = vld [vmem:[#allocation4 + $0x2f8] sm:$0xff]
    %v3717 = vld [vmem:[#allocation4 + $0x300] sm:$0xff]
    %v3718 = vld [vmem:[#allocation4 + $0x308] sm:$0xff]
    %v3719 = vld [vmem:[#allocation4 + $0x310] sm:$0xff]
    %v3720 = vld [vmem:[#allocation4 + $0x318] sm:$0xff]
    %v3721 = vld [vmem:[#allocation4 + $0x320] sm:$0xff]
    %v3722 = vld [vmem:[#allocation4 + $0x328] sm:$0xff]
    %v3723 = vld [vmem:[#allocation4 + $0x330] sm:$0xff]
    %v3724 = vld [vmem:[#allocation4 + $0x338] sm:$0xff]
    %v3725 = vld [vmem:[#allocation4 + $0x340] sm:$0xff]
    %v3726 = vld [vmem:[#allocation4 + $0x348] sm:$0xff]
    %v3727 = vld [vmem:[#allocation4 + $0x350] sm:$0xff]
    %v3728 = vld [vmem:[#allocation4 + $0x358] sm:$0xff]
    %v3729 = vld [vmem:[#allocation4 + $0x360] sm:$0xff]
    %v3730 = vld [vmem:[#allocation4 + $0x368] sm:$0xff]
    %v3731 = vld [vmem:[#allocation4 + $0x370] sm:$0xff]
    %v3732 = vld [vmem:[#allocation4 + $0x378] sm:$0xff]
    %v3733 = vld [vmem:[#allocation4 + $0x380] sm:$0xff]
    %v3734 = vld [vmem:[#allocation4 + $0x388] sm:$0xff]
    %v3735 = vld [vmem:[#allocation4 + $0x390] sm:$0xff]
    %v3736 = vld [vmem:[#allocation4 + $0x398] sm:$0xff]
    %v3737 = vld [vmem:[#allocation4 + $0x3a0] sm:$0xff]
    %v3738 = vld [vmem:[#allocation4 + $0x3a8] sm:$0xff]
    %v3739 = vld [vmem:[#allocation4 + $0x3b0] sm:$0xff]
    %v3740 = vld [vmem:[#allocation4 + $0x3b8] sm:$0xff]
    %v3741 = vld [vmem:[#allocation4 + $0x3c0] sm:$0xff]
    %v3742 = vld [vmem:[#allocation4 + $0x3c8] sm:$0xff]
    %v3743 = vld [vmem:[#allocation4 + $0x3d0] sm:$0xff]
    %v3744 = vld [vmem:[#allocation4 + $0x3d8] sm:$0xff]
    %v3745 = vld [vmem:[#allocation4 + $0x3e0] sm:$0xff]
    %v3746 = vld [vmem:[#allocation4 + $0x3e8] sm:$0xff]
    %v3747 = vld [vmem:[#allocation4 + $0x3f0] sm:$0xff]
    %v3748 = vld [vmem:[#allocation4 + $0x3f8] sm:$0xff]
    %v3749 = vld [vmem:[#allocation4 + $0x400] sm:$0xff]
    %v3750 = vld [vmem:[#allocation4 + $0x408] sm:$0xff]
    %v3751 = vld [vmem:[#allocation4 + $0x410] sm:$0xff]
    %v3752 = vld [vmem:[#allocation4 + $0x418] sm:$0xff]
    %v3753 = vld [vmem:[#allocation4 + $0x420] sm:$0xff]
    %v3754 = vld [vmem:[#allocation4 + $0x428] sm:$0xff]
    %v3755 = vld [vmem:[#allocation4 + $0x430] sm:$0xff]
    %v3756 = vld [vmem:[#allocation4 + $0x438] sm:$0xff]
    %v3757 = vld [vmem:[#allocation4 + $0x440] sm:$0xff]
    %v3758 = vld [vmem:[#allocation4 + $0x448] sm:$0xff]
    %v3759 = vld [vmem:[#allocation4 + $0x450] sm:$0xff]
    %v3760 = vld [vmem:[#allocation4 + $0x458] sm:$0xff]
    %v3761 = vld [vmem:[#allocation4 + $0x460] sm:$0xff]
    %v3762 = vld [vmem:[#allocation4 + $0x468] sm:$0xff]
    %v3763 = vld [vmem:[#allocation4 + $0x470] sm:$0xff]
    %v3764 = vld [vmem:[#allocation4 + $0x478] sm:$0xff]
    %v3765 = vld [vmem:[#allocation4 + $0x480] sm:$0xff]
    %v3766 = vld [vmem:[#allocation4 + $0x488] sm:$0xff]
    %v3767 = vld [vmem:[#allocation4 + $0x490] sm:$0xff]
    %v3768 = vld [vmem:[#allocation4 + $0x498] sm:$0xff]
    %v3769 = vld [vmem:[#allocation4 + $0x4a0] sm:$0xff]
    %v3770 = vld [vmem:[#allocation4 + $0x4a8] sm:$0xff]
    %v3771 = vld [vmem:[#allocation4 + $0x4b0] sm:$0xff]
    %v3772 = vld [vmem:[#allocation4 + $0x4b8] sm:$0xff]
    %v3773 = vld [vmem:[#allocation4 + $0x4c0] sm:$0xff]
    %v3774 = vld [vmem:[#allocation4 + $0x4c8] sm:$0xff]
    %v3775 = vld [vmem:[#allocation4 + $0x4d0] sm:$0xff]
    %v3776 = vld [vmem:[#allocation4 + $0x4d8] sm:$0xff]
    %v3777 = vld [vmem:[#allocation4 + $0x4e0] sm:$0xff]
    %v3778 = vld [vmem:[#allocation4 + $0x4e8] sm:$0xff]
    %v3779 = vld [vmem:[#allocation4 + $0x4f0] sm:$0xff]
    %v3780 = vld [vmem:[#allocation4 + $0x4f8] sm:$0xff]
    %v3781 = vld [vmem:[#allocation4 + $0x500] sm:$0xff]
    %v3782 = vld [vmem:[#allocation4 + $0x508] sm:$0xff]
    %v3783 = vld [vmem:[#allocation4 + $0x510] sm:$0xff]
    %v3784 = vld [vmem:[#allocation4 + $0x518] sm:$0xff]
    %v3785 = vld [vmem:[#allocation4 + $0x520] sm:$0xff]
    %v3786 = vld [vmem:[#allocation4 + $0x528] sm:$0xff]
    %v3787 = vld [vmem:[#allocation4 + $0x530] sm:$0xff]
    %v3788 = vld [vmem:[#allocation4 + $0x538] sm:$0xff]
    %v3789 = vld [vmem:[#allocation4 + $0x540] sm:$0xff]
    %v3790 = vld [vmem:[#allocation4 + $0x548] sm:$0xff]
    %v3791 = vld [vmem:[#allocation4 + $0x550] sm:$0xff]
    %v3792 = vld [vmem:[#allocation4 + $0x558] sm:$0xff]
    %v3793 = vld [vmem:[#allocation4 + $0x560] sm:$0xff]
    %v3794 = vld [vmem:[#allocation4 + $0x568] sm:$0xff]
    %v3795 = vld [vmem:[#allocation4 + $0x570] sm:$0xff]
    %v3796 = vld [vmem:[#allocation4 + $0x578] sm:$0xff]
    %v3797 = vld [vmem:[#allocation4 + $0x580] sm:$0xff]
    %v3798 = vld [vmem:[#allocation4 + $0x588] sm:$0xff]
    %v3799 = vld [vmem:[#allocation4 + $0x590] sm:$0xff]
    %v3800 = vld [vmem:[#allocation4 + $0x598] sm:$0xff]
    %v3801 = vld [vmem:[#allocation4 + $0x5a0] sm:$0xff]
    %v3802 = vld [vmem:[#allocation4 + $0x5a8] sm:$0xff]
    %v3803 = vld [vmem:[#allocation4 + $0x5b0] sm:$0xff]
    %v3804 = vld [vmem:[#allocation4 + $0x5b8] sm:$0xff]
    %v3805 = vld [vmem:[#allocation4 + $0x5c0] sm:$0xff]
    %v3806 = vld [vmem:[#allocation4 + $0x5c8] sm:$0xff]
    %v3807 = vld [vmem:[#allocation4 + $0x5d0] sm:$0xff]
    %v3808 = vld [vmem:[#allocation4 + $0x5d8] sm:$0xff]
    %v3809 = vld [vmem:[#allocation4 + $0x5e0] sm:$0xff]
    %v3810 = vld [vmem:[#allocation4 + $0x5e8] sm:$0xff]
    %v3811 = vld [vmem:[#allocation4 + $0x5f0] sm:$0xff]
    %v3812 = vld [vmem:[#allocation4 + $0x5f8] sm:$0xff]
    %v3813 = vld [vmem:[#allocation4 + $0x600] sm:$0xff]
    %v3814 = vld [vmem:[#allocation4 + $0x608] sm:$0xff]
    %v3815 = vld [vmem:[#allocation4 + $0x610] sm:$0xff]
    %v3816 = vld [vmem:[#allocation4 + $0x618] sm:$0xff]
    %v3817 = vld [vmem:[#allocation4 + $0x620] sm:$0xff]
    %v3818 = vld [vmem:[#allocation4 + $0x628] sm:$0xff]
    %v3819 = vld [vmem:[#allocation4 + $0x630] sm:$0xff]
    %v3820 = vld [vmem:[#allocation4 + $0x638] sm:$0xff]
    %v3821 = vld [vmem:[#allocation4 + $0x640] sm:$0xff]
    %v3822 = vld [vmem:[#allocation4 + $0x648] sm:$0xff]
    %v3823 = vld [vmem:[#allocation4 + $0x650] sm:$0xff]
    %v3824 = vld [vmem:[#allocation4 + $0x658] sm:$0xff]
    %v3825 = vld [vmem:[#allocation4 + $0x660] sm:$0xff]
    %v3826 = vld [vmem:[#allocation4 + $0x668] sm:$0xff]
    %v3827 = vld [vmem:[#allocation4 + $0x670] sm:$0xff]
    %v3828 = vld [vmem:[#allocation4 + $0x678] sm:$0xff]
    %v3829 = vld [vmem:[#allocation4 + $0x680] sm:$0xff]
    %v3830 = vld [vmem:[#allocation4 + $0x688] sm:$0xff]
    %v3831 = vld [vmem:[#allocation4 + $0x690] sm:$0xff]
    %v3832 = vld [vmem:[#allocation4 + $0x698] sm:$0xff]
    %v3833 = vld [vmem:[#allocation4 + $0x6a0] sm:$0xff]
    %v3834 = vld [vmem:[#allocation4 + $0x6a8] sm:$0xff]
    %v3835 = vld [vmem:[#allocation4 + $0x6b0] sm:$0xff]
    %v3836 = vld [vmem:[#allocation4 + $0x6b8] sm:$0xff]
    %v3837 = vld [vmem:[#allocation4 + $0x6c0] sm:$0xff]
    %v3838 = vld [vmem:[#allocation4 + $0x6c8] sm:$0xff]
    %v3839 = vld [vmem:[#allocation4 + $0x6d0] sm:$0xff]
    %v3840 = vld [vmem:[#allocation4 + $0x6d8] sm:$0xff]
    %v3841 = vld [vmem:[#allocation4 + $0x6e0] sm:$0xff]
    %v3842 = vld [vmem:[#allocation4 + $0x6e8] sm:$0xff]
    %v3843 = vld [vmem:[#allocation4 + $0x6f0] sm:$0xff]
    %v3844 = vld [vmem:[#allocation4 + $0x6f8] sm:$0xff]
    %v3845 = vld [vmem:[#allocation4 + $0x700] sm:$0xff]
    %v3846 = vld [vmem:[#allocation4 + $0x708] sm:$0xff]
    %v3847 = vld [vmem:[#allocation4 + $0x710] sm:$0xff]
    %v3848 = vld [vmem:[#allocation4 + $0x718] sm:$0xff]
    %v3849 = vld [vmem:[#allocation4 + $0x720] sm:$0xff]
    %v3850 = vld [vmem:[#allocation4 + $0x728] sm:$0xff]
    %v3851 = vld [vmem:[#allocation4 + $0x730] sm:$0xff]
    %v3852 = vld [vmem:[#allocation4 + $0x738] sm:$0xff]
    %v3853 = vld [vmem:[#allocation4 + $0x740] sm:$0xff]
    %v3854 = vld [vmem:[#allocation4 + $0x748] sm:$0xff]
    %v3855 = vld [vmem:[#allocation4 + $0x750] sm:$0xff]
    %v3856 = vld [vmem:[#allocation4 + $0x758] sm:$0xff]
    %v3857 = vld [vmem:[#allocation4 + $0x760] sm:$0xff]
    %v3858 = vld [vmem:[#allocation4 + $0x768] sm:$0xff]
    %v3859 = vld [vmem:[#allocation4 + $0x770] sm:$0xff]
    %v3860 = vld [vmem:[#allocation4 + $0x778] sm:$0xff]
    %v3861 = vld [vmem:[#allocation4 + $0x780] sm:$0xff]
    %v3862 = vld [vmem:[#allocation4 + $0x788] sm:$0xff]
    %v3863 = vld [vmem:[#allocation4 + $0x790] sm:$0xff]
    %v3864 = vld [vmem:[#allocation4 + $0x798] sm:$0xff]
    %v3865 = vld [vmem:[#allocation4 + $0x7a0] sm:$0xff]
    %v3866 = vld [vmem:[#allocation4 + $0x7a8] sm:$0xff]
    %v3867 = vld [vmem:[#allocation4 + $0x7b0] sm:$0xff]
    %v3868 = vld [vmem:[#allocation4 + $0x7b8] sm:$0xff]
    %v3869 = vld [vmem:[#allocation4 + $0x7c0] sm:$0xff]
    %v3870 = vld [vmem:[#allocation4 + $0x7c8] sm:$0xff]
    %v3871 = vld [vmem:[#allocation4 + $0x7d0] sm:$0xff]
    %v3872 = vld [vmem:[#allocation4 + $0x7d8] sm:$0xff]
    %v3873 = vld [vmem:[#allocation4 + $0x7e0] sm:$0xff]
    %v3874 = vld [vmem:[#allocation4 + $0x7e8] sm:$0xff]
    %v3875 = vld [vmem:[#allocation4 + $0x7f0] sm:$0xff]
    %v3876 = vld [vmem:[#allocation4 + $0x7f8] sm:$0xff]
    %v3878 = vperm.slane %v94, 0
    %3880 = vmatpush.msra.mxu0 %v3011
    %3881 = vmatpush.msra.mxu0 %v3008
    %3882 = vmatpush.msra.mxu0 %v3005
    %3883 = vmatpush.msra.mxu0 %v3002
    %3884 = vmatpush.msra.mxu0 %v2999
    %3885 = vmatpush.msra.mxu0 %v2996
    %3886 = vmatpush.msra.mxu0 %v2993
    %3887 = vmatpush.msra.mxu0 %v2990
    %3888 = vmatpush.msra.mxu0 %v2987
    %3889 = vmatpush.msra.mxu0 %v2984
    %3890 = vmatpush.msra.mxu0 %v2981
    %3891 = vmatpush.msra.mxu0 %v2978
    %3892 = vmatpush.msra.mxu0 %v2975
    %3893 = vmatpush.msra.mxu0 %v2972
    %3894 = vmatpush.msra.mxu0 %v2969
    %3895 = vmatpush.msra.mxu0 %v2966
    %3896 = vmatmul.f32.gmra.mxu0 %v3621
    %v3897 = vpop.f32.mrf.mxu0
    %v3898 = vadd.f32 %v3878, %v3897
    %3899 = vmatmul.f32.gmra.mxu0 %v3625
    %v3900 = vpop.f32.mrf.mxu0
    %v3901 = vadd.f32 %v3878, %v3900
    %3902 = vmatmul.f32.gmra.mxu0 %v3629
    %v3903 = vpop.f32.mrf.mxu0
    %v3904 = vadd.f32 %v3878, %v3903
    %3905 = vmatmul.f32.gmra.mxu0 %v3633
    %v3906 = vpop.f32.mrf.mxu0
    %v3907 = vadd.f32 %v3878, %v3906
    %3908 = vmatmul.f32.gmra.mxu0 %v3637
    %v3909 = vpop.f32.mrf.mxu0
    %v3910 = vadd.f32 %v3878, %v3909
    %3911 = vmatmul.f32.gmra.mxu0 %v3641
    %v3912 = vpop.f32.mrf.mxu0
    %v3913 = vadd.f32 %v3878, %v3912
    %3914 = vmatmul.f32.gmra.mxu0 %v3645
    %v3915 = vpop.f32.mrf.mxu0
    %v3916 = vadd.f32 %v3878, %v3915
    %3917 = vmatmul.f32.gmra.mxu0 %v3649
    %v3918 = vpop.f32.mrf.mxu0
    %v3919 = vadd.f32 %v3878, %v3918
    %3920 = vmatmul.f32.gmra.mxu0 %v3653
    %v3921 = vpop.f32.mrf.mxu0
    %v3922 = vadd.f32 %v3878, %v3921
    %3923 = vmatmul.f32.gmra.mxu0 %v3657
    %v3924 = vpop.f32.mrf.mxu0
    %v3925 = vadd.f32 %v3878, %v3924
    %3926 = vmatmul.f32.gmra.mxu0 %v3661
    %v3927 = vpop.f32.mrf.mxu0
    %v3928 = vadd.f32 %v3878, %v3927
    %3929 = vmatmul.f32.gmra.mxu0 %v3665
    %v3930 = vpop.f32.mrf.mxu0
    %v3931 = vadd.f32 %v3878, %v3930
    %3932 = vmatmul.f32.gmra.mxu0 %v3669
    %v3933 = vpop.f32.mrf.mxu0
    %v3934 = vadd.f32 %v3878, %v3933
    %3935 = vmatmul.f32.gmra.mxu0 %v3673
    %v3936 = vpop.f32.mrf.mxu0
    %v3937 = vadd.f32 %v3878, %v3936
    %3938 = vmatmul.f32.gmra.mxu0 %v3677
    %v3939 = vpop.f32.mrf.mxu0
    %v3940 = vadd.f32 %v3878, %v3939
    %3941 = vmatmul.f32.gmra.mxu0 %v3681
    %v3942 = vpop.f32.mrf.mxu0
    %v3943 = vadd.f32 %v3878, %v3942
    %3944 = vmatmul.f32.gmra.mxu0 %v3685
    %v3945 = vpop.f32.mrf.mxu0
    %v3946 = vadd.f32 %v3878, %v3945
    %3947 = vmatmul.f32.gmra.mxu0 %v3689
    %v3948 = vpop.f32.mrf.mxu0
    %v3949 = vadd.f32 %v3878, %v3948
    %3950 = vmatmul.f32.gmra.mxu0 %v3693
    %v3951 = vpop.f32.mrf.mxu0
    %v3952 = vadd.f32 %v3878, %v3951
    %3953 = vmatmul.f32.gmra.mxu0 %v3697
    %v3954 = vpop.f32.mrf.mxu0
    %v3955 = vadd.f32 %v3878, %v3954
    %3956 = vmatmul.f32.gmra.mxu0 %v3701
    %v3957 = vpop.f32.mrf.mxu0
    %v3958 = vadd.f32 %v3878, %v3957
    %3959 = vmatmul.f32.gmra.mxu0 %v3705
    %v3960 = vpop.f32.mrf.mxu0
    %v3961 = vadd.f32 %v3878, %v3960
    %3962 = vmatmul.f32.gmra.mxu0 %v3709
    %v3963 = vpop.f32.mrf.mxu0
    %v3964 = vadd.f32 %v3878, %v3963
    %3965 = vmatmul.f32.gmra.mxu0 %v3713
    %v3966 = vpop.f32.mrf.mxu0
    %v3967 = vadd.f32 %v3878, %v3966
    %3968 = vmatmul.f32.gmra.mxu0 %v3717
    %v3969 = vpop.f32.mrf.mxu0
    %v3970 = vadd.f32 %v3878, %v3969
    %3971 = vmatmul.f32.gmra.mxu0 %v3721
    %v3972 = vpop.f32.mrf.mxu0
    %v3973 = vadd.f32 %v3878, %v3972
    %3974 = vmatmul.f32.gmra.mxu0 %v3725
    %v3975 = vpop.f32.mrf.mxu0
    %v3976 = vadd.f32 %v3878, %v3975
    %3977 = vmatmul.f32.gmra.mxu0 %v3729
    %v3978 = vpop.f32.mrf.mxu0
    %v3979 = vadd.f32 %v3878, %v3978
    %3980 = vmatmul.f32.gmra.mxu0 %v3733
    %v3981 = vpop.f32.mrf.mxu0
    %v3982 = vadd.f32 %v3878, %v3981
    %3983 = vmatmul.f32.gmra.mxu0 %v3737
    %v3984 = vpop.f32.mrf.mxu0
    %v3985 = vadd.f32 %v3878, %v3984
    %3986 = vmatmul.f32.gmra.mxu0 %v3741
    %v3987 = vpop.f32.mrf.mxu0
    %v3988 = vadd.f32 %v3878, %v3987
    %3989 = vmatmul.f32.gmra.mxu0 %v3745
    %v3990 = vpop.f32.mrf.mxu0
    %v3991 = vadd.f32 %v3878, %v3990
    %3992 = vmatmul.f32.gmra.mxu0 %v3749
    %v3993 = vpop.f32.mrf.mxu0
    %v3994 = vadd.f32 %v3878, %v3993
    %3995 = vmatmul.f32.gmra.mxu0 %v3753
    %v3996 = vpop.f32.mrf.mxu0
    %v3997 = vadd.f32 %v3878, %v3996
    %3998 = vmatmul.f32.gmra.mxu0 %v3757
    %v3999 = vpop.f32.mrf.mxu0
    %v4000 = vadd.f32 %v3878, %v3999
    %4001 = vmatmul.f32.gmra.mxu0 %v3761
    %v4002 = vpop.f32.mrf.mxu0
    %v4003 = vadd.f32 %v3878, %v4002
    %4004 = vmatmul.f32.gmra.mxu0 %v3765
    %v4005 = vpop.f32.mrf.mxu0
    %v4006 = vadd.f32 %v3878, %v4005
    %4007 = vmatmul.f32.gmra.mxu0 %v3769
    %v4008 = vpop.f32.mrf.mxu0
    %v4009 = vadd.f32 %v3878, %v4008
    %4010 = vmatmul.f32.gmra.mxu0 %v3773
    %v4011 = vpop.f32.mrf.mxu0
    %v4012 = vadd.f32 %v3878, %v4011
    %4013 = vmatmul.f32.gmra.mxu0 %v3777
    %v4014 = vpop.f32.mrf.mxu0
    %v4015 = vadd.f32 %v3878, %v4014
    %4016 = vmatmul.f32.gmra.mxu0 %v3781
    %v4017 = vpop.f32.mrf.mxu0
    %v4018 = vadd.f32 %v3878, %v4017
    %4019 = vmatmul.f32.gmra.mxu0 %v3785
    %v4020 = vpop.f32.mrf.mxu0
    %v4021 = vadd.f32 %v3878, %v4020
    %4022 = vmatmul.f32.gmra.mxu0 %v3789
    %v4023 = vpop.f32.mrf.mxu0
    %v4024 = vadd.f32 %v3878, %v4023
    %4025 = vmatmul.f32.gmra.mxu0 %v3793
    %v4026 = vpop.f32.mrf.mxu0
    %v4027 = vadd.f32 %v3878, %v4026
    %4028 = vmatmul.f32.gmra.mxu0 %v3797
    %v4029 = vpop.f32.mrf.mxu0
    %v4030 = vadd.f32 %v3878, %v4029
    %4031 = vmatmul.f32.gmra.mxu0 %v3801
    %v4032 = vpop.f32.mrf.mxu0
    %v4033 = vadd.f32 %v3878, %v4032
    %4034 = vmatmul.f32.gmra.mxu0 %v3805
    %v4035 = vpop.f32.mrf.mxu0
    %v4036 = vadd.f32 %v3878, %v4035
    %4037 = vmatmul.f32.gmra.mxu0 %v3809
    %v4038 = vpop.f32.mrf.mxu0
    %v4039 = vadd.f32 %v3878, %v4038
    %4040 = vmatmul.f32.gmra.mxu0 %v3813
    %v4041 = vpop.f32.mrf.mxu0
    %v4042 = vadd.f32 %v3878, %v4041
    %4043 = vmatmul.f32.gmra.mxu0 %v3817
    %v4044 = vpop.f32.mrf.mxu0
    %v4045 = vadd.f32 %v3878, %v4044
    %4046 = vmatmul.f32.gmra.mxu0 %v3821
    %v4047 = vpop.f32.mrf.mxu0
    %v4048 = vadd.f32 %v3878, %v4047
    %4049 = vmatmul.f32.gmra.mxu0 %v3825
    %v4050 = vpop.f32.mrf.mxu0
    %v4051 = vadd.f32 %v3878, %v4050
    %4052 = vmatmul.f32.gmra.mxu0 %v3829
    %v4053 = vpop.f32.mrf.mxu0
    %v4054 = vadd.f32 %v3878, %v4053
    %4055 = vmatmul.f32.gmra.mxu0 %v3833
    %v4056 = vpop.f32.mrf.mxu0
    %v4057 = vadd.f32 %v3878, %v4056
    %4058 = vmatmul.f32.gmra.mxu0 %v3837
    %v4059 = vpop.f32.mrf.mxu0
    %v4060 = vadd.f32 %v3878, %v4059
    %4061 = vmatmul.f32.gmra.mxu0 %v3841
    %v4062 = vpop.f32.mrf.mxu0
    %v4063 = vadd.f32 %v3878, %v4062
    %4064 = vmatmul.f32.gmra.mxu0 %v3845
    %v4065 = vpop.f32.mrf.mxu0
    %v4066 = vadd.f32 %v3878, %v4065
    %4067 = vmatmul.f32.gmra.mxu0 %v3849
    %v4068 = vpop.f32.mrf.mxu0
    %v4069 = vadd.f32 %v3878, %v4068
    %4070 = vmatmul.f32.gmra.mxu0 %v3853
    %v4071 = vpop.f32.mrf.mxu0
    %v4072 = vadd.f32 %v3878, %v4071
    %4073 = vmatmul.f32.gmra.mxu0 %v3857
    %v4074 = vpop.f32.mrf.mxu0
    %v4075 = vadd.f32 %v3878, %v4074
    %4076 = vmatmul.f32.gmra.mxu0 %v3861
    %v4077 = vpop.f32.mrf.mxu0
    %v4078 = vadd.f32 %v3878, %v4077
    %4079 = vmatmul.f32.gmra.mxu0 %v3865
    %v4080 = vpop.f32.mrf.mxu0
    %v4081 = vadd.f32 %v3878, %v4080
    %4082 = vmatmul.f32.gmra.mxu0 %v3869
    %v4083 = vpop.f32.mrf.mxu0
    %v4084 = vadd.f32 %v3878, %v4083
    %4085 = vmatmul.f32.gmra.mxu0 %v3873
    %v4086 = vpop.f32.mrf.mxu0
    %v4087 = vadd.f32 %v3878, %v4086
    %4088 = vdwg.mxu0
    %4089 = vmatpush.msra.mxu0 %v3059
    %4090 = vmatpush.msra.mxu0 %v3056
    %4091 = vmatpush.msra.mxu0 %v3053
    %4092 = vmatpush.msra.mxu0 %v3050
    %4093 = vmatpush.msra.mxu0 %v3047
    %4094 = vmatpush.msra.mxu0 %v3044
    %4095 = vmatpush.msra.mxu0 %v3041
    %4096 = vmatpush.msra.mxu0 %v3038
    %4097 = vmatpush.msra.mxu0 %v3035
    %4098 = vmatpush.msra.mxu0 %v3032
    %4099 = vmatpush.msra.mxu0 %v3029
    %4100 = vmatpush.msra.mxu0 %v3026
    %4101 = vmatpush.msra.mxu0 %v3023
    %4102 = vmatpush.msra.mxu0 %v3020
    %4103 = vmatpush.msra.mxu0 %v3017
    %4104 = vmatpush.msra.mxu0 %v3014
    %4105 = vmatmul.f32.gmra.mxu0 %v3622
    %v4106 = vpop.f32.mrf.mxu0
    %v4107 = vadd.f32 %v3898, %v4106
    %4108 = vmatmul.f32.gmra.mxu0 %v3626
    %v4109 = vpop.f32.mrf.mxu0
    %v4110 = vadd.f32 %v3901, %v4109
    %4111 = vmatmul.f32.gmra.mxu0 %v3630
    %v4112 = vpop.f32.mrf.mxu0
    %v4113 = vadd.f32 %v3904, %v4112
    %4114 = vmatmul.f32.gmra.mxu0 %v3634
    %v4115 = vpop.f32.mrf.mxu0
    %v4116 = vadd.f32 %v3907, %v4115
    %4117 = vmatmul.f32.gmra.mxu0 %v3638
    %v4118 = vpop.f32.mrf.mxu0
    %v4119 = vadd.f32 %v3910, %v4118
    %4120 = vmatmul.f32.gmra.mxu0 %v3642
    %v4121 = vpop.f32.mrf.mxu0
    %v4122 = vadd.f32 %v3913, %v4121
    %4123 = vmatmul.f32.gmra.mxu0 %v3646
    %v4124 = vpop.f32.mrf.mxu0
    %v4125 = vadd.f32 %v3916, %v4124
    %4126 = vmatmul.f32.gmra.mxu0 %v3650
    %v4127 = vpop.f32.mrf.mxu0
    %v4128 = vadd.f32 %v3919, %v4127
    %4129 = vmatmul.f32.gmra.mxu0 %v3654
    %v4130 = vpop.f32.mrf.mxu0
    %v4131 = vadd.f32 %v3922, %v4130
    %4132 = vmatmul.f32.gmra.mxu0 %v3658
    %v4133 = vpop.f32.mrf.mxu0
    %v4134 = vadd.f32 %v3925, %v4133
    %4135 = vmatmul.f32.gmra.mxu0 %v3662
    %v4136 = vpop.f32.mrf.mxu0
    %v4137 = vadd.f32 %v3928, %v4136
    %4138 = vmatmul.f32.gmra.mxu0 %v3666
    %v4139 = vpop.f32.mrf.mxu0
    %v4140 = vadd.f32 %v3931, %v4139
    %4141 = vmatmul.f32.gmra.mxu0 %v3670
    %v4142 = vpop.f32.mrf.mxu0
    %v4143 = vadd.f32 %v3934, %v4142
    %4144 = vmatmul.f32.gmra.mxu0 %v3674
    %v4145 = vpop.f32.mrf.mxu0
    %v4146 = vadd.f32 %v3937, %v4145
    %4147 = vmatmul.f32.gmra.mxu0 %v3678
    %v4148 = vpop.f32.mrf.mxu0
    %v4149 = vadd.f32 %v3940, %v4148
    %4150 = vmatmul.f32.gmra.mxu0 %v3682
    %v4151 = vpop.f32.mrf.mxu0
    %v4152 = vadd.f32 %v3943, %v4151
    %4153 = vmatmul.f32.gmra.mxu0 %v3686
    %v4154 = vpop.f32.mrf.mxu0
    %v4155 = vadd.f32 %v3946, %v4154
    %4156 = vmatmul.f32.gmra.mxu0 %v3690
    %v4157 = vpop.f32.mrf.mxu0
    %v4158 = vadd.f32 %v3949, %v4157
    %4159 = vmatmul.f32.gmra.mxu0 %v3694
    %v4160 = vpop.f32.mrf.mxu0
    %v4161 = vadd.f32 %v3952, %v4160
    %4162 = vmatmul.f32.gmra.mxu0 %v3698
    %v4163 = vpop.f32.mrf.mxu0
    %v4164 = vadd.f32 %v3955, %v4163
    %4165 = vmatmul.f32.gmra.mxu0 %v3702
    %v4166 = vpop.f32.mrf.mxu0
    %v4167 = vadd.f32 %v3958, %v4166
    %4168 = vmatmul.f32.gmra.mxu0 %v3706
    %v4169 = vpop.f32.mrf.mxu0
    %v4170 = vadd.f32 %v3961, %v4169
    %4171 = vmatmul.f32.gmra.mxu0 %v3710
    %v4172 = vpop.f32.mrf.mxu0
    %v4173 = vadd.f32 %v3964, %v4172
    %4174 = vmatmul.f32.gmra.mxu0 %v3714
    %v4175 = vpop.f32.mrf.mxu0
    %v4176 = vadd.f32 %v3967, %v4175
    %4177 = vmatmul.f32.gmra.mxu0 %v3718
    %v4178 = vpop.f32.mrf.mxu0
    %v4179 = vadd.f32 %v3970, %v4178
    %4180 = vmatmul.f32.gmra.mxu0 %v3722
    %v4181 = vpop.f32.mrf.mxu0
    %v4182 = vadd.f32 %v3973, %v4181
    %4183 = vmatmul.f32.gmra.mxu0 %v3726
    %v4184 = vpop.f32.mrf.mxu0
    %v4185 = vadd.f32 %v3976, %v4184
    %4186 = vmatmul.f32.gmra.mxu0 %v3730
    %v4187 = vpop.f32.mrf.mxu0
    %v4188 = vadd.f32 %v3979, %v4187
    %4189 = vmatmul.f32.gmra.mxu0 %v3734
    %v4190 = vpop.f32.mrf.mxu0
    %v4191 = vadd.f32 %v3982, %v4190
    %4192 = vmatmul.f32.gmra.mxu0 %v3738
    %v4193 = vpop.f32.mrf.mxu0
    %v4194 = vadd.f32 %v3985, %v4193
    %4195 = vmatmul.f32.gmra.mxu0 %v3742
    %v4196 = vpop.f32.mrf.mxu0
    %v4197 = vadd.f32 %v3988, %v4196
    %4198 = vmatmul.f32.gmra.mxu0 %v3746
    %v4199 = vpop.f32.mrf.mxu0
    %v4200 = vadd.f32 %v3991, %v4199
    %4201 = vmatmul.f32.gmra.mxu0 %v3750
    %v4202 = vpop.f32.mrf.mxu0
    %v4203 = vadd.f32 %v3994, %v4202
    %4204 = vmatmul.f32.gmra.mxu0 %v3754
    %v4205 = vpop.f32.mrf.mxu0
    %v4206 = vadd.f32 %v3997, %v4205
    %4207 = vmatmul.f32.gmra.mxu0 %v3758
    %v4208 = vpop.f32.mrf.mxu0
    %v4209 = vadd.f32 %v4000, %v4208
    %4210 = vmatmul.f32.gmra.mxu0 %v3762
    %v4211 = vpop.f32.mrf.mxu0
    %v4212 = vadd.f32 %v4003, %v4211
    %4213 = vmatmul.f32.gmra.mxu0 %v3766
    %v4214 = vpop.f32.mrf.mxu0
    %v4215 = vadd.f32 %v4006, %v4214
    %4216 = vmatmul.f32.gmra.mxu0 %v3770
    %v4217 = vpop.f32.mrf.mxu0
    %v4218 = vadd.f32 %v4009, %v4217
    %4219 = vmatmul.f32.gmra.mxu0 %v3774
    %v4220 = vpop.f32.mrf.mxu0
    %v4221 = vadd.f32 %v4012, %v4220
    %4222 = vmatmul.f32.gmra.mxu0 %v3778
    %v4223 = vpop.f32.mrf.mxu0
    %v4224 = vadd.f32 %v4015, %v4223
    %4225 = vmatmul.f32.gmra.mxu0 %v3782
    %v4226 = vpop.f32.mrf.mxu0
    %v4227 = vadd.f32 %v4018, %v4226
    %4228 = vmatmul.f32.gmra.mxu0 %v3786
    %v4229 = vpop.f32.mrf.mxu0
    %v4230 = vadd.f32 %v4021, %v4229
    %4231 = vmatmul.f32.gmra.mxu0 %v3790
    %v4232 = vpop.f32.mrf.mxu0
    %v4233 = vadd.f32 %v4024, %v4232
    %4234 = vmatmul.f32.gmra.mxu0 %v3794
    %v4235 = vpop.f32.mrf.mxu0
    %v4236 = vadd.f32 %v4027, %v4235
    %4237 = vmatmul.f32.gmra.mxu0 %v3798
    %v4238 = vpop.f32.mrf.mxu0
    %v4239 = vadd.f32 %v4030, %v4238
    %4240 = vmatmul.f32.gmra.mxu0 %v3802
    %v4241 = vpop.f32.mrf.mxu0
    %v4242 = vadd.f32 %v4033, %v4241
    %4243 = vmatmul.f32.gmra.mxu0 %v3806
    %v4244 = vpop.f32.mrf.mxu0
    %v4245 = vadd.f32 %v4036, %v4244
    %4246 = vmatmul.f32.gmra.mxu0 %v3810
    %v4247 = vpop.f32.mrf.mxu0
    %v4248 = vadd.f32 %v4039, %v4247
    %4249 = vmatmul.f32.gmra.mxu0 %v3814
    %v4250 = vpop.f32.mrf.mxu0
    %v4251 = vadd.f32 %v4042, %v4250
    %4252 = vmatmul.f32.gmra.mxu0 %v3818
    %v4253 = vpop.f32.mrf.mxu0
    %v4254 = vadd.f32 %v4045, %v4253
    %4255 = vmatmul.f32.gmra.mxu0 %v3822
    %v4256 = vpop.f32.mrf.mxu0
    %v4257 = vadd.f32 %v4048, %v4256
    %4258 = vmatmul.f32.gmra.mxu0 %v3826
    %v4259 = vpop.f32.mrf.mxu0
    %v4260 = vadd.f32 %v4051, %v4259
    %4261 = vmatmul.f32.gmra.mxu0 %v3830
    %v4262 = vpop.f32.mrf.mxu0
    %v4263 = vadd.f32 %v4054, %v4262
    %4264 = vmatmul.f32.gmra.mxu0 %v3834
    %v4265 = vpop.f32.mrf.mxu0
    %v4266 = vadd.f32 %v4057, %v4265
    %4267 = vmatmul.f32.gmra.mxu0 %v3838
    %v4268 = vpop.f32.mrf.mxu0
    %v4269 = vadd.f32 %v4060, %v4268
    %4270 = vmatmul.f32.gmra.mxu0 %v3842
    %v4271 = vpop.f32.mrf.mxu0
    %v4272 = vadd.f32 %v4063, %v4271
    %4273 = vmatmul.f32.gmra.mxu0 %v3846
    %v4274 = vpop.f32.mrf.mxu0
    %v4275 = vadd.f32 %v4066, %v4274
    %4276 = vmatmul.f32.gmra.mxu0 %v3850
    %v4277 = vpop.f32.mrf.mxu0
    %v4278 = vadd.f32 %v4069, %v4277
    %4279 = vmatmul.f32.gmra.mxu0 %v3854
    %v4280 = vpop.f32.mrf.mxu0
    %v4281 = vadd.f32 %v4072, %v4280
    %4282 = vmatmul.f32.gmra.mxu0 %v3858
    %v4283 = vpop.f32.mrf.mxu0
    %v4284 = vadd.f32 %v4075, %v4283
    %4285 = vmatmul.f32.gmra.mxu0 %v3862
    %v4286 = vpop.f32.mrf.mxu0
    %v4287 = vadd.f32 %v4078, %v4286
    %4288 = vmatmul.f32.gmra.mxu0 %v3866
    %v4289 = vpop.f32.mrf.mxu0
    %v4290 = vadd.f32 %v4081, %v4289
    %4291 = vmatmul.f32.gmra.mxu0 %v3870
    %v4292 = vpop.f32.mrf.mxu0
    %v4293 = vadd.f32 %v4084, %v4292
    %4294 = vmatmul.f32.gmra.mxu0 %v3874
    %v4295 = vpop.f32.mrf.mxu0
    %v4296 = vadd.f32 %v4087, %v4295
    %4297 = vdwg.mxu0
    %4298 = vmatpush.msra.mxu0 %v3107
    %4299 = vmatpush.msra.mxu0 %v3104
    %4300 = vmatpush.msra.mxu0 %v3101
    %4301 = vmatpush.msra.mxu0 %v3098
    %4302 = vmatpush.msra.mxu0 %v3095
    %4303 = vmatpush.msra.mxu0 %v3092
    %4304 = vmatpush.msra.mxu0 %v3089
    %4305 = vmatpush.msra.mxu0 %v3086
    %4306 = vmatpush.msra.mxu0 %v3083
    %4307 = vmatpush.msra.mxu0 %v3080
    %4308 = vmatpush.msra.mxu0 %v3077
    %4309 = vmatpush.msra.mxu0 %v3074
    %4310 = vmatpush.msra.mxu0 %v3071
    %4311 = vmatpush.msra.mxu0 %v3068
    %4312 = vmatpush.msra.mxu0 %v3065
    %4313 = vmatpush.msra.mxu0 %v3062
    %4314 = vmatmul.f32.gmra.mxu0 %v3623
    %v4315 = vpop.f32.mrf.mxu0
    %v4316 = vadd.f32 %v4107, %v4315
    %4317 = vmatmul.f32.gmra.mxu0 %v3627
    %v4318 = vpop.f32.mrf.mxu0
    %v4319 = vadd.f32 %v4110, %v4318
    %4320 = vmatmul.f32.gmra.mxu0 %v3631
    %v4321 = vpop.f32.mrf.mxu0
    %v4322 = vadd.f32 %v4113, %v4321
    %4323 = vmatmul.f32.gmra.mxu0 %v3635
    %v4324 = vpop.f32.mrf.mxu0
    %v4325 = vadd.f32 %v4116, %v4324
    %4326 = vmatmul.f32.gmra.mxu0 %v3639
    %v4327 = vpop.f32.mrf.mxu0
    %v4328 = vadd.f32 %v4119, %v4327
    %4329 = vmatmul.f32.gmra.mxu0 %v3643
    %v4330 = vpop.f32.mrf.mxu0
    %v4331 = vadd.f32 %v4122, %v4330
    %4332 = vmatmul.f32.gmra.mxu0 %v3647
    %v4333 = vpop.f32.mrf.mxu0
    %v4334 = vadd.f32 %v4125, %v4333
    %4335 = vmatmul.f32.gmra.mxu0 %v3651
    %v4336 = vpop.f32.mrf.mxu0
    %v4337 = vadd.f32 %v4128, %v4336
    %4338 = vmatmul.f32.gmra.mxu0 %v3655
    %v4339 = vpop.f32.mrf.mxu0
    %v4340 = vadd.f32 %v4131, %v4339
    %4341 = vmatmul.f32.gmra.mxu0 %v3659
    %v4342 = vpop.f32.mrf.mxu0
    %v4343 = vadd.f32 %v4134, %v4342
    %4344 = vmatmul.f32.gmra.mxu0 %v3663
    %v4345 = vpop.f32.mrf.mxu0
    %v4346 = vadd.f32 %v4137, %v4345
    %4347 = vmatmul.f32.gmra.mxu0 %v3667
    %v4348 = vpop.f32.mrf.mxu0
    %v4349 = vadd.f32 %v4140, %v4348
    %4350 = vmatmul.f32.gmra.mxu0 %v3671
    %v4351 = vpop.f32.mrf.mxu0
    %v4352 = vadd.f32 %v4143, %v4351
    %4353 = vmatmul.f32.gmra.mxu0 %v3675
    %v4354 = vpop.f32.mrf.mxu0
    %v4355 = vadd.f32 %v4146, %v4354
    %4356 = vmatmul.f32.gmra.mxu0 %v3679
    %v4357 = vpop.f32.mrf.mxu0
    %v4358 = vadd.f32 %v4149, %v4357
    %4359 = vmatmul.f32.gmra.mxu0 %v3683
    %v4360 = vpop.f32.mrf.mxu0
    %v4361 = vadd.f32 %v4152, %v4360
    %4362 = vmatmul.f32.gmra.mxu0 %v3687
    %v4363 = vpop.f32.mrf.mxu0
    %v4364 = vadd.f32 %v4155, %v4363
    %4365 = vmatmul.f32.gmra.mxu0 %v3691
    %v4366 = vpop.f32.mrf.mxu0
    %v4367 = vadd.f32 %v4158, %v4366
    %4368 = vmatmul.f32.gmra.mxu0 %v3695
    %v4369 = vpop.f32.mrf.mxu0
    %v4370 = vadd.f32 %v4161, %v4369
    %4371 = vmatmul.f32.gmra.mxu0 %v3699
    %v4372 = vpop.f32.mrf.mxu0
    %v4373 = vadd.f32 %v4164, %v4372
    %4374 = vmatmul.f32.gmra.mxu0 %v3703
    %v4375 = vpop.f32.mrf.mxu0
    %v4376 = vadd.f32 %v4167, %v4375
    %4377 = vmatmul.f32.gmra.mxu0 %v3707
    %v4378 = vpop.f32.mrf.mxu0
    %v4379 = vadd.f32 %v4170, %v4378
    %4380 = vmatmul.f32.gmra.mxu0 %v3711
    %v4381 = vpop.f32.mrf.mxu0
    %v4382 = vadd.f32 %v4173, %v4381
    %4383 = vmatmul.f32.gmra.mxu0 %v3715
    %v4384 = vpop.f32.mrf.mxu0
    %v4385 = vadd.f32 %v4176, %v4384
    %4386 = vmatmul.f32.gmra.mxu0 %v3719
    %v4387 = vpop.f32.mrf.mxu0
    %v4388 = vadd.f32 %v4179, %v4387
    %4389 = vmatmul.f32.gmra.mxu0 %v3723
    %v4390 = vpop.f32.mrf.mxu0
    %v4391 = vadd.f32 %v4182, %v4390
    %4392 = vmatmul.f32.gmra.mxu0 %v3727
    %v4393 = vpop.f32.mrf.mxu0
    %v4394 = vadd.f32 %v4185, %v4393
    %4395 = vmatmul.f32.gmra.mxu0 %v3731
    %v4396 = vpop.f32.mrf.mxu0
    %v4397 = vadd.f32 %v4188, %v4396
    %4398 = vmatmul.f32.gmra.mxu0 %v3735
    %v4399 = vpop.f32.mrf.mxu0
    %v4400 = vadd.f32 %v4191, %v4399
    %4401 = vmatmul.f32.gmra.mxu0 %v3739
    %v4402 = vpop.f32.mrf.mxu0
    %v4403 = vadd.f32 %v4194, %v4402
    %4404 = vmatmul.f32.gmra.mxu0 %v3743
    %v4405 = vpop.f32.mrf.mxu0
    %v4406 = vadd.f32 %v4197, %v4405
    %4407 = vmatmul.f32.gmra.mxu0 %v3747
    %v4408 = vpop.f32.mrf.mxu0
    %v4409 = vadd.f32 %v4200, %v4408
    %4410 = vmatmul.f32.gmra.mxu0 %v3751
    %v4411 = vpop.f32.mrf.mxu0
    %v4412 = vadd.f32 %v4203, %v4411
    %4413 = vmatmul.f32.gmra.mxu0 %v3755
    %v4414 = vpop.f32.mrf.mxu0
    %v4415 = vadd.f32 %v4206, %v4414
    %4416 = vmatmul.f32.gmra.mxu0 %v3759
    %v4417 = vpop.f32.mrf.mxu0
    %v4418 = vadd.f32 %v4209, %v4417
    %4419 = vmatmul.f32.gmra.mxu0 %v3763
    %v4420 = vpop.f32.mrf.mxu0
    %v4421 = vadd.f32 %v4212, %v4420
    %4422 = vmatmul.f32.gmra.mxu0 %v3767
    %v4423 = vpop.f32.mrf.mxu0
    %v4424 = vadd.f32 %v4215, %v4423
    %4425 = vmatmul.f32.gmra.mxu0 %v3771
    %v4426 = vpop.f32.mrf.mxu0
    %v4427 = vadd.f32 %v4218, %v4426
    %4428 = vmatmul.f32.gmra.mxu0 %v3775
    %v4429 = vpop.f32.mrf.mxu0
    %v4430 = vadd.f32 %v4221, %v4429
    %4431 = vmatmul.f32.gmra.mxu0 %v3779
    %v4432 = vpop.f32.mrf.mxu0
    %v4433 = vadd.f32 %v4224, %v4432
    %4434 = vmatmul.f32.gmra.mxu0 %v3783
    %v4435 = vpop.f32.mrf.mxu0
    %v4436 = vadd.f32 %v4227, %v4435
    %4437 = vmatmul.f32.gmra.mxu0 %v3787
    %v4438 = vpop.f32.mrf.mxu0
    %v4439 = vadd.f32 %v4230, %v4438
    %4440 = vmatmul.f32.gmra.mxu0 %v3791
    %v4441 = vpop.f32.mrf.mxu0
    %v4442 = vadd.f32 %v4233, %v4441
    %4443 = vmatmul.f32.gmra.mxu0 %v3795
    %v4444 = vpop.f32.mrf.mxu0
    %v4445 = vadd.f32 %v4236, %v4444
    %4446 = vmatmul.f32.gmra.mxu0 %v3799
    %v4447 = vpop.f32.mrf.mxu0
    %v4448 = vadd.f32 %v4239, %v4447
    %4449 = vmatmul.f32.gmra.mxu0 %v3803
    %v4450 = vpop.f32.mrf.mxu0
    %v4451 = vadd.f32 %v4242, %v4450
    %4452 = vmatmul.f32.gmra.mxu0 %v3807
    %v4453 = vpop.f32.mrf.mxu0
    %v4454 = vadd.f32 %v4245, %v4453
    %4455 = vmatmul.f32.gmra.mxu0 %v3811
    %v4456 = vpop.f32.mrf.mxu0
    %v4457 = vadd.f32 %v4248, %v4456
    %4458 = vmatmul.f32.gmra.mxu0 %v3815
    %v4459 = vpop.f32.mrf.mxu0
    %v4460 = vadd.f32 %v4251, %v4459
    %4461 = vmatmul.f32.gmra.mxu0 %v3819
    %v4462 = vpop.f32.mrf.mxu0
    %v4463 = vadd.f32 %v4254, %v4462
    %4464 = vmatmul.f32.gmra.mxu0 %v3823
    %v4465 = vpop.f32.mrf.mxu0
    %v4466 = vadd.f32 %v4257, %v4465
    %4467 = vmatmul.f32.gmra.mxu0 %v3827
    %v4468 = vpop.f32.mrf.mxu0
    %v4469 = vadd.f32 %v4260, %v4468
    %4470 = vmatmul.f32.gmra.mxu0 %v3831
    %v4471 = vpop.f32.mrf.mxu0
    %v4472 = vadd.f32 %v4263, %v4471
    %4473 = vmatmul.f32.gmra.mxu0 %v3835
    %v4474 = vpop.f32.mrf.mxu0
    %v4475 = vadd.f32 %v4266, %v4474
    %4476 = vmatmul.f32.gmra.mxu0 %v3839
    %v4477 = vpop.f32.mrf.mxu0
    %v4478 = vadd.f32 %v4269, %v4477
    %4479 = vmatmul.f32.gmra.mxu0 %v3843
    %v4480 = vpop.f32.mrf.mxu0
    %v4481 = vadd.f32 %v4272, %v4480
    %4482 = vmatmul.f32.gmra.mxu0 %v3847
    %v4483 = vpop.f32.mrf.mxu0
    %v4484 = vadd.f32 %v4275, %v4483
    %4485 = vmatmul.f32.gmra.mxu0 %v3851
    %v4486 = vpop.f32.mrf.mxu0
    %v4487 = vadd.f32 %v4278, %v4486
    %4488 = vmatmul.f32.gmra.mxu0 %v3855
    %v4489 = vpop.f32.mrf.mxu0
    %v4490 = vadd.f32 %v4281, %v4489
    %4491 = vmatmul.f32.gmra.mxu0 %v3859
    %v4492 = vpop.f32.mrf.mxu0
    %v4493 = vadd.f32 %v4284, %v4492
    %4494 = vmatmul.f32.gmra.mxu0 %v3863
    %v4495 = vpop.f32.mrf.mxu0
    %v4496 = vadd.f32 %v4287, %v4495
    %4497 = vmatmul.f32.gmra.mxu0 %v3867
    %v4498 = vpop.f32.mrf.mxu0
    %v4499 = vadd.f32 %v4290, %v4498
    %4500 = vmatmul.f32.gmra.mxu0 %v3871
    %v4501 = vpop.f32.mrf.mxu0
    %v4502 = vadd.f32 %v4293, %v4501
    %4503 = vmatmul.f32.gmra.mxu0 %v3875
    %v4504 = vpop.f32.mrf.mxu0
    %v4505 = vadd.f32 %v4296, %v4504
    %4506 = vdwg.mxu0
    %4507 = vmatpush.msra.mxu0 %v3155
    %4508 = vmatpush.msra.mxu0 %v3152
    %4509 = vmatpush.msra.mxu0 %v3149
    %4510 = vmatpush.msra.mxu0 %v3146
    %4511 = vmatpush.msra.mxu0 %v3143
    %4512 = vmatpush.msra.mxu0 %v3140
    %4513 = vmatpush.msra.mxu0 %v3137
    %4514 = vmatpush.msra.mxu0 %v3134
    %4515 = vmatpush.msra.mxu0 %v3131
    %4516 = vmatpush.msra.mxu0 %v3128
    %4517 = vmatpush.msra.mxu0 %v3125
    %4518 = vmatpush.msra.mxu0 %v3122
    %4519 = vmatpush.msra.mxu0 %v3119
    %4520 = vmatpush.msra.mxu0 %v3116
    %4521 = vmatpush.msra.mxu0 %v3113
    %4522 = vmatpush.msra.mxu0 %v3110
    %4523 = vmatmul.f32.gmra.mxu0 %v3624
    %v4524 = vpop.f32.mrf.mxu0
    %v4525 = vadd.f32 %v4316, %v4524
    %4526 = vmatmul.f32.gmra.mxu0 %v3628
    %v4527 = vpop.f32.mrf.mxu0
    %v4528 = vadd.f32 %v4319, %v4527
    %4529 = vmatmul.f32.gmra.mxu0 %v3632
    %v4530 = vpop.f32.mrf.mxu0
    %v4531 = vadd.f32 %v4322, %v4530
    %4532 = vmatmul.f32.gmra.mxu0 %v3636
    %v4533 = vpop.f32.mrf.mxu0
    %v4534 = vadd.f32 %v4325, %v4533
    %4535 = vmatmul.f32.gmra.mxu0 %v3640
    %v4536 = vpop.f32.mrf.mxu0
    %v4537 = vadd.f32 %v4328, %v4536
    %4538 = vmatmul.f32.gmra.mxu0 %v3644
    %v4539 = vpop.f32.mrf.mxu0
    %v4540 = vadd.f32 %v4331, %v4539
    %4541 = vmatmul.f32.gmra.mxu0 %v3648
    %v4542 = vpop.f32.mrf.mxu0
    %v4543 = vadd.f32 %v4334, %v4542
    %4544 = vmatmul.f32.gmra.mxu0 %v3652
    %v4545 = vpop.f32.mrf.mxu0
    %v4546 = vadd.f32 %v4337, %v4545
    %4547 = vmatmul.f32.gmra.mxu0 %v3656
    %v4548 = vpop.f32.mrf.mxu0
    %v4549 = vadd.f32 %v4340, %v4548
    %4550 = vmatmul.f32.gmra.mxu0 %v3660
    %v4551 = vpop.f32.mrf.mxu0
    %v4552 = vadd.f32 %v4343, %v4551
    %4553 = vmatmul.f32.gmra.mxu0 %v3664
    %v4554 = vpop.f32.mrf.mxu0
    %v4555 = vadd.f32 %v4346, %v4554
    %4556 = vmatmul.f32.gmra.mxu0 %v3668
    %v4557 = vpop.f32.mrf.mxu0
    %v4558 = vadd.f32 %v4349, %v4557
    %4559 = vmatmul.f32.gmra.mxu0 %v3672
    %v4560 = vpop.f32.mrf.mxu0
    %v4561 = vadd.f32 %v4352, %v4560
    %4562 = vmatmul.f32.gmra.mxu0 %v3676
    %v4563 = vpop.f32.mrf.mxu0
    %v4564 = vadd.f32 %v4355, %v4563
    %4565 = vmatmul.f32.gmra.mxu0 %v3680
    %v4566 = vpop.f32.mrf.mxu0
    %v4567 = vadd.f32 %v4358, %v4566
    %4568 = vmatmul.f32.gmra.mxu0 %v3684
    %v4569 = vpop.f32.mrf.mxu0
    %v4570 = vadd.f32 %v4361, %v4569
    %4571 = vmatmul.f32.gmra.mxu0 %v3688
    %v4572 = vpop.f32.mrf.mxu0
    %v4573 = vadd.f32 %v4364, %v4572
    %4574 = vmatmul.f32.gmra.mxu0 %v3692
    %v4575 = vpop.f32.mrf.mxu0
    %v4576 = vadd.f32 %v4367, %v4575
    %4577 = vmatmul.f32.gmra.mxu0 %v3696
    %v4578 = vpop.f32.mrf.mxu0
    %v4579 = vadd.f32 %v4370, %v4578
    %4580 = vmatmul.f32.gmra.mxu0 %v3700
    %v4581 = vpop.f32.mrf.mxu0
    %v4582 = vadd.f32 %v4373, %v4581
    %4583 = vmatmul.f32.gmra.mxu0 %v3704
    %v4584 = vpop.f32.mrf.mxu0
    %v4585 = vadd.f32 %v4376, %v4584
    %4586 = vmatmul.f32.gmra.mxu0 %v3708
    %v4587 = vpop.f32.mrf.mxu0
    %v4588 = vadd.f32 %v4379, %v4587
    %4589 = vmatmul.f32.gmra.mxu0 %v3712
    %v4590 = vpop.f32.mrf.mxu0
    %v4591 = vadd.f32 %v4382, %v4590
    %4592 = vmatmul.f32.gmra.mxu0 %v3716
    %v4593 = vpop.f32.mrf.mxu0
    %v4594 = vadd.f32 %v4385, %v4593
    %4595 = vmatmul.f32.gmra.mxu0 %v3720
    %v4596 = vpop.f32.mrf.mxu0
    %v4597 = vadd.f32 %v4388, %v4596
    %4598 = vmatmul.f32.gmra.mxu0 %v3724
    %v4599 = vpop.f32.mrf.mxu0
    %v4600 = vadd.f32 %v4391, %v4599
    %4601 = vmatmul.f32.gmra.mxu0 %v3728
    %v4602 = vpop.f32.mrf.mxu0
    %v4603 = vadd.f32 %v4394, %v4602
    %4604 = vmatmul.f32.gmra.mxu0 %v3732
    %v4605 = vpop.f32.mrf.mxu0
    %v4606 = vadd.f32 %v4397, %v4605
    %4607 = vmatmul.f32.gmra.mxu0 %v3736
    %v4608 = vpop.f32.mrf.mxu0
    %v4609 = vadd.f32 %v4400, %v4608
    %4610 = vmatmul.f32.gmra.mxu0 %v3740
    %v4611 = vpop.f32.mrf.mxu0
    %v4612 = vadd.f32 %v4403, %v4611
    %4613 = vmatmul.f32.gmra.mxu0 %v3744
    %v4614 = vpop.f32.mrf.mxu0
    %v4615 = vadd.f32 %v4406, %v4614
    %4616 = vmatmul.f32.gmra.mxu0 %v3748
    %v4617 = vpop.f32.mrf.mxu0
    %v4618 = vadd.f32 %v4409, %v4617
    %4619 = vmatmul.f32.gmra.mxu0 %v3752
    %v4620 = vpop.f32.mrf.mxu0
    %v4621 = vadd.f32 %v4412, %v4620
    %4622 = vmatmul.f32.gmra.mxu0 %v3756
    %v4623 = vpop.f32.mrf.mxu0
    %v4624 = vadd.f32 %v4415, %v4623
    %4625 = vmatmul.f32.gmra.mxu0 %v3760
    %v4626 = vpop.f32.mrf.mxu0
    %v4627 = vadd.f32 %v4418, %v4626
    %4628 = vmatmul.f32.gmra.mxu0 %v3764
    %v4629 = vpop.f32.mrf.mxu0
    %v4630 = vadd.f32 %v4421, %v4629
    %4631 = vmatmul.f32.gmra.mxu0 %v3768
    %v4632 = vpop.f32.mrf.mxu0
    %v4633 = vadd.f32 %v4424, %v4632
    %4634 = vmatmul.f32.gmra.mxu0 %v3772
    %v4635 = vpop.f32.mrf.mxu0
    %v4636 = vadd.f32 %v4427, %v4635
    %4637 = vmatmul.f32.gmra.mxu0 %v3776
    %v4638 = vpop.f32.mrf.mxu0
    %v4639 = vadd.f32 %v4430, %v4638
    %4640 = vmatmul.f32.gmra.mxu0 %v3780
    %v4641 = vpop.f32.mrf.mxu0
    %v4642 = vadd.f32 %v4433, %v4641
    %4643 = vmatmul.f32.gmra.mxu0 %v3784
    %v4644 = vpop.f32.mrf.mxu0
    %v4645 = vadd.f32 %v4436, %v4644
    %4646 = vmatmul.f32.gmra.mxu0 %v3788
    %v4647 = vpop.f32.mrf.mxu0
    %v4648 = vadd.f32 %v4439, %v4647
    %4649 = vmatmul.f32.gmra.mxu0 %v3792
    %v4650 = vpop.f32.mrf.mxu0
    %v4651 = vadd.f32 %v4442, %v4650
    %4652 = vmatmul.f32.gmra.mxu0 %v3796
    %v4653 = vpop.f32.mrf.mxu0
    %v4654 = vadd.f32 %v4445, %v4653
    %4655 = vmatmul.f32.gmra.mxu0 %v3800
    %v4656 = vpop.f32.mrf.mxu0
    %v4657 = vadd.f32 %v4448, %v4656
    %4658 = vmatmul.f32.gmra.mxu0 %v3804
    %v4659 = vpop.f32.mrf.mxu0
    %v4660 = vadd.f32 %v4451, %v4659
    %4661 = vmatmul.f32.gmra.mxu0 %v3808
    %v4662 = vpop.f32.mrf.mxu0
    %v4663 = vadd.f32 %v4454, %v4662
    %4664 = vmatmul.f32.gmra.mxu0 %v3812
    %v4665 = vpop.f32.mrf.mxu0
    %v4666 = vadd.f32 %v4457, %v4665
    %4667 = vmatmul.f32.gmra.mxu0 %v3816
    %v4668 = vpop.f32.mrf.mxu0
    %v4669 = vadd.f32 %v4460, %v4668
    %4670 = vmatmul.f32.gmra.mxu0 %v3820
    %v4671 = vpop.f32.mrf.mxu0
    %v4672 = vadd.f32 %v4463, %v4671
    %4673 = vmatmul.f32.gmra.mxu0 %v3824
    %v4674 = vpop.f32.mrf.mxu0
    %v4675 = vadd.f32 %v4466, %v4674
    %4676 = vmatmul.f32.gmra.mxu0 %v3828
    %v4677 = vpop.f32.mrf.mxu0
    %v4678 = vadd.f32 %v4469, %v4677
    %4679 = vmatmul.f32.gmra.mxu0 %v3832
    %v4680 = vpop.f32.mrf.mxu0
    %v4681 = vadd.f32 %v4472, %v4680
    %4682 = vmatmul.f32.gmra.mxu0 %v3836
    %v4683 = vpop.f32.mrf.mxu0
    %v4684 = vadd.f32 %v4475, %v4683
    %4685 = vmatmul.f32.gmra.mxu0 %v3840
    %v4686 = vpop.f32.mrf.mxu0
    %v4687 = vadd.f32 %v4478, %v4686
    %4688 = vmatmul.f32.gmra.mxu0 %v3844
    %v4689 = vpop.f32.mrf.mxu0
    %v4690 = vadd.f32 %v4481, %v4689
    %4691 = vmatmul.f32.gmra.mxu0 %v3848
    %v4692 = vpop.f32.mrf.mxu0
    %v4693 = vadd.f32 %v4484, %v4692
    %4694 = vmatmul.f32.gmra.mxu0 %v3852
    %v4695 = vpop.f32.mrf.mxu0
    %v4696 = vadd.f32 %v4487, %v4695
    %4697 = vmatmul.f32.gmra.mxu0 %v3856
    %v4698 = vpop.f32.mrf.mxu0
    %v4699 = vadd.f32 %v4490, %v4698
    %4700 = vmatmul.f32.gmra.mxu0 %v3860
    %v4701 = vpop.f32.mrf.mxu0
    %v4702 = vadd.f32 %v4493, %v4701
    %4703 = vmatmul.f32.gmra.mxu0 %v3864
    %v4704 = vpop.f32.mrf.mxu0
    %v4705 = vadd.f32 %v4496, %v4704
    %4706 = vmatmul.f32.gmra.mxu0 %v3868
    %v4707 = vpop.f32.mrf.mxu0
    %v4708 = vadd.f32 %v4499, %v4707
    %4709 = vmatmul.f32.gmra.mxu0 %v3872
    %v4710 = vpop.f32.mrf.mxu0
    %v4711 = vadd.f32 %v4502, %v4710
    %4712 = vmatmul.f32.gmra.mxu0 %v3876
    %v4713 = vpop.f32.mrf.mxu0
    %v4714 = vadd.f32 %v4505, %v4713
    %4715 = vdwg.mxu0
    %v4716 = vmax.f32 %v4525, 0.0
    %v4717 = vmax.f32 %v4528, 0.0
    %v4718 = vmax.f32 %v4531, 0.0
    %v4719 = vmax.f32 %v4534, 0.0
    %v4720 = vmax.f32 %v4537, 0.0
    %v4721 = vmax.f32 %v4540, 0.0
    %v4722 = vmax.f32 %v4543, 0.0
    %v4723 = vmax.f32 %v4546, 0.0
    %v4724 = vmax.f32 %v4549, 0.0
    %v4725 = vmax.f32 %v4552, 0.0
    %v4726 = vmax.f32 %v4555, 0.0
    %v4727 = vmax.f32 %v4558, 0.0
    %v4728 = vmax.f32 %v4561, 0.0
    %v4729 = vmax.f32 %v4564, 0.0
    %v4730 = vmax.f32 %v4567, 0.0
    %v4731 = vmax.f32 %v4570, 0.0
    %v4732 = vmax.f32 %v4573, 0.0
    %v4733 = vmax.f32 %v4576, 0.0
    %v4734 = vmax.f32 %v4579, 0.0
    %v4735 = vmax.f32 %v4582, 0.0
    %v4736 = vmax.f32 %v4585, 0.0
    %v4737 = vmax.f32 %v4588, 0.0
    %v4738 = vmax.f32 %v4591, 0.0
    %v4739 = vmax.f32 %v4594, 0.0
    %v4740 = vmax.f32 %v4597, 0.0
    %v4741 = vmax.f32 %v4600, 0.0
    %v4742 = vmax.f32 %v4603, 0.0
    %v4743 = vmax.f32 %v4606, 0.0
    %v4744 = vmax.f32 %v4609, 0.0
    %v4745 = vmax.f32 %v4612, 0.0
    %v4746 = vmax.f32 %v4615, 0.0
    %v4747 = vmax.f32 %v4618, 0.0
    %v4748 = vmax.f32 %v4621, 0.0
    %v4749 = vmax.f32 %v4624, 0.0
    %v4750 = vmax.f32 %v4627, 0.0
    %v4751 = vmax.f32 %v4630, 0.0
    %v4752 = vmax.f32 %v4633, 0.0
    %v4753 = vmax.f32 %v4636, 0.0
    %v4754 = vmax.f32 %v4639, 0.0
    %v4755 = vmax.f32 %v4642, 0.0
    %v4756 = vmax.f32 %v4645, 0.0
    %v4757 = vmax.f32 %v4648, 0.0
    %v4758 = vmax.f32 %v4651, 0.0
    %v4759 = vmax.f32 %v4654, 0.0
    %v4760 = vmax.f32 %v4657, 0.0
    %v4761 = vmax.f32 %v4660, 0.0
    %v4762 = vmax.f32 %v4663, 0.0
    %v4763 = vmax.f32 %v4666, 0.0
    %v4764 = vmax.f32 %v4669, 0.0
    %v4765 = vmax.f32 %v4672, 0.0
    %v4766 = vmax.f32 %v4675, 0.0
    %v4767 = vmax.f32 %v4678, 0.0
    %v4768 = vmax.f32 %v4681, 0.0
    %v4769 = vmax.f32 %v4684, 0.0
    %v4770 = vmax.f32 %v4687, 0.0
    %v4771 = vmax.f32 %v4690, 0.0
    %v4772 = vmax.f32 %v4693, 0.0
    %v4773 = vmax.f32 %v4696, 0.0
    %v4774 = vmax.f32 %v4699, 0.0
    %v4775 = vmax.f32 %v4702, 0.0
    %v4776 = vmax.f32 %v4705, 0.0
    %v4777 = vmax.f32 %v4708, 0.0
    %v4778 = vmax.f32 %v4711, 0.0
    %v4779 = vmax.f32 %v4714, 0.0
    %v4780 = vmax.f32 %v4716, %v4717
    %v4781 = vmax.f32 %v4780, %v4718
    %v4782 = vmax.f32 %v4781, %v4719
    %v4783 = vrot.slane %v4782, 4
    %v4784 = vmax.f32 %v4782, %v4783
    %v4785 = vrot.slane %v4784, 2
    %v4786 = vmax.f32 %v4784, %v4785
    %v4787 = vrot.slane %v4786, 1
    %v4788 = vmax.f32 %v4786, %v4787
    %v4789 = vmax.f32 %v4720, %v4721
    %v4790 = vmax.f32 %v4789, %v4722
    %v4791 = vmax.f32 %v4790, %v4723
    %v4792 = vrot.slane %v4791, 4
    %v4793 = vmax.f32 %v4791, %v4792
    %v4794 = vrot.slane %v4793, 2
    %v4795 = vmax.f32 %v4793, %v4794
    %v4796 = vrot.slane %v4795, 1
    %v4797 = vmax.f32 %v4795, %v4796
    %v4798 = vmax.f32 %v4724, %v4725
    %v4799 = vmax.f32 %v4798, %v4726
    %v4800 = vmax.f32 %v4799, %v4727
    %v4801 = vrot.slane %v4800, 4
    %v4802 = vmax.f32 %v4800, %v4801
    %v4803 = vrot.slane %v4802, 2
    %v4804 = vmax.f32 %v4802, %v4803
    %v4805 = vrot.slane %v4804, 1
    %v4806 = vmax.f32 %v4804, %v4805
    %v4807 = vmax.f32 %v4728, %v4729
    %v4808 = vmax.f32 %v4807, %v4730
    %v4809 = vmax.f32 %v4808, %v4731
    %v4810 = vrot.slane %v4809, 4
    %v4811 = vmax.f32 %v4809, %v4810
    %v4812 = vrot.slane %v4811, 2
    %v4813 = vmax.f32 %v4811, %v4812
    %v4814 = vrot.slane %v4813, 1
    %v4815 = vmax.f32 %v4813, %v4814
    %v4816 = vmax.f32 %v4732, %v4733
    %v4817 = vmax.f32 %v4816, %v4734
    %v4818 = vmax.f32 %v4817, %v4735
    %v4819 = vrot.slane %v4818, 4
    %v4820 = vmax.f32 %v4818, %v4819
    %v4821 = vrot.slane %v4820, 2
    %v4822 = vmax.f32 %v4820, %v4821
    %v4823 = vrot.slane %v4822, 1
    %v4824 = vmax.f32 %v4822, %v4823
    %v4825 = vmax.f32 %v4736, %v4737
    %v4826 = vmax.f32 %v4825, %v4738
    %v4827 = vmax.f32 %v4826, %v4739
    %v4828 = vrot.slane %v4827, 4
    %v4829 = vmax.f32 %v4827, %v4828
    %v4830 = vrot.slane %v4829, 2
    %v4831 = vmax.f32 %v4829, %v4830
    %v4832 = vrot.slane %v4831, 1
    %v4833 = vmax.f32 %v4831, %v4832
    %v4834 = vmax.f32 %v4740, %v4741
    %v4835 = vmax.f32 %v4834, %v4742
    %v4836 = vmax.f32 %v4835, %v4743
    %v4837 = vrot.slane %v4836, 4
    %v4838 = vmax.f32 %v4836, %v4837
    %v4839 = vrot.slane %v4838, 2
    %v4840 = vmax.f32 %v4838, %v4839
    %v4841 = vrot.slane %v4840, 1
    %v4842 = vmax.f32 %v4840, %v4841
    %v4843 = vmax.f32 %v4744, %v4745
    %v4844 = vmax.f32 %v4843, %v4746
    %v4845 = vmax.f32 %v4844, %v4747
    %v4846 = vrot.slane %v4845, 4
    %v4847 = vmax.f32 %v4845, %v4846
    %v4848 = vrot.slane %v4847, 2
    %v4849 = vmax.f32 %v4847, %v4848
    %v4850 = vrot.slane %v4849, 1
    %v4851 = vmax.f32 %v4849, %v4850
    %v4852 = vmax.f32 %v4748, %v4749
    %v4853 = vmax.f32 %v4852, %v4750
    %v4854 = vmax.f32 %v4853, %v4751
    %v4855 = vrot.slane %v4854, 4
    %v4856 = vmax.f32 %v4854, %v4855
    %v4857 = vrot.slane %v4856, 2
    %v4858 = vmax.f32 %v4856, %v4857
    %v4859 = vrot.slane %v4858, 1
    %v4860 = vmax.f32 %v4858, %v4859
    %v4861 = vmax.f32 %v4752, %v4753
    %v4862 = vmax.f32 %v4861, %v4754
    %v4863 = vmax.f32 %v4862, %v4755
    %v4864 = vrot.slane %v4863, 4
    %v4865 = vmax.f32 %v4863, %v4864
    %v4866 = vrot.slane %v4865, 2
    %v4867 = vmax.f32 %v4865, %v4866
    %v4868 = vrot.slane %v4867, 1
    %v4869 = vmax.f32 %v4867, %v4868
    %v4870 = vmax.f32 %v4756, %v4757
    %v4871 = vmax.f32 %v4870, %v4758
    %v4872 = vmax.f32 %v4871, %v4759
    %v4873 = vrot.slane %v4872, 4
    %v4874 = vmax.f32 %v4872, %v4873
    %v4875 = vrot.slane %v4874, 2
    %v4876 = vmax.f32 %v4874, %v4875
    %v4877 = vrot.slane %v4876, 1
    %v4878 = vmax.f32 %v4876, %v4877
    %v4879 = vmax.f32 %v4760, %v4761
    %v4880 = vmax.f32 %v4879, %v4762
    %v4881 = vmax.f32 %v4880, %v4763
    %v4882 = vrot.slane %v4881, 4
    %v4883 = vmax.f32 %v4881, %v4882
    %v4884 = vrot.slane %v4883, 2
    %v4885 = vmax.f32 %v4883, %v4884
    %v4886 = vrot.slane %v4885, 1
    %v4887 = vmax.f32 %v4885, %v4886
    %v4888 = vmax.f32 %v4764, %v4765
    %v4889 = vmax.f32 %v4888, %v4766
    %v4890 = vmax.f32 %v4889, %v4767
    %v4891 = vrot.slane %v4890, 4
    %v4892 = vmax.f32 %v4890, %v4891
    %v4893 = vrot.slane %v4892, 2
    %v4894 = vmax.f32 %v4892, %v4893
    %v4895 = vrot.slane %v4894, 1
    %v4896 = vmax.f32 %v4894, %v4895
    %v4897 = vmax.f32 %v4768, %v4769
    %v4898 = vmax.f32 %v4897, %v4770
    %v4899 = vmax.f32 %v4898, %v4771
    %v4900 = vrot.slane %v4899, 4
    %v4901 = vmax.f32 %v4899, %v4900
    %v4902 = vrot.slane %v4901, 2
    %v4903 = vmax.f32 %v4901, %v4902
    %v4904 = vrot.slane %v4903, 1
    %v4905 = vmax.f32 %v4903, %v4904
    %v4906 = vmax.f32 %v4772, %v4773
    %v4907 = vmax.f32 %v4906, %v4774
    %v4908 = vmax.f32 %v4907, %v4775
    %v4909 = vrot.slane %v4908, 4
    %v4910 = vmax.f32 %v4908, %v4909
    %v4911 = vrot.slane %v4910, 2
    %v4912 = vmax.f32 %v4910, %v4911
    %v4913 = vrot.slane %v4912, 1
    %v4914 = vmax.f32 %v4912, %v4913
    %v4915 = vmax.f32 %v4776, %v4777
    %v4916 = vmax.f32 %v4915, %v4778
    %v4917 = vmax.f32 %v4916, %v4779
    %v4918 = vrot.slane %v4917, 4
    %v4919 = vmax.f32 %v4917, %v4918
    %v4920 = vrot.slane %v4919, 2
    %v4921 = vmax.f32 %v4919, %v4920
    %v4922 = vrot.slane %v4921, 1
    %v4923 = vmax.f32 %v4921, %v4922
    %vm4940 = vcmask 1041409
    %v4941 = vsel %vm4940, %v4797, %v4788
    %vm4942 = vcmask 1042434
    %v4943 = vsel %vm4942, %v4806, %v4941
    %vm4944 = vcmask 1043459
    %v4945 = vsel %vm4944, %v4815, %v4943
    %vm4946 = vcmask 1044484
    %v4947 = vsel %vm4946, %v4824, %v4945
    %vm4948 = vcmask 1045509
    %v4949 = vsel %vm4948, %v4833, %v4947
    %vm4950 = vcmask 1046534
    %v4951 = vsel %vm4950, %v4842, %v4949
    %vm4952 = vcmask 1047559
    %v4953 = vsel %vm4952, %v4851, %v4951
    %v4954 = vsel %vm4940, %v4869, %v4860
    %v4955 = vsel %vm4942, %v4878, %v4954
    %v4956 = vsel %vm4944, %v4887, %v4955
    %v4957 = vsel %vm4946, %v4896, %v4956
    %v4958 = vsel %vm4948, %v4905, %v4957
    %v4959 = vsel %vm4950, %v4914, %v4958
    %v4960 = vsel %vm4952, %v4923, %v4959
    %4963 = vst [vmem:[#allocation13] sm:$0xff] %v4953
    %4964 = vst [vmem:[#allocation13 + $0x8] sm:$0xff] %v4960
    // Predicated region
    $region42: #{tpu_custom_call.1} parent=1 // pred_check
      _
    $region43: #{tpu_custom_call.1} parent=1 // pred_check_branch
      %4966 = sbr.rel (0) target = $region45
    $region44: #{tpu_custom_call.1} parent=1 // pred_region
      %4968 = vsyncadd [#allocation7], 0
      %s4969 = sshll.u32 [#allocation13], 4
      %s4970 = int_to_ptr.vmem [resolvable:$true] %s4969
      %s4971 = sshll.u32 %s6, 4
      %s4972 = int_to_ptr.hbm [resolvable:$true] %s4971
      %4977 = dma.vmem_to_hbm [thread:$0]  %s4970, 256, %s4972, [#allocation7], 128, 128, 8
    $region45: #{tpu_custom_call.1} parent=1 // pred_fallthru
      _
    // Predicated region
    $region46: #{tpu_custom_call.1} parent=1 // pred_check
      _
    $region47: #{tpu_custom_call.1} parent=1 // pred_check_branch
      %4979 = sbr.rel (0) target = $region49
    $region48: #{tpu_custom_call.1} parent=1 // pred_region
      %4981 = dma.done [#allocation7], 256
    $region49: #{tpu_custom_call.1} parent=1 // pred_fallthru
      _
    %4982 = vsyncpa [#allocation6], 1
    %4983 = vsyncpa [#allocation9], 1
    %4984 = vsyncpa [#allocation12], 1
    %4985 = vsyncpa [#allocation7], 1

</llo_original>
